<compile_context>
chip_gen: v6e
topology: v6e:2x2x1
jax: 0.10.0
libtpu: 0.0.40
codegen_flags: <defaults>
</compile_context>

<pallas_src>
import math

import jax
import jax.numpy as jnp
from jax.experimental import pallas as pl
from jax.experimental.pallas import tpu as pltpu

# ----------------------------- sizes -----------------------------------
B = 128        # total batch (demo); module real F=20531, batch = config.batch_size
BT = 64        # batch tile per grid step (per-core tile on v7x)
NB = B // BT   # leading "parallel" grid axis (2 -> both v7x TensorCores)
F = 2048       # num_features for the demo (module default is 20531; pad at real size)
H = 128        # config.hidden_nodes
LATENT = 1024  # hard-coded 1024 bottleneck in the module
TF = 1024      # feature-axis tile: K-tile for W1, N-tile for W4
NF = F // TF
NOISE_STD = 0.01

assert B % BT == 0
assert F % TF == 0, "demo assumes F divisible by TF (pad F at the real size)"
assert TF % 128 == 0


# ----------------------------- kernel ----------------------------------
def dae_kernel(x_ref, w1_ref, b1_ref, w2_ref, b2_ref, w3_ref, b3_ref,
               w4_ref, b4_ref,
               recon_ref, losspart_ref,
               h1_acc, h2_buf, xstash, loss_part):
    # grid = (nb, phase, f):
    #   phase 0: stash x_noisy chunk f in VMEM and accumulate
    #            h1 += x_noisy[:, f] @ W1[f, :]          (K-reduction over F)
    #   phase 1: f == 0 finishes encoder + decoder hidden layers once, then
    #            every step emits a recon column slab + accumulates the MSE.
    p = pl.program_id(1)
    f = pl.program_id(2)
    nf = pl.num_programs(2)

    @pl.when(p == 0)
    def _encode_first_layer():
        @pl.when(f == 0)
        def _():
            h1_acc[...] = jnp.zeros_like(h1_acc)

        x_chunk = x_ref[...]                       # already-noisy input chunk
        col = pl.multiple_of(f * TF, TF)
        xstash[:, pl.ds(col, TF)] = x_chunk        # reuse in phase 1 (no re-DMA)
        h1_acc[...] += jnp.dot(x_chunk.astype(jnp.bfloat16), w1_ref[...],
                               preferred_element_type=jnp.float32)

    @pl.when(p == 1)
    def _decode_and_loss():
        @pl.when(f == 0)
        def _():
            # encoder: + b1, ReLU, (dropout=id), Linear(H->1024), ReLU, (dropout=id)
            h1 = jnp.maximum(h1_acc[...] + b1_ref[...], 0.0)
            z = jnp.dot(h1.astype(jnp.bfloat16), w2_ref[...],
                        preferred_element_type=jnp.float32) + b2_ref[...]
            z = jnp.maximum(z, 0.0)
            # decoder hidden: Linear(1024->H), ReLU, (dropout=id)
            h2 = jnp.dot(z.astype(jnp.bfloat16), w3_ref[...],
                         preferred_element_type=jnp.float32) + b3_ref[...]
            h2_buf[...] = jnp.maximum(h2, 0.0).astype(jnp.bfloat16)
            loss_part[...] = jnp.zeros_like(loss_part)

        # decoder output slab: Linear(H->F) column chunk f
        recon = jnp.dot(h2_buf[...], w4_ref[...],
                        preferred_element_type=jnp.float32) + b4_ref[...]
        recon_ref[...] = recon.astype(recon_ref.dtype)

        # fused MSE vs. the noisy input (PyTorch reassigns x before the loss).
        # Pure VPU adds into a (BT, 128) partial-sum scratch; the cross-lane
        # reduction is deferred to the wrapper.
        col = pl.multiple_of(f * TF, TF)
        diff = recon - xstash[:, pl.ds(col, TF)]
        dsq = diff * diff
        acc = loss_part[...]
        for c in range(TF // 128):                 # static, lane-aligned slices
            acc = acc + dsq[:, c * 128:(c + 1) * 128]
        loss_part[...] = acc

        @pl.when(f == nf - 1)
        def _():
            losspart_ref[0] = loss_part[...]


# ----------------------------- wrapper ----------------------------------
@jax.jit
def dae_forward(noise_key, x, params):
    w1, b1, w2, b2, w3, b3, w4, b4 = params

    # Denoising noise (in-kernel TPU PRNG has no interpret/CPU lowering, and
    # with the VMEM stash x is streamed only once anyway).
    x_noisy = x + jnp.float32(NOISE_STD) * jax.random.normal(
        noise_key, x.shape, jnp.float32)

    pin = NF - 1  # phase-1 pin for x / W1 block indices (no re-fetch)

    recon, loss_parts = pl.pallas_call(
        dae_kernel,
        grid=(NB, 2, NF),
        in_specs=[
            pl.BlockSpec((BT, TF), lambda nb, p, f: (nb, f * (1 - p) + pin * p)),  # x chunk
            pl.BlockSpec((TF, H), lambda nb, p, f: (f * (1 - p) + pin * p, 0)),    # W1 K-tiles
            pl.BlockSpec((1, H), lambda nb, p, f: (0, 0)),                          # b1
            pl.BlockSpec((H, LATENT), lambda nb, p, f: (0, 0)),                     # W2 (resident)
            pl.BlockSpec((1, LATENT), lambda nb, p, f: (0, 0)),                     # b2
            pl.BlockSpec((LATENT, H), lambda nb, p, f: (0, 0)),                     # W3 (resident)
            pl.BlockSpec((1, H), lambda nb, p, f: (0, 0)),                          # b3
            pl.BlockSpec((H, TF), lambda nb, p, f: (0, f * p)),                     # W4 N-tiles
            pl.BlockSpec((1, TF), lambda nb, p, f: (0, f * p)),                     # b4
        ],
        out_specs=[
            pl.BlockSpec((BT, TF), lambda nb, p, f: (nb, f * p)),                   # recon slab
            pl.BlockSpec((1, BT, 128), lambda nb, p, f: (nb, 0, 0)),                # partial MSE
        ],
        out_shape=[
            jax.ShapeDtypeStruct((B, F), jnp.bfloat16),
            jax.ShapeDtypeStruct((NB, BT, 128), jnp.float32),
        ],
        scratch_shapes=[
            pltpu.VMEM((BT, H), jnp.float32),     # h1 accumulator (K-reduction)
            pltpu.VMEM((BT, H), jnp.bfloat16),    # ReLU(decoder hidden), matmul dtype
            pltpu.VMEM((BT, F), jnp.float32),     # x_noisy stash (f32 -> exact MSE target)
            pltpu.VMEM((BT, 128), jnp.float32),   # per-tile MSE partial sums
        ],
        compiler_params=pltpu.CompilerParams(
            # batch tiles are independent -> parallel (uses both v7x TCs);
            # phase + F axes carry scratch dependencies -> arbitrary.
            dimension_semantics=("parallel", "arbitrary", "arbitrary"),
            vmem_limit_bytes=48 * 1024 * 1024,
        ),
    )(x_noisy, w1, b1, w2, b2, w3, b3, w4, b4)

    loss = jnp.sum(loss_parts) * jnp.float32(1.0 / (B * F))
    return loss, recon


# ----------------------------- params -----------------------------------
def xavier_normal_bf16(key, fan_in, fan_out):
    # nn.init.xavier_normal_ for a Linear weight [out, in]; stored transposed
    # [in, out] (kernel computes x @ W), cast to bf16 for the MXU / HBM stream.
    std = math.sqrt(2.0 / (fan_in + fan_out))
    w = jax.random.normal(key, (fan_in, fan_out), jnp.float32) * std
    return w.astype(jnp.bfloat16)


def linear_bias(key, fan_in, size):
    # PyTorch nn.Linear default bias init: U(-1/sqrt(fan_in), 1/sqrt(fan_in)).
    bound = 1.0 / math.sqrt(fan_in)
    return jax.random.uniform(key, (1, size), jnp.float32, -bound, bound)


def make_params(key):
    ks = jax.random.split(key, 8)
    w1 = xavier_normal_bf16(ks[0], F, H)
    b1 = linear_bias(ks[1], F, H)
    w2 = xavier_normal_bf16(ks[2], H, LATENT)
    b2 = linear_bias(ks[3], H, LATENT)
    w3 = xavier_normal_bf16(ks[4], LATENT, H)
    b3 = linear_bias(ks[5], LATENT, H)
    w4 = xavier_normal_bf16(ks[6], H, F)
    b4 = linear_bias(ks[7], H, F)
    return (w1, b1, w2, b2, w3, b3, w4, b4)


# ----------------------------- main --------------------------------------
if __name__ == "__main__":
    key = jax.random.PRNGKey(0)
    k_x, k_noise, k_params = jax.random.split(key, 3)

    x = jax.random.normal(k_x, (B, F), jnp.float32)
    params = make_params(k_params)

    loss, recon = dae_forward(k_noise, x, params)
    jax.block_until_ready((loss, recon))

    assert recon.shape == (B, F)
    assert bool(jnp.isfinite(loss))
    print("KERNEL_OK")
</pallas_src>

<mosaic_0001>
module attributes {stable_mosaic.version = 11 : i64} {
  func.func @dae_kernel(%arg0: i32, %arg1: i32, %arg2: i32, %arg3: memref<64x1024xf32, #tpu.memory_space<vmem>>, %arg4: memref<1024x128xbf16, #tpu.memory_space<vmem>>, %arg5: memref<1x128xf32, #tpu.memory_space<vmem>>, %arg6: memref<128x1024xbf16, #tpu.memory_space<vmem>>, %arg7: memref<1x1024xf32, #tpu.memory_space<vmem>>, %arg8: memref<1024x128xbf16, #tpu.memory_space<vmem>>, %arg9: memref<1x128xf32, #tpu.memory_space<vmem>>, %arg10: memref<128x1024xbf16, #tpu.memory_space<vmem>>, %arg11: memref<1x1024xf32, #tpu.memory_space<vmem>>, %arg12: memref<64x1024xbf16, #tpu.memory_space<vmem>>, %arg13: memref<1x64x128xf32, #tpu.memory_space<vmem>>, %arg14: memref<64x128xf32, #tpu.memory_space<vmem>>, %arg15: memref<64x128xbf16, #tpu.memory_space<vmem>>, %arg16: memref<64x2048xf32, #tpu.memory_space<vmem>>, %arg17: memref<64x128xf32, #tpu.memory_space<vmem>>) attributes {dimension_semantics = [#tpu.dimension_semantics<parallel>, #tpu.dimension_semantics<arbitrary>, #tpu.dimension_semantics<arbitrary>], iteration_bounds = array<i64: 2, 2, 2>, scalar_prefetch = 0 : i64, scratch_operands = 4 : i64, tpu.core_type = #tpu.core_type<tc>, window_params = [{transform_indices = @transform_0, window_bounds = array<i64: 64, 1024>}, {transform_indices = @transform_1, window_bounds = array<i64: 1024, 128>}, {pipeline_mode = #tpu.pipeline_mode<synchronous>, transform_indices = @transform_2, window_bounds = array<i64: 1, 128>}, {pipeline_mode = #tpu.pipeline_mode<synchronous>, transform_indices = @transform_3, window_bounds = array<i64: 128, 1024>}, {pipeline_mode = #tpu.pipeline_mode<synchronous>, transform_indices = @transform_4, window_bounds = array<i64: 1, 1024>}, {pipeline_mode = #tpu.pipeline_mode<synchronous>, transform_indices = @transform_5, window_bounds = array<i64: 1024, 128>}, {pipeline_mode = #tpu.pipeline_mode<synchronous>, transform_indices = @transform_6, window_bounds = array<i64: 1, 128>}, {transform_indices = @transform_7, window_bounds = array<i64: 128, 1024>}, {transform_indices = @transform_8, window_bounds = array<i64: 1, 1024>}, {transform_indices = @transform_9, window_bounds = array<i64: 64, 1024>}, {transform_indices = @transform_10, window_bounds = array<i64: 1, 64, 128>}]} {
    %c0_i32 = arith.constant 0 : i32
    %0 = arith.cmpi eq, %arg1, %c0_i32 : i32
    %1 = arith.extui %0 : i1 to i32
    %c0_i32_0 = arith.constant 0 : i32
    %2 = arith.cmpi ne, %1, %c0_i32_0 : i32
    scf.if %2 {
      %c0_i32_2 = arith.constant 0 : i32
      %6 = arith.cmpi eq, %arg2, %c0_i32_2 : i32
      %7 = arith.extui %6 : i1 to i32
      %c0_i32_3 = arith.constant 0 : i32
      %8 = arith.cmpi ne, %7, %c0_i32_3 : i32
      scf.if %8 {
        %cst_12 = arith.constant 0.000000e+00 : f32
        %20 = vector.broadcast %cst_12 : f32 to vector<64x128xf32>
        %c0_13 = arith.constant 0 : index
        %c0_14 = arith.constant 0 : index
        %21 = vector.load %arg14[%c0_13, %c0_14] : memref<64x128xf32, #tpu.memory_space<vmem>>, vector<64x128xf32>
        tpu.vector_store %arg14[%c0_13, %c0_14], %20 {strides = array<i32>} : memref<64x128xf32, #tpu.memory_space<vmem>>, vector<64x128xf32>,
      } else {
      }
      %c0 = arith.constant 0 : index
      %c0_4 = arith.constant 0 : index
      %9 = vector.load %arg3[%c0, %c0_4] : memref<64x1024xf32, #tpu.memory_space<vmem>>, vector<64x1024xf32>
      %c1024_i32 = arith.constant 1024 : i32
      %10 = arith.muli %arg2, %c1024_i32 : i32
      %11 = tpu.assume_multiple %10, 1024 : i32
      %c0_5 = arith.constant 0 : index
      %12 = arith.index_cast %11 : i32 to index
      %13 = vector.load %arg16[%c0_5, %12] : memref<64x2048xf32, #tpu.memory_space<vmem>>, vector<64x1024xf32>
      tpu.vector_store %arg16[%c0_5, %12], %9 {strides = array<i32>} : memref<64x2048xf32, #tpu.memory_space<vmem>>, vector<64x1024xf32>,
      %c0_6 = arith.constant 0 : index
      %c0_7 = arith.constant 0 : index
      %14 = vector.load %arg14[%c0_6, %c0_7] : memref<64x128xf32, #tpu.memory_space<vmem>>, vector<64x128xf32>
      %15 = arith.truncf %9 : vector<64x1024xf32> to vector<64x1024xbf16>
      %c0_8 = arith.constant 0 : index
      %c0_9 = arith.constant 0 : index
      %16 = vector.load %arg4[%c0_8, %c0_9] : memref<1024x128xbf16, #tpu.memory_space<vmem>>, vector<1024x128xbf16>
      %cst = arith.constant dense<0.000000e+00> : vector<64x128xf32>
      %17 = tpu.matmul %15, %16, %cst {dimension_numbers = #tpu.dot_dimension_numbers<[1], [0], [0], [1], [0, 0, 1, 1], [], []>} : vector<64x1024xbf16>, vector<1024x128xbf16>, vector<64x128xf32> -> vector<64x128xf32>
      %18 = arith.addf %14, %17 : vector<64x128xf32>
      %c0_10 = arith.constant 0 : index
      %c0_11 = arith.constant 0 : index
      %19 = vector.load %arg14[%c0_10, %c0_11] : memref<64x128xf32, #tpu.memory_space<vmem>>, vector<64x128xf32>
      tpu.vector_store %arg14[%c0_10, %c0_11], %18 {strides = array<i32>} : memref<64x128xf32, #tpu.memory_space<vmem>>, vector<64x128xf32>,
    } else {
    }
    %c1_i32 = arith.constant 1 : i32
    %3 = arith.cmpi eq, %arg1, %c1_i32 : i32
    %4 = arith.extui %3 : i1 to i32
    %c0_i32_1 = arith.constant 0 : i32
    %5 = arith.cmpi ne, %4, %c0_i32_1 : i32
    scf.if %5 {
      %c0_i32_2 = arith.constant 0 : i32
      %6 = arith.cmpi eq, %arg2, %c0_i32_2 : i32
      %7 = arith.extui %6 : i1 to i32
      %c0_i32_3 = arith.constant 0 : i32
      %8 = arith.cmpi ne, %7, %c0_i32_3 : i32
      scf.if %8 {
        %c0_18 = arith.constant 0 : index
        %c0_19 = arith.constant 0 : index
        %44 = vector.load %arg14[%c0_18, %c0_19] : memref<64x128xf32, #tpu.memory_space<vmem>>, vector<64x128xf32>
        %c0_20 = arith.constant 0 : index
        %c0_21 = arith.constant 0 : index
        %45 = vector.load %arg5[%c0_20, %c0_21] : memref<1x128xf32, #tpu.memory_space<vmem>>, vector<1x128xf32>
        %46 = vector.broadcast %45 : vector<1x128xf32> to vector<64x128xf32>
        %47 = arith.addf %44, %46 : vector<64x128xf32>
        %cst_22 = arith.constant 0.000000e+00 : f32
        %48 = vector.broadcast %cst_22 : f32 to vector<64x128xf32>
        %49 = arith.maximumf %47, %48 : vector<64x128xf32>
        %50 = arith.truncf %49 : vector<64x128xf32> to vector<64x128xbf16>
        %c0_23 = arith.constant 0 : index
        %c0_24 = arith.constant 0 : index
        %51 = vector.load %arg6[%c0_23, %c0_24] : memref<128x1024xbf16, #tpu.memory_space<vmem>>, vector<128x1024xbf16>
        %cst_25 = arith.constant dense<0.000000e+00> : vector<64x1024xf32>
        %52 = tpu.matmul %50, %51, %cst_25 {dimension_numbers = #tpu.dot_dimension_numbers<[1], [0], [0], [1], [0, 0, 1, 1], [], []>} : vector<64x128xbf16>, vector<128x1024xbf16>, vector<64x1024xf32> -> vector<64x1024xf32>
        %c0_26 = arith.constant 0 : index
        %c0_27 = arith.constant 0 : index
        %53 = vector.load %arg7[%c0_26, %c0_27] : memref<1x1024xf32, #tpu.memory_space<vmem>>, vector<1x1024xf32>
        %54 = vector.broadcast %53 : vector<1x1024xf32> to vector<64x1024xf32>
        %55 = arith.addf %52, %54 : vector<64x1024xf32>
        %cst_28 = arith.constant 0.000000e+00 : f32
        %56 = vector.broadcast %cst_28 : f32 to vector<64x1024xf32>
        %57 = arith.maximumf %55, %56 : vector<64x1024xf32>
        %58 = arith.truncf %57 : vector<64x1024xf32> to vector<64x1024xbf16>
        %c0_29 = arith.constant 0 : index
        %c0_30 = arith.constant 0 : index
        %59 = vector.load %arg8[%c0_29, %c0_30] : memref<1024x128xbf16, #tpu.memory_space<vmem>>, vector<1024x128xbf16>
        %cst_31 = arith.constant dense<0.000000e+00> : vector<64x128xf32>
        %60 = tpu.matmul %58, %59, %cst_31 {dimension_numbers = #tpu.dot_dimension_numbers<[1], [0], [0], [1], [0, 0, 1, 1], [], []>} : vector<64x1024xbf16>, vector<1024x128xbf16>, vector<64x128xf32> -> vector<64x128xf32>
        %c0_32 = arith.constant 0 : index
        %c0_33 = arith.constant 0 : index
        %61 = vector.load %arg9[%c0_32, %c0_33] : memref<1x128xf32, #tpu.memory_space<vmem>>, vector<1x128xf32>
        %62 = vector.broadcast %61 : vector<1x128xf32> to vector<64x128xf32>
        %63 = arith.addf %60, %62 : vector<64x128xf32>
        %cst_34 = arith.constant 0.000000e+00 : f32
        %64 = vector.broadcast %cst_34 : f32 to vector<64x128xf32>
        %65 = arith.maximumf %63, %64 : vector<64x128xf32>
        %66 = arith.truncf %65 : vector<64x128xf32> to vector<64x128xbf16>
        %c0_35 = arith.constant 0 : index
        %c0_36 = arith.constant 0 : index
        %67 = vector.load %arg15[%c0_35, %c0_36] : memref<64x128xbf16, #tpu.memory_space<vmem>>, vector<64x128xbf16>
        tpu.vector_store %arg15[%c0_35, %c0_36], %66 {strides = array<i32>} : memref<64x128xbf16, #tpu.memory_space<vmem>>, vector<64x128xbf16>,
        %cst_37 = arith.constant 0.000000e+00 : f32
        %68 = vector.broadcast %cst_37 : f32 to vector<64x128xf32>
        %c0_38 = arith.constant 0 : index
        %c0_39 = arith.constant 0 : index
        %69 = vector.load %arg17[%c0_38, %c0_39] : memref<64x128xf32, #tpu.memory_space<vmem>>, vector<64x128xf32>
        tpu.vector_store %arg17[%c0_38, %c0_39], %68 {strides = array<i32>} : memref<64x128xf32, #tpu.memory_space<vmem>>, vector<64x128xf32>,
      } else {
      }
      %c0 = arith.constant 0 : index
      %c0_4 = arith.constant 0 : index
      %9 = vector.load %arg15[%c0, %c0_4] : memref<64x128xbf16, #tpu.memory_space<vmem>>, vector<64x128xbf16>
      %c0_5 = arith.constant 0 : index
      %c0_6 = arith.constant 0 : index
      %10 = vector.load %arg10[%c0_5, %c0_6] : memref<128x1024xbf16, #tpu.memory_space<vmem>>, vector<128x1024xbf16>
      %cst = arith.constant dense<0.000000e+00> : vector<64x1024xf32>
      %11 = tpu.matmul %9, %10, %cst {dimension_numbers = #tpu.dot_dimension_numbers<[1], [0], [0], [1], [0, 0, 1, 1], [], []>} : vector<64x128xbf16>, vector<128x1024xbf16>, vector<64x1024xf32> -> vector<64x1024xf32>
      %c0_7 = arith.constant 0 : index
      %c0_8 = arith.constant 0 : index
      %12 = vector.load %arg11[%c0_7, %c0_8] : memref<1x1024xf32, #tpu.memory_space<vmem>>, vector<1x1024xf32>
      %13 = vector.broadcast %12 : vector<1x1024xf32> to vector<64x1024xf32>
      %14 = arith.addf %11, %13 : vector<64x1024xf32>
      %15 = arith.truncf %14 : vector<64x1024xf32> to vector<64x1024xbf16>
      %c0_9 = arith.constant 0 : index
      %c0_10 = arith.constant 0 : index
      %16 = vector.load %arg12[%c0_9, %c0_10] : memref<64x1024xbf16, #tpu.memory_space<vmem>>, vector<64x1024xbf16>
      tpu.vector_store %arg12[%c0_9, %c0_10], %15 {strides = array<i32>} : memref<64x1024xbf16, #tpu.memory_space<vmem>>, vector<64x1024xbf16>,
      %c1024_i32 = arith.constant 1024 : i32
      %17 = arith.muli %arg2, %c1024_i32 : i32
      %18 = tpu.assume_multiple %17, 1024 : i32
      %c0_11 = arith.constant 0 : index
      %19 = arith.index_cast %18 : i32 to index
      %20 = vector.load %arg16[%c0_11, %19] : memref<64x2048xf32, #tpu.memory_space<vmem>>, vector<64x1024xf32>
      %21 = arith.subf %14, %20 : vector<64x1024xf32>
      %22 = arith.mulf %21, %21 : vector<64x1024xf32>
      %c0_12 = arith.constant 0 : index
      %c0_13 = arith.constant 0 : index
      %23 = vector.load %arg17[%c0_12, %c0_13] : memref<64x128xf32, #tpu.memory_space<vmem>>, vector<64x128xf32>
      %24 = vector.extract_strided_slice %22 {offsets = [0, 0], sizes = [64, 128], strides = [1, 1]} : vector<64x1024xf32> to vector<64x128xf32>
      %25 = arith.addf %23, %24 : vector<64x128xf32>
      %26 = vector.extract_strided_slice %22 {offsets = [0, 128], sizes = [64, 128], strides = [1, 1]} : vector<64x1024xf32> to vector<64x128xf32>
      %27 = arith.addf %25, %26 : vector<64x128xf32>
      %28 = vector.extract_strided_slice %22 {offsets = [0, 256], sizes = [64, 128], strides = [1, 1]} : vector<64x1024xf32> to vector<64x128xf32>
      %29 = arith.addf %27, %28 : vector<64x128xf32>
      %30 = vector.extract_strided_slice %22 {offsets = [0, 384], sizes = [64, 128], strides = [1, 1]} : vector<64x1024xf32> to vector<64x128xf32>
      %31 = arith.addf %29, %30 : vector<64x128xf32>
      %32 = vector.extract_strided_slice %22 {offsets = [0, 512], sizes = [64, 128], strides = [1, 1]} : vector<64x1024xf32> to vector<64x128xf32>
      %33 = arith.addf %31, %32 : vector<64x128xf32>
      %34 = vector.extract_strided_slice %22 {offsets = [0, 640], sizes = [64, 128], strides = [1, 1]} : vector<64x1024xf32> to vector<64x128xf32>
      %35 = arith.addf %33, %34 : vector<64x128xf32>
      %36 = vector.extract_strided_slice %22 {offsets = [0, 768], sizes = [64, 128], strides = [1, 1]} : vector<64x1024xf32> to vector<64x128xf32>
      %37 = arith.addf %35, %36 : vector<64x128xf32>
      %38 = vector.extract_strided_slice %22 {offsets = [0, 896], sizes = [64, 128], strides = [1, 1]} : vector<64x1024xf32> to vector<64x128xf32>
      %39 = arith.addf %37, %38 : vector<64x128xf32>
      %c0_14 = arith.constant 0 : index
      %c0_15 = arith.constant 0 : index
      %40 = vector.load %arg17[%c0_14, %c0_15] : memref<64x128xf32, #tpu.memory_space<vmem>>, vector<64x128xf32>
      tpu.vector_store %arg17[%c0_14, %c0_15], %39 {strides = array<i32>} : memref<64x128xf32, #tpu.memory_space<vmem>>, vector<64x128xf32>,
      %c1_i32_16 = arith.constant 1 : i32
      %41 = arith.cmpi eq, %arg2, %c1_i32_16 : i32
      %42 = arith.extui %41 : i1 to i32
      %c0_i32_17 = arith.constant 0 : i32
      %43 = arith.cmpi ne, %42, %c0_i32_17 : i32
      scf.if %43 {
        %c0_18 = arith.constant 0 : index
        %c0_19 = arith.constant 0 : index
        %44 = vector.load %arg17[%c0_18, %c0_19] : memref<64x128xf32, #tpu.memory_space<vmem>>, vector<64x128xf32>
        %c0_20 = arith.constant 0 : index
        %c0_21 = arith.constant 0 : index
        %c0_22 = arith.constant 0 : index
        %45 = vector.load %arg13[%c0_20, %c0_21, %c0_22] : memref<1x64x128xf32, #tpu.memory_space<vmem>>, vector<1x64x128xf32>
        %46 = vector.shape_cast %45 : vector<1x64x128xf32> to vector<64x128xf32>
        %47 = vector.shape_cast %44 : vector<64x128xf32> to vector<1x64x128xf32>
        tpu.vector_store %arg13[%c0_20, %c0_21, %c0_22], %47 {strides = array<i32>} : memref<1x64x128xf32, #tpu.memory_space<vmem>>, vector<1x64x128xf32>,
      } else {
      }
    } else {
    }
    return
  }
  func.func @transform_0(%arg0: i32, %arg1: i32, %arg2: i32) -> (i32, i32) {
    %c1_i32 = arith.constant 1 : i32
    %0 = arith.subi %c1_i32, %arg1 : i32
    %1 = arith.muli %arg2, %0 : i32
    %c1_i32_0 = arith.constant 1 : i32
    %2 = arith.muli %c1_i32_0, %arg1 : i32
    %3 = arith.addi %1, %2 : i32
    %c0_i32 = arith.constant 0 : i32
    return %arg0, %3 : i32, i32
  }
  func.func @transform_1(%arg0: i32, %arg1: i32, %arg2: i32) -> (i32, i32) {
    %c1_i32 = arith.constant 1 : i32
    %0 = arith.subi %c1_i32, %arg1 : i32
    %1 = arith.muli %arg2, %0 : i32
    %c1_i32_0 = arith.constant 1 : i32
    %2 = arith.muli %c1_i32_0, %arg1 : i32
    %3 = arith.addi %1, %2 : i32
    %c0_i32 = arith.constant 0 : i32
    %c0_i32_1 = arith.constant 0 : i32
    return %3, %c0_i32 : i32, i32
  }
  func.func @transform_2(%arg0: i32, %arg1: i32, %arg2: i32) -> (i32, i32) {
    %c0_i32 = arith.constant 0 : i32
    %c0_i32_0 = arith.constant 0 : i32
    %c0_i32_1 = arith.constant 0 : i32
    return %c0_i32, %c0_i32_0 : i32, i32
  }
  func.func @transform_3(%arg0: i32, %arg1: i32, %arg2: i32) -> (i32, i32) {
    %c0_i32 = arith.constant 0 : i32
    %c0_i32_0 = arith.constant 0 : i32
    %c0_i32_1 = arith.constant 0 : i32
    return %c0_i32, %c0_i32_0 : i32, i32
  }
  func.func @transform_4(%arg0: i32, %arg1: i32, %arg2: i32) -> (i32, i32) {
    %c0_i32 = arith.constant 0 : i32
    %c0_i32_0 = arith.constant 0 : i32
    %c0_i32_1 = arith.constant 0 : i32
    return %c0_i32, %c0_i32_0 : i32, i32
  }
  func.func @transform_5(%arg0: i32, %arg1: i32, %arg2: i32) -> (i32, i32) {
    %c0_i32 = arith.constant 0 : i32
    %c0_i32_0 = arith.constant 0 : i32
    %c0_i32_1 = arith.constant 0 : i32
    return %c0_i32, %c0_i32_0 : i32, i32
  }
  func.func @transform_6(%arg0: i32, %arg1: i32, %arg2: i32) -> (i32, i32) {
    %c0_i32 = arith.constant 0 : i32
    %c0_i32_0 = arith.constant 0 : i32
    %c0_i32_1 = arith.constant 0 : i32
    return %c0_i32, %c0_i32_0 : i32, i32
  }
  func.func @transform_7(%arg0: i32, %arg1: i32, %arg2: i32) -> (i32, i32) {
    %0 = arith.muli %arg2, %arg1 : i32
    %c0_i32 = arith.constant 0 : i32
    %c0_i32_0 = arith.constant 0 : i32
    return %c0_i32, %0 : i32, i32
  }
  func.func @transform_8(%arg0: i32, %arg1: i32, %arg2: i32) -> (i32, i32) {
    %0 = arith.muli %arg2, %arg1 : i32
    %c0_i32 = arith.constant 0 : i32
    %c0_i32_0 = arith.constant 0 : i32
    return %c0_i32, %0 : i32, i32
  }
  func.func @transform_9(%arg0: i32, %arg1: i32, %arg2: i32) -> (i32, i32) {
    %0 = arith.muli %arg2, %arg1 : i32
    %c0_i32 = arith.constant 0 : i32
    return %arg0, %0 : i32, i32
  }
  func.func @transform_10(%arg0: i32, %arg1: i32, %arg2: i32) -> (i32, i32, i32) {
    %c0_i32 = arith.constant 0 : i32
    %c0_i32_0 = arith.constant 0 : i32
    %c0_i32_1 = arith.constant 0 : i32
    return %arg0, %c0_i32, %c0_i32_0 : i32, i32, i32
  }
}

</mosaic_0001>

<llo_original>
// kernel: dae_forward.1
$region0: #{dae_forward.1}
  #allocation0 [shape = 'u32[]', space=smem, size = 0x4, offset = 0x4, fixed_abs, tag = 'smem constant byte address 0x4 - core index']
  #allocation1 [shape = 'u32[144,128]{1,0:T(1,128)}', space=vmem, size = 0x12000, scoped, tag = 'internal scratch']
  #allocation2 [shape = 'f32[64,128]{1,0:T(8,128)}', space=vmem, size = 0x8000, scoped, tag = 'scratch operand']
  #allocation3 [shape = 'bf16[64,128]{1,0:T(8,128)(2,1)}', space=vmem, size = 0x4000, scoped, tag = 'scratch operand']
  #allocation4 [shape = 'f32[64,2048]{1,0:T(8,128)}', space=vmem, size = 0x80000, scoped, tag = 'scratch operand']
  #allocation5 [shape = 'f32[64,128]{1,0:T(8,128)}', space=vmem, size = 0x8000, scoped, tag = 'scratch operand']
  %s0 = inlined_call_operand.vmem [shape: f32[128,2048], index: 0, kind: input, shape index: {}]
  %s1 = inlined_call_operand.vmem [shape: bf16[2048,128], index: 1, kind: input, shape index: {}]
  %s2 = inlined_call_operand.vmem [shape: f32[1,128], index: 2, kind: input, shape index: {}]
  %s3 = inlined_call_operand.vmem [shape: bf16[128,1024], index: 3, kind: input, shape index: {}]
  %s4 = inlined_call_operand.vmem [shape: f32[1,1024], index: 4, kind: input, shape index: {}]
  %s5 = inlined_call_operand.vmem [shape: bf16[1024,128], index: 5, kind: input, shape index: {}]
  %s6 = inlined_call_operand.vmem [shape: f32[1,128], index: 6, kind: input, shape index: {}]
  %s7 = inlined_call_operand.vmem [shape: bf16[128,2048], index: 7, kind: input, shape index: {}]
  %s8 = inlined_call_operand.vmem [shape: f32[1,2048], index: 8, kind: input, shape index: {}]
  %s9 = inlined_call_operand.hbm [shape: bf16[128,2048], index: 9, kind: output, shape index: {0}]
  %s10 = inlined_call_operand.vmem [shape: f32[2,64,128], index: 10, kind: output, shape index: {1}]
  %11 = xla_tuple %s9, %s10
  %s12 = sld [smem:[#allocation0]]
  $region143: #{dae_forward.1} parent=0
    _
  %s14 = ssub.s32 1, %s12
  %s15 = scalar_select 0, %s14, %s12
  $region1: #{dae_forward.1} parent=0
    #allocation6 [shape = 'u8[524288]{0}', space=vmem, size = 0x80000, scoped, tag = 'input window, operand 0']
    #allocation7 [shape = 'u8[524288]{0}', space=vmem, size = 0x80000, scoped, tag = 'input window, operand 7']
    #allocation8 [shape = 'u8[262144]{0}', space=vmem, size = 0x40000, scoped, tag = 'output window, operand 0']
    #allocation9 [shape = 's32[2]{0}', space=sflag, size = 0x8, scoped, tag = 'scoped memory for dae_forward.1']
    %16 = vsyncpa [#allocation9], 0
    %s17 = scalar_lea.sflag [#allocation9], 1
    %18 = vsyncpa %s17, 0
    loop: start=0, step=1, limit=10
    $region2: #{dae_forward.1} parent=1 // loop_pre_header
      _
    $region3: #{dae_forward.1} parent=1 // loop_header
      %s20 = sphi 0, %s24
      %p21 = scmp.ge.s32.totalorder %s20, 10
      %s27 = sphi 0, %s46
      %s28 = sphi 0, %s42
      %s29 = sphi 0, %s38
      %s30 = sphi 0, %s27
      %s31 = sphi 0, %s28
      %s32 = sphi 0, %s29
      %s33 = sphi 0, %s30
      %s34 = sphi 0, %s31
      %s35 = sphi 0, %s32
      %s57 = sphi 0, %s59
      %s60 = sphi 0, %s57
      %s61 = sphi 0, %s60
      %s77 = sphi 0, %s61
      %s89 = sphi 0, %s91
      %s92 = sphi 0, %s89
      %s93 = sphi 0, %s92
      %s109 = sphi 0, %s93
      %s113 = sphi 0, %s113
      %s115 = sphi 0, %s113
      %s116 = sphi 0, %s115
      %s130 = sphi 0, %s116
      %s134 = sphi 0, %s134
      %s136 = sphi 0, %s134
      %s137 = sphi 0, %s136
      %s151 = sphi 0, %s137
      %s155 = sphi 0, %s155
      %s157 = sphi 0, %s155
      %s158 = sphi 0, %s157
      %s172 = sphi 0, %s158
      %s176 = sphi 0, %s176
      %s178 = sphi 0, %s176
      %s179 = sphi 0, %s178
      %s193 = sphi 0, %s179
      %s197 = sphi 0, %s197
      %s199 = sphi 0, %s197
      %s200 = sphi 0, %s199
      %s214 = sphi 0, %s200
      %s222 = sphi 0, %s224
      %s225 = sphi 0, %s222
      %s226 = sphi 0, %s225
      %s242 = sphi 0, %s226
      %s250 = sphi 0, %s252
      %s253 = sphi 0, %s250
      %s254 = sphi 0, %s253
      %s270 = sphi 0, %s254
      %s280 = sphi 0, %s282
      %s283 = sphi 0, %s280
      %s284 = sphi 0, %s283
      %s300 = sphi 0, %s284
      %s306 = sphi 0, %s308
      %s309 = sphi 0, %s306
      %s310 = sphi 0, %s309
      %s326 = sphi 0, %s310
    $region4: #{dae_forward.1} parent=1 // loop_header_branch
      %23 = sbr.rel (%p21) target = $region8
    $region5: #{dae_forward.1} parent=1 // loop_body
      %s25 = ssub.s32 %s20, 1
      %s26 = ssub.s32 %s20, 2
      %s36 = sadd.s32 1, %s29
      %p37 = scmp.ge.s32.totalorder %s36, 2
      %s38 = scalar_select %p37, 0, %s36
      %s39 = sadd.s32 1, %s28
      %s40 = scalar_select %p37, %s39, %s28
      %p41 = scmp.ge.s32.totalorder %s40, 2
      %s42 = scalar_select %p41, 0, %s40
      %s43 = sadd.s32 1, %s27
      %s44 = scalar_select %p41, %s43, %s27
      %p45 = scmp.ge.s32.totalorder %s44, 2
      %s46 = scalar_select %p45, 0, %s44
      %s47 = ssub.s32 1, %s28
      %s48 = smul.u32 %s29, %s47
      %s49 = sadd.s32 %s48, %s28
      %s50 = ssub.s32 1, %s42
      %s51 = smul.u32 %s38, %s50
      %s52 = sadd.s32 %s51, %s42
      %s53 = ssub.s32 %s27, %s46
      %s54 = ssub.s32 %s49, %s52
      %s55 = sor.u32 %s53, %s54
      %p56 = scmp.eq.s32.totalorder %s55, 0
      %s58 = sadd.s32 %s57, 1
      %s59 = scalar_select %p56, %s57, %s58
      %p62 = pneg %p56
      %p63 = scmp.eq.s32.totalorder %s20, 7
      %p64 = por %p62, %p63
      %p65 = scmp.ne.s32.totalorder %s57, %s60
      %p66 = scmp.eq.s32.totalorder %s20, 0
      %p67 = por %p65, %p66
      %p68 = scmp.ne.s32.totalorder %s57, %s60
      %p69 = scmp.eq.s32.totalorder %s25, 7
      %p70 = por %p68, %p69
      %p71 = scmp.ne.s32.totalorder %s60, %s61
      %p72 = scmp.eq.s32.totalorder %s25, 0
      %p73 = por %p71, %p72
      %p74 = scmp.ne.s32.totalorder %s60, %s61
      %p75 = scmp.eq.s32.totalorder %s26, 7
      %p76 = por %p74, %p75
      %p78 = scmp.ne.s32.totalorder %s61, %s77
      %p79 = scmp.eq.s32.totalorder %s26, 0
      %p80 = por %p78, %p79
      %s81 = ssub.s32 1, %s28
      %s82 = smul.u32 %s29, %s81
      %s83 = sadd.s32 %s82, %s28
      %s84 = ssub.s32 1, %s42
      %s85 = smul.u32 %s38, %s84
      %s86 = sadd.s32 %s85, %s42
      %s87 = ssub.s32 %s83, %s86
      %p88 = scmp.eq.s32.totalorder %s87, 0
      %s90 = sadd.s32 %s89, 1
      %s91 = scalar_select %p88, %s89, %s90
      %p94 = pneg %p88
      %p95 = scmp.eq.s32.totalorder %s20, 7
      %p96 = por %p94, %p95
      %p97 = scmp.ne.s32.totalorder %s89, %s92
      %p98 = scmp.eq.s32.totalorder %s20, 0
      %p99 = por %p97, %p98
      %p100 = scmp.ne.s32.totalorder %s89, %s92
      %p101 = scmp.eq.s32.totalorder %s25, 7
      %p102 = por %p100, %p101
      %p103 = scmp.ne.s32.totalorder %s92, %s93
      %p104 = scmp.eq.s32.totalorder %s25, 0
      %p105 = por %p103, %p104
      %p106 = scmp.ne.s32.totalorder %s92, %s93
      %p107 = scmp.eq.s32.totalorder %s26, 7
      %p108 = por %p106, %p107
      %p110 = scmp.ne.s32.totalorder %s93, %s109
      %p111 = scmp.eq.s32.totalorder %s26, 0
      %p112 = por %p110, %p111
      %s114 = sadd.s32 %s113, 1
      %p117 = scmp.eq.s32.totalorder %s20, 7
      %p118 = scmp.ne.s32.totalorder %s113, %s115
      %p119 = scmp.eq.s32.totalorder %s20, 0
      %p120 = por %p118, %p119
      %p121 = scmp.ne.s32.totalorder %s113, %s115
      %p122 = scmp.eq.s32.totalorder %s25, 7
      %p123 = por %p121, %p122
      %p124 = scmp.ne.s32.totalorder %s115, %s116
      %p125 = scmp.eq.s32.totalorder %s25, 0
      %p126 = por %p124, %p125
      %p127 = scmp.ne.s32.totalorder %s115, %s116
      %p128 = scmp.eq.s32.totalorder %s26, 7
      %p129 = por %p127, %p128
      %p131 = scmp.ne.s32.totalorder %s116, %s130
      %p132 = scmp.eq.s32.totalorder %s26, 0
      %p133 = por %p131, %p132
      %s135 = sadd.s32 %s134, 1
      %p138 = scmp.eq.s32.totalorder %s20, 7
      %p139 = scmp.ne.s32.totalorder %s134, %s136
      %p140 = scmp.eq.s32.totalorder %s20, 0
      %p141 = por %p139, %p140
      %p142 = scmp.ne.s32.totalorder %s134, %s136
      %p143 = scmp.eq.s32.totalorder %s25, 7
      %p144 = por %p142, %p143
      %p145 = scmp.ne.s32.totalorder %s136, %s137
      %p146 = scmp.eq.s32.totalorder %s25, 0
      %p147 = por %p145, %p146
      %p148 = scmp.ne.s32.totalorder %s136, %s137
      %p149 = scmp.eq.s32.totalorder %s26, 7
      %p150 = por %p148, %p149
      %p152 = scmp.ne.s32.totalorder %s137, %s151
      %p153 = scmp.eq.s32.totalorder %s26, 0
      %p154 = por %p152, %p153
      %s156 = sadd.s32 %s155, 1
      %p159 = scmp.eq.s32.totalorder %s20, 7
      %p160 = scmp.ne.s32.totalorder %s155, %s157
      %p161 = scmp.eq.s32.totalorder %s20, 0
      %p162 = por %p160, %p161
      %p163 = scmp.ne.s32.totalorder %s155, %s157
      %p164 = scmp.eq.s32.totalorder %s25, 7
      %p165 = por %p163, %p164
      %p166 = scmp.ne.s32.totalorder %s157, %s158
      %p167 = scmp.eq.s32.totalorder %s25, 0
      %p168 = por %p166, %p167
      %p169 = scmp.ne.s32.totalorder %s157, %s158
      %p170 = scmp.eq.s32.totalorder %s26, 7
      %p171 = por %p169, %p170
      %p173 = scmp.ne.s32.totalorder %s158, %s172
      %p174 = scmp.eq.s32.totalorder %s26, 0
      %p175 = por %p173, %p174
      %s177 = sadd.s32 %s176, 1
      %p180 = scmp.eq.s32.totalorder %s20, 7
      %p181 = scmp.ne.s32.totalorder %s176, %s178
      %p182 = scmp.eq.s32.totalorder %s20, 0
      %p183 = por %p181, %p182
      %p184 = scmp.ne.s32.totalorder %s176, %s178
      %p185 = scmp.eq.s32.totalorder %s25, 7
      %p186 = por %p184, %p185
      %p187 = scmp.ne.s32.totalorder %s178, %s179
      %p188 = scmp.eq.s32.totalorder %s25, 0
      %p189 = por %p187, %p188
      %p190 = scmp.ne.s32.totalorder %s178, %s179
      %p191 = scmp.eq.s32.totalorder %s26, 7
      %p192 = por %p190, %p191
      %p194 = scmp.ne.s32.totalorder %s179, %s193
      %p195 = scmp.eq.s32.totalorder %s26, 0
      %p196 = por %p194, %p195
      %s198 = sadd.s32 %s197, 1
      %p201 = scmp.eq.s32.totalorder %s20, 7
      %p202 = scmp.ne.s32.totalorder %s197, %s199
      %p203 = scmp.eq.s32.totalorder %s20, 0
      %p204 = por %p202, %p203
      %p205 = scmp.ne.s32.totalorder %s197, %s199
      %p206 = scmp.eq.s32.totalorder %s25, 7
      %p207 = por %p205, %p206
      %p208 = scmp.ne.s32.totalorder %s199, %s200
      %p209 = scmp.eq.s32.totalorder %s25, 0
      %p210 = por %p208, %p209
      %p211 = scmp.ne.s32.totalorder %s199, %s200
      %p212 = scmp.eq.s32.totalorder %s26, 7
      %p213 = por %p211, %p212
      %p215 = scmp.ne.s32.totalorder %s200, %s214
      %p216 = scmp.eq.s32.totalorder %s26, 0
      %p217 = por %p215, %p216
      %s218 = smul.u32 %s29, %s28
      %s219 = smul.u32 %s38, %s42
      %s220 = ssub.s32 %s218, %s219
      %p221 = scmp.eq.s32.totalorder %s220, 0
      %s223 = sadd.s32 %s222, 1
      %s224 = scalar_select %p221, %s222, %s223
      %p227 = pneg %p221
      %p228 = scmp.eq.s32.totalorder %s20, 7
      %p229 = por %p227, %p228
      %p230 = scmp.ne.s32.totalorder %s222, %s225
      %p231 = scmp.eq.s32.totalorder %s20, 0
      %p232 = por %p230, %p231
      %p233 = scmp.ne.s32.totalorder %s222, %s225
      %p234 = scmp.eq.s32.totalorder %s25, 7
      %p235 = por %p233, %p234
      %p236 = scmp.ne.s32.totalorder %s225, %s226
      %p237 = scmp.eq.s32.totalorder %s25, 0
      %p238 = por %p236, %p237
      %p239 = scmp.ne.s32.totalorder %s225, %s226
      %p240 = scmp.eq.s32.totalorder %s26, 7
      %p241 = por %p239, %p240
      %p243 = scmp.ne.s32.totalorder %s226, %s242
      %p244 = scmp.eq.s32.totalorder %s26, 0
      %p245 = por %p243, %p244
      %s246 = smul.u32 %s29, %s28
      %s247 = smul.u32 %s38, %s42
      %s248 = ssub.s32 %s246, %s247
      %p249 = scmp.eq.s32.totalorder %s248, 0
      %s251 = sadd.s32 %s250, 1
      %s252 = scalar_select %p249, %s250, %s251
      %p255 = pneg %p249
      %p256 = scmp.eq.s32.totalorder %s20, 7
      %p257 = por %p255, %p256
      %p258 = scmp.ne.s32.totalorder %s250, %s253
      %p259 = scmp.eq.s32.totalorder %s20, 0
      %p260 = por %p258, %p259
      %p261 = scmp.ne.s32.totalorder %s250, %s253
      %p262 = scmp.eq.s32.totalorder %s25, 7
      %p263 = por %p261, %p262
      %p264 = scmp.ne.s32.totalorder %s253, %s254
      %p265 = scmp.eq.s32.totalorder %s25, 0
      %p266 = por %p264, %p265
      %p267 = scmp.ne.s32.totalorder %s253, %s254
      %p268 = scmp.eq.s32.totalorder %s26, 7
      %p269 = por %p267, %p268
      %p271 = scmp.ne.s32.totalorder %s254, %s270
      %p272 = scmp.eq.s32.totalorder %s26, 0
      %p273 = por %p271, %p272
      %s274 = smul.u32 %s29, %s28
      %s275 = smul.u32 %s38, %s42
      %s276 = ssub.s32 %s27, %s46
      %s277 = ssub.s32 %s274, %s275
      %s278 = sor.u32 %s276, %s277
      %p279 = scmp.eq.s32.totalorder %s278, 0
      %s281 = sadd.s32 %s280, 1
      %s282 = scalar_select %p279, %s280, %s281
      %p285 = pneg %p279
      %p286 = scmp.eq.s32.totalorder %s20, 7
      %p287 = por %p285, %p286
      %p288 = scmp.ne.s32.totalorder %s280, %s283
      %p289 = scmp.eq.s32.totalorder %s20, 0
      %p290 = por %p288, %p289
      %p291 = scmp.ne.s32.totalorder %s280, %s283
      %p292 = scmp.eq.s32.totalorder %s25, 7
      %p293 = por %p291, %p292
      %p294 = scmp.ne.s32.totalorder %s283, %s284
      %p295 = scmp.eq.s32.totalorder %s25, 0
      %p296 = por %p294, %p295
      %p297 = scmp.ne.s32.totalorder %s283, %s284
      %p298 = scmp.eq.s32.totalorder %s26, 7
      %p299 = por %p297, %p298
      %p301 = scmp.ne.s32.totalorder %s284, %s300
      %p302 = scmp.eq.s32.totalorder %s26, 0
      %p303 = por %p301, %p302
      %s304 = ssub.s32 %s27, %s46
      %p305 = scmp.eq.s32.totalorder %s304, 0
      %s307 = sadd.s32 %s306, 1
      %s308 = scalar_select %p305, %s306, %s307
      %p311 = pneg %p305
      %p312 = scmp.eq.s32.totalorder %s20, 7
      %p313 = por %p311, %p312
      %p314 = scmp.ne.s32.totalorder %s306, %s309
      %p315 = scmp.eq.s32.totalorder %s20, 0
      %p316 = por %p314, %p315
      %p317 = scmp.ne.s32.totalorder %s306, %s309
      %p318 = scmp.eq.s32.totalorder %s25, 7
      %p319 = por %p317, %p318
      %p320 = scmp.ne.s32.totalorder %s309, %s310
      %p321 = scmp.eq.s32.totalorder %s25, 0
      %p322 = por %p320, %p321
      %p323 = scmp.ne.s32.totalorder %s309, %s310
      %p324 = scmp.eq.s32.totalorder %s26, 7
      %p325 = por %p323, %p324
      %p327 = scmp.ne.s32.totalorder %s310, %s326
      %p328 = scmp.eq.s32.totalorder %s26, 0
      %p329 = por %p327, %p328
      %p330 = scmp.le.s32.totalorder 1, %s20
      %p331 = scmp.lt.s32.totalorder %s20, 9
      %p332 = pnand %p330, %p331
      %p333 = pneg %p332
      // Predicated region
      $region9: #{dae_forward.1} parent=5 // pred_check
        _
      $region10: #{dae_forward.1} parent=5 // pred_check_branch
        %335 = sbr.rel (%p332) target = $region12
      $region11: #{dae_forward.1} parent=5 // pred_region
        %s336 = ssub.s32 %s20, 1
        // Predicated region
        $region13: #{dae_forward.1} parent=11 // pred_check
          %p337 = pneg %p126
        $region14: #{dae_forward.1} parent=11 // pred_check_branch
          %339 = sbr.rel (%p337) target = $region16
        $region15: #{dae_forward.1} parent=11 // pred_region
          _
        $region16: #{dae_forward.1} parent=11 // pred_fallthru
          _
        // Predicated region
        $region17: #{dae_forward.1} parent=11 // pred_check
          %p340 = pneg %p147
        $region18: #{dae_forward.1} parent=11 // pred_check_branch
          %342 = sbr.rel (%p340) target = $region20
        $region19: #{dae_forward.1} parent=11 // pred_region
          _
        $region20: #{dae_forward.1} parent=11 // pred_fallthru
          _
        // Predicated region
        $region21: #{dae_forward.1} parent=11 // pred_check
          %p343 = pneg %p168
        $region22: #{dae_forward.1} parent=11 // pred_check_branch
          %345 = sbr.rel (%p343) target = $region24
        $region23: #{dae_forward.1} parent=11 // pred_region
          _
        $region24: #{dae_forward.1} parent=11 // pred_fallthru
          _
        // Predicated region
        $region25: #{dae_forward.1} parent=11 // pred_check
          %p346 = pneg %p189
        $region26: #{dae_forward.1} parent=11 // pred_check_branch
          %348 = sbr.rel (%p346) target = $region28
        $region27: #{dae_forward.1} parent=11 // pred_region
          _
        $region28: #{dae_forward.1} parent=11 // pred_fallthru
          _
        // Predicated region
        $region29: #{dae_forward.1} parent=11 // pred_check
          %p349 = pneg %p210
        $region30: #{dae_forward.1} parent=11 // pred_check_branch
          %351 = sbr.rel (%p349) target = $region32
        $region31: #{dae_forward.1} parent=11 // pred_region
          _
        $region32: #{dae_forward.1} parent=11 // pred_fallthru
          _
      $region12: #{dae_forward.1} parent=5 // pred_fallthru
        _
      %p352 = scmp.lt.s32.totalorder %s20, 8
      // Predicated region
      $region33: #{dae_forward.1} parent=5 // pred_check
        %p353 = pneg %p352
      $region34: #{dae_forward.1} parent=5 // pred_check_branch
        %355 = sbr.rel (%p353) target = $region36
      $region35: #{dae_forward.1} parent=5 // pred_region
        // Predicated region
        $region37: #{dae_forward.1} parent=35 // pred_check
          %p356 = pneg %p67
        $region38: #{dae_forward.1} parent=35 // pred_check_branch
          %358 = sbr.rel (%p356) target = $region40
        $region39: #{dae_forward.1} parent=35 // pred_region
          %s359 = sand.u32 %s57, 1
          %s360 = sand.u32 %s57, 1
          %s361 = smul.addr %s360, 512
          %s362 = scalar_lea.vmem [#allocation6], %s361
          %s363 = ssub.s32 1, %s28
          %s364 = smul.u32 %s29, %s363
          %s365 = sadd.s32 %s364, %s28
          %s366 = smul.u32 8, %s27
          %s367 = smul.u32 8, %s365
          %s368 = smul.addr %s366, 16
          %s369 = sadd.s32 %s367, %s368
          %s370 = smul.addr %s369, 8
          %s371 = scalar_lea.vmem %s0, %s370
          // Predicated region
          $region41: #{dae_forward.1} parent=39 // pred_check
            _
          $region42: #{dae_forward.1} parent=39 // pred_check_branch
            %373 = sbr.rel (0) target = $region44
          $region43: #{dae_forward.1} parent=39 // pred_region
            // Predicated region
            $region45: #{dae_forward.1} parent=43 // pred_check
              _
            $region46: #{dae_forward.1} parent=43 // pred_check_branch
              %375 = sbr.rel (0) target = $region48
            $region47: #{dae_forward.1} parent=43 // pred_region
              loop: start=0, step=1, limit=1
              $region49: #{dae_forward.1} parent=47 // loop_pre_header
                _
              $region50: #{dae_forward.1} parent=47 // loop_header
                %s377 = sphi 0, %s381
                %p378 = scmp.ge.s32.totalorder %s377, 1
                %s382 = sphi %s371, %s371
                %s383 = sphi %s362, %s362
              $region51: #{dae_forward.1} parent=47 // loop_header_branch
                %380 = sbr.rel (%p378) target = $region55
              $region52: #{dae_forward.1} parent=47 // loop_body
                %v384 = vld [vmem:[%s382] sm:$0xff]
                %385 = vst [vmem:[%s383] sm:$0xff] %v384
                %v386 = vld [vmem:[%s382 + $0x8] sm:$0xff]
                %387 = vst [vmem:[%s383 + $0x8] sm:$0xff] %v386
                %v388 = vld [vmem:[%s382 + $0x10] sm:$0xff]
                %389 = vst [vmem:[%s383 + $0x10] sm:$0xff] %v388
                %v390 = vld [vmem:[%s382 + $0x18] sm:$0xff]
                %391 = vst [vmem:[%s383 + $0x18] sm:$0xff] %v390
                %v392 = vld [vmem:[%s382 + $0x20] sm:$0xff]
                %393 = vst [vmem:[%s383 + $0x20] sm:$0xff] %v392
                %v394 = vld [vmem:[%s382 + $0x28] sm:$0xff]
                %395 = vst [vmem:[%s383 + $0x28] sm:$0xff] %v394
                %v396 = vld [vmem:[%s382 + $0x30] sm:$0xff]
                %397 = vst [vmem:[%s383 + $0x30] sm:$0xff] %v396
                %v398 = vld [vmem:[%s382 + $0x38] sm:$0xff]
                %399 = vst [vmem:[%s383 + $0x38] sm:$0xff] %v398
                %v400 = vld [vmem:[%s382 + $0x80] sm:$0xff]
                %401 = vst [vmem:[%s383 + $0x40] sm:$0xff] %v400
                %v402 = vld [vmem:[%s382 + $0x88] sm:$0xff]
                %403 = vst [vmem:[%s383 + $0x48] sm:$0xff] %v402
                %v404 = vld [vmem:[%s382 + $0x90] sm:$0xff]
                %405 = vst [vmem:[%s383 + $0x50] sm:$0xff] %v404
                %v406 = vld [vmem:[%s382 + $0x98] sm:$0xff]
                %407 = vst [vmem:[%s383 + $0x58] sm:$0xff] %v406
                %v408 = vld [vmem:[%s382 + $0xa0] sm:$0xff]
                %409 = vst [vmem:[%s383 + $0x60] sm:$0xff] %v408
                %v410 = vld [vmem:[%s382 + $0xa8] sm:$0xff]
                %411 = vst [vmem:[%s383 + $0x68] sm:$0xff] %v410
                %v412 = vld [vmem:[%s382 + $0xb0] sm:$0xff]
                %413 = vst [vmem:[%s383 + $0x70] sm:$0xff] %v412
                %v414 = vld [vmem:[%s382 + $0xb8] sm:$0xff]
                %415 = vst [vmem:[%s383 + $0x78] sm:$0xff] %v414
                %v416 = vld [vmem:[%s382 + $0x100] sm:$0xff]
                %417 = vst [vmem:[%s383 + $0x80] sm:$0xff] %v416
                %v418 = vld [vmem:[%s382 + $0x108] sm:$0xff]
                %419 = vst [vmem:[%s383 + $0x88] sm:$0xff] %v418
                %v420 = vld [vmem:[%s382 + $0x110] sm:$0xff]
                %421 = vst [vmem:[%s383 + $0x90] sm:$0xff] %v420
                %v422 = vld [vmem:[%s382 + $0x118] sm:$0xff]
                %423 = vst [vmem:[%s383 + $0x98] sm:$0xff] %v422
                %v424 = vld [vmem:[%s382 + $0x120] sm:$0xff]
                %425 = vst [vmem:[%s383 + $0xa0] sm:$0xff] %v424
                %v426 = vld [vmem:[%s382 + $0x128] sm:$0xff]
                %427 = vst [vmem:[%s383 + $0xa8] sm:$0xff] %v426
                %v428 = vld [vmem:[%s382 + $0x130] sm:$0xff]
                %429 = vst [vmem:[%s383 + $0xb0] sm:$0xff] %v428
                %v430 = vld [vmem:[%s382 + $0x138] sm:$0xff]
                %431 = vst [vmem:[%s383 + $0xb8] sm:$0xff] %v430
                %v432 = vld [vmem:[%s382 + $0x180] sm:$0xff]
                %433 = vst [vmem:[%s383 + $0xc0] sm:$0xff] %v432
                %v434 = vld [vmem:[%s382 + $0x188] sm:$0xff]
                %435 = vst [vmem:[%s383 + $0xc8] sm:$0xff] %v434
                %v436 = vld [vmem:[%s382 + $0x190] sm:$0xff]
                %437 = vst [vmem:[%s383 + $0xd0] sm:$0xff] %v436
                %v438 = vld [vmem:[%s382 + $0x198] sm:$0xff]
                %439 = vst [vmem:[%s383 + $0xd8] sm:$0xff] %v438
                %v440 = vld [vmem:[%s382 + $0x1a0] sm:$0xff]
                %441 = vst [vmem:[%s383 + $0xe0] sm:$0xff] %v440
                %v442 = vld [vmem:[%s382 + $0x1a8] sm:$0xff]
                %443 = vst [vmem:[%s383 + $0xe8] sm:$0xff] %v442
                %v444 = vld [vmem:[%s382 + $0x1b0] sm:$0xff]
                %445 = vst [vmem:[%s383 + $0xf0] sm:$0xff] %v444
                %v446 = vld [vmem:[%s382 + $0x1b8] sm:$0xff]
                %447 = vst [vmem:[%s383 + $0xf8] sm:$0xff] %v446
                %v448 = vld [vmem:[%s382 + $0x200] sm:$0xff]
                %449 = vst [vmem:[%s383 + $0x100] sm:$0xff] %v448
                %v450 = vld [vmem:[%s382 + $0x208] sm:$0xff]
                %451 = vst [vmem:[%s383 + $0x108] sm:$0xff] %v450
                %v452 = vld [vmem:[%s382 + $0x210] sm:$0xff]
                %453 = vst [vmem:[%s383 + $0x110] sm:$0xff] %v452
                %v454 = vld [vmem:[%s382 + $0x218] sm:$0xff]
                %455 = vst [vmem:[%s383 + $0x118] sm:$0xff] %v454
                %v456 = vld [vmem:[%s382 + $0x220] sm:$0xff]
                %457 = vst [vmem:[%s383 + $0x120] sm:$0xff] %v456
                %v458 = vld [vmem:[%s382 + $0x228] sm:$0xff]
                %459 = vst [vmem:[%s383 + $0x128] sm:$0xff] %v458
                %v460 = vld [vmem:[%s382 + $0x230] sm:$0xff]
                %461 = vst [vmem:[%s383 + $0x130] sm:$0xff] %v460
                %v462 = vld [vmem:[%s382 + $0x238] sm:$0xff]
                %463 = vst [vmem:[%s383 + $0x138] sm:$0xff] %v462
                %v464 = vld [vmem:[%s382 + $0x280] sm:$0xff]
                %465 = vst [vmem:[%s383 + $0x140] sm:$0xff] %v464
                %v466 = vld [vmem:[%s382 + $0x288] sm:$0xff]
                %467 = vst [vmem:[%s383 + $0x148] sm:$0xff] %v466
                %v468 = vld [vmem:[%s382 + $0x290] sm:$0xff]
                %469 = vst [vmem:[%s383 + $0x150] sm:$0xff] %v468
                %v470 = vld [vmem:[%s382 + $0x298] sm:$0xff]
                %471 = vst [vmem:[%s383 + $0x158] sm:$0xff] %v470
                %v472 = vld [vmem:[%s382 + $0x2a0] sm:$0xff]
                %473 = vst [vmem:[%s383 + $0x160] sm:$0xff] %v472
                %v474 = vld [vmem:[%s382 + $0x2a8] sm:$0xff]
                %475 = vst [vmem:[%s383 + $0x168] sm:$0xff] %v474
                %v476 = vld [vmem:[%s382 + $0x2b0] sm:$0xff]
                %477 = vst [vmem:[%s383 + $0x170] sm:$0xff] %v476
                %v478 = vld [vmem:[%s382 + $0x2b8] sm:$0xff]
                %479 = vst [vmem:[%s383 + $0x178] sm:$0xff] %v478
                %v480 = vld [vmem:[%s382 + $0x300] sm:$0xff]
                %481 = vst [vmem:[%s383 + $0x180] sm:$0xff] %v480
                %v482 = vld [vmem:[%s382 + $0x308] sm:$0xff]
                %483 = vst [vmem:[%s383 + $0x188] sm:$0xff] %v482
                %v484 = vld [vmem:[%s382 + $0x310] sm:$0xff]
                %485 = vst [vmem:[%s383 + $0x190] sm:$0xff] %v484
                %v486 = vld [vmem:[%s382 + $0x318] sm:$0xff]
                %487 = vst [vmem:[%s383 + $0x198] sm:$0xff] %v486
                %v488 = vld [vmem:[%s382 + $0x320] sm:$0xff]
                %489 = vst [vmem:[%s383 + $0x1a0] sm:$0xff] %v488
                %v490 = vld [vmem:[%s382 + $0x328] sm:$0xff]
                %491 = vst [vmem:[%s383 + $0x1a8] sm:$0xff] %v490
                %v492 = vld [vmem:[%s382 + $0x330] sm:$0xff]
                %493 = vst [vmem:[%s383 + $0x1b0] sm:$0xff] %v492
                %v494 = vld [vmem:[%s382 + $0x338] sm:$0xff]
                %495 = vst [vmem:[%s383 + $0x1b8] sm:$0xff] %v494
                %v496 = vld [vmem:[%s382 + $0x380] sm:$0xff]
                %497 = vst [vmem:[%s383 + $0x1c0] sm:$0xff] %v496
                %v498 = vld [vmem:[%s382 + $0x388] sm:$0xff]
                %499 = vst [vmem:[%s383 + $0x1c8] sm:$0xff] %v498
                %v500 = vld [vmem:[%s382 + $0x390] sm:$0xff]
                %501 = vst [vmem:[%s383 + $0x1d0] sm:$0xff] %v500
                %v502 = vld [vmem:[%s382 + $0x398] sm:$0xff]
                %503 = vst [vmem:[%s383 + $0x1d8] sm:$0xff] %v502
                %v504 = vld [vmem:[%s382 + $0x3a0] sm:$0xff]
                %505 = vst [vmem:[%s383 + $0x1e0] sm:$0xff] %v504
                %v506 = vld [vmem:[%s382 + $0x3a8] sm:$0xff]
                %507 = vst [vmem:[%s383 + $0x1e8] sm:$0xff] %v506
                %v508 = vld [vmem:[%s382 + $0x3b0] sm:$0xff]
                %509 = vst [vmem:[%s383 + $0x1f0] sm:$0xff] %v508
                %v510 = vld [vmem:[%s382 + $0x3b8] sm:$0xff]
                %511 = vst [vmem:[%s383 + $0x1f8] sm:$0xff] %v510
              $region53: #{dae_forward.1} parent=47 // loop_footer
                %s381 = sadd.s32 1, %s377
              $region54: #{dae_forward.1} parent=47 // loop_footer_branch
                %376 = sbr.rel target = $region50
              $region55: #{dae_forward.1} parent=47 // loop_exit
                _
            $region48: #{dae_forward.1} parent=43 // pred_fallthru
              _
            // Predicated region
            $region56: #{dae_forward.1} parent=43 // pred_check
              _
            $region57: #{dae_forward.1} parent=43 // pred_check_branch
              %513 = sbr.rel target = $region59
            $region58: #{dae_forward.1} parent=43 // pred_region
              _
            $region59: #{dae_forward.1} parent=43 // pred_fallthru
              _
          $region44: #{dae_forward.1} parent=39 // pred_fallthru
            _
          %514 = vnop
        $region40: #{dae_forward.1} parent=35 // pred_fallthru
          _
        // Predicated region
        $region60: #{dae_forward.1} parent=35 // pred_check
          %p515 = pneg %p99
        $region61: #{dae_forward.1} parent=35 // pred_check_branch
          %517 = sbr.rel (%p515) target = $region63
        $region62: #{dae_forward.1} parent=35 // pred_region
          %s518 = ssub.s32 1, %s28
          %s519 = smul.u32 %s29, %s518
          %s520 = sadd.s32 %s519, %s28
          %s521 = smul.u32 128, %s520
          %p522 = scmp.lt.s32.totalorder %s521, 255
          %s523 = scalar_select %p522, %s521, 255
          %s524 = smul.addr %s523, 4
          %s525 = scalar_lea.vmem %s1, %s524
          %s526 = ssub.s32 1, %s28
          %s527 = smul.u32 %s29, %s526
          %s528 = sadd.s32 %s527, %s28
          %s529 = smul.u32 128, %s528
        $region63: #{dae_forward.1} parent=35 // pred_fallthru
          _
        // Predicated region
        $region64: #{dae_forward.1} parent=35 // pred_check
          %p530 = pneg %p232
        $region65: #{dae_forward.1} parent=35 // pred_check_branch
          %532 = sbr.rel (%p530) target = $region67
        $region66: #{dae_forward.1} parent=35 // pred_region
          %s533 = sand.u32 %s222, 1
          %s534 = sand.u32 %s222, 1
          %s535 = smul.addr %s534, 512
          %s536 = scalar_lea.vmem [#allocation7], %s535
          %s537 = smul.u32 %s29, %s28
          %s538 = smul.u32 8, %s537
          %s539 = smul.addr %s538, 4
          %s540 = scalar_lea.vmem %s7, %s539
          // Predicated region
          $region68: #{dae_forward.1} parent=66 // pred_check
            _
          $region69: #{dae_forward.1} parent=66 // pred_check_branch
            %542 = sbr.rel (0) target = $region71
          $region70: #{dae_forward.1} parent=66 // pred_region
            // Predicated region
            $region72: #{dae_forward.1} parent=70 // pred_check
              _
            $region73: #{dae_forward.1} parent=70 // pred_check_branch
              %544 = sbr.rel (0) target = $region75
            $region74: #{dae_forward.1} parent=70 // pred_region
              loop: start=0, step=1, limit=1
              $region76: #{dae_forward.1} parent=74 // loop_pre_header
                _
              $region77: #{dae_forward.1} parent=74 // loop_header
                %s546 = sphi 0, %s550
                %p547 = scmp.ge.s32.totalorder %s546, 1
                %s551 = sphi %s540, %s540
                %s552 = sphi %s536, %s536
              $region78: #{dae_forward.1} parent=74 // loop_header_branch
                %549 = sbr.rel (%p547) target = $region82
              $region79: #{dae_forward.1} parent=74 // loop_body
                %v553 = vld [vmem:[%s551] sm:$0xff]
                %554 = vst [vmem:[%s552] sm:$0xff] %v553
                %v555 = vld [vmem:[%s551 + $0x8] sm:$0xff]
                %556 = vst [vmem:[%s552 + $0x8] sm:$0xff] %v555
                %v557 = vld [vmem:[%s551 + $0x10] sm:$0xff]
                %558 = vst [vmem:[%s552 + $0x10] sm:$0xff] %v557
                %v559 = vld [vmem:[%s551 + $0x18] sm:$0xff]
                %560 = vst [vmem:[%s552 + $0x18] sm:$0xff] %v559
                %v561 = vld [vmem:[%s551 + $0x40] sm:$0xff]
                %562 = vst [vmem:[%s552 + $0x20] sm:$0xff] %v561
                %v563 = vld [vmem:[%s551 + $0x48] sm:$0xff]
                %564 = vst [vmem:[%s552 + $0x28] sm:$0xff] %v563
                %v565 = vld [vmem:[%s551 + $0x50] sm:$0xff]
                %566 = vst [vmem:[%s552 + $0x30] sm:$0xff] %v565
                %v567 = vld [vmem:[%s551 + $0x58] sm:$0xff]
                %568 = vst [vmem:[%s552 + $0x38] sm:$0xff] %v567
                %v569 = vld [vmem:[%s551 + $0x80] sm:$0xff]
                %570 = vst [vmem:[%s552 + $0x40] sm:$0xff] %v569
                %v571 = vld [vmem:[%s551 + $0x88] sm:$0xff]
                %572 = vst [vmem:[%s552 + $0x48] sm:$0xff] %v571
                %v573 = vld [vmem:[%s551 + $0x90] sm:$0xff]
                %574 = vst [vmem:[%s552 + $0x50] sm:$0xff] %v573
                %v575 = vld [vmem:[%s551 + $0x98] sm:$0xff]
                %576 = vst [vmem:[%s552 + $0x58] sm:$0xff] %v575
                %v577 = vld [vmem:[%s551 + $0xc0] sm:$0xff]
                %578 = vst [vmem:[%s552 + $0x60] sm:$0xff] %v577
                %v579 = vld [vmem:[%s551 + $0xc8] sm:$0xff]
                %580 = vst [vmem:[%s552 + $0x68] sm:$0xff] %v579
                %v581 = vld [vmem:[%s551 + $0xd0] sm:$0xff]
                %582 = vst [vmem:[%s552 + $0x70] sm:$0xff] %v581
                %v583 = vld [vmem:[%s551 + $0xd8] sm:$0xff]
                %584 = vst [vmem:[%s552 + $0x78] sm:$0xff] %v583
                %v585 = vld [vmem:[%s551 + $0x100] sm:$0xff]
                %586 = vst [vmem:[%s552 + $0x80] sm:$0xff] %v585
                %v587 = vld [vmem:[%s551 + $0x108] sm:$0xff]
                %588 = vst [vmem:[%s552 + $0x88] sm:$0xff] %v587
                %v589 = vld [vmem:[%s551 + $0x110] sm:$0xff]
                %590 = vst [vmem:[%s552 + $0x90] sm:$0xff] %v589
                %v591 = vld [vmem:[%s551 + $0x118] sm:$0xff]
                %592 = vst [vmem:[%s552 + $0x98] sm:$0xff] %v591
                %v593 = vld [vmem:[%s551 + $0x140] sm:$0xff]
                %594 = vst [vmem:[%s552 + $0xa0] sm:$0xff] %v593
                %v595 = vld [vmem:[%s551 + $0x148] sm:$0xff]
                %596 = vst [vmem:[%s552 + $0xa8] sm:$0xff] %v595
                %v597 = vld [vmem:[%s551 + $0x150] sm:$0xff]
                %598 = vst [vmem:[%s552 + $0xb0] sm:$0xff] %v597
                %v599 = vld [vmem:[%s551 + $0x158] sm:$0xff]
                %600 = vst [vmem:[%s552 + $0xb8] sm:$0xff] %v599
                %v601 = vld [vmem:[%s551 + $0x180] sm:$0xff]
                %602 = vst [vmem:[%s552 + $0xc0] sm:$0xff] %v601
                %v603 = vld [vmem:[%s551 + $0x188] sm:$0xff]
                %604 = vst [vmem:[%s552 + $0xc8] sm:$0xff] %v603
                %v605 = vld [vmem:[%s551 + $0x190] sm:$0xff]
                %606 = vst [vmem:[%s552 + $0xd0] sm:$0xff] %v605
                %v607 = vld [vmem:[%s551 + $0x198] sm:$0xff]
                %608 = vst [vmem:[%s552 + $0xd8] sm:$0xff] %v607
                %v609 = vld [vmem:[%s551 + $0x1c0] sm:$0xff]
                %610 = vst [vmem:[%s552 + $0xe0] sm:$0xff] %v609
                %v611 = vld [vmem:[%s551 + $0x1c8] sm:$0xff]
                %612 = vst [vmem:[%s552 + $0xe8] sm:$0xff] %v611
                %v613 = vld [vmem:[%s551 + $0x1d0] sm:$0xff]
                %614 = vst [vmem:[%s552 + $0xf0] sm:$0xff] %v613
                %v615 = vld [vmem:[%s551 + $0x1d8] sm:$0xff]
                %616 = vst [vmem:[%s552 + $0xf8] sm:$0xff] %v615
                %v617 = vld [vmem:[%s551 + $0x200] sm:$0xff]
                %618 = vst [vmem:[%s552 + $0x100] sm:$0xff] %v617
                %v619 = vld [vmem:[%s551 + $0x208] sm:$0xff]
                %620 = vst [vmem:[%s552 + $0x108] sm:$0xff] %v619
                %v621 = vld [vmem:[%s551 + $0x210] sm:$0xff]
                %622 = vst [vmem:[%s552 + $0x110] sm:$0xff] %v621
                %v623 = vld [vmem:[%s551 + $0x218] sm:$0xff]
                %624 = vst [vmem:[%s552 + $0x118] sm:$0xff] %v623
                %v625 = vld [vmem:[%s551 + $0x240] sm:$0xff]
                %626 = vst [vmem:[%s552 + $0x120] sm:$0xff] %v625
                %v627 = vld [vmem:[%s551 + $0x248] sm:$0xff]
                %628 = vst [vmem:[%s552 + $0x128] sm:$0xff] %v627
                %v629 = vld [vmem:[%s551 + $0x250] sm:$0xff]
                %630 = vst [vmem:[%s552 + $0x130] sm:$0xff] %v629
                %v631 = vld [vmem:[%s551 + $0x258] sm:$0xff]
                %632 = vst [vmem:[%s552 + $0x138] sm:$0xff] %v631
                %v633 = vld [vmem:[%s551 + $0x280] sm:$0xff]
                %634 = vst [vmem:[%s552 + $0x140] sm:$0xff] %v633
                %v635 = vld [vmem:[%s551 + $0x288] sm:$0xff]
                %636 = vst [vmem:[%s552 + $0x148] sm:$0xff] %v635
                %v637 = vld [vmem:[%s551 + $0x290] sm:$0xff]
                %638 = vst [vmem:[%s552 + $0x150] sm:$0xff] %v637
                %v639 = vld [vmem:[%s551 + $0x298] sm:$0xff]
                %640 = vst [vmem:[%s552 + $0x158] sm:$0xff] %v639
                %v641 = vld [vmem:[%s551 + $0x2c0] sm:$0xff]
                %642 = vst [vmem:[%s552 + $0x160] sm:$0xff] %v641
                %v643 = vld [vmem:[%s551 + $0x2c8] sm:$0xff]
                %644 = vst [vmem:[%s552 + $0x168] sm:$0xff] %v643
                %v645 = vld [vmem:[%s551 + $0x2d0] sm:$0xff]
                %646 = vst [vmem:[%s552 + $0x170] sm:$0xff] %v645
                %v647 = vld [vmem:[%s551 + $0x2d8] sm:$0xff]
                %648 = vst [vmem:[%s552 + $0x178] sm:$0xff] %v647
                %v649 = vld [vmem:[%s551 + $0x300] sm:$0xff]
                %650 = vst [vmem:[%s552 + $0x180] sm:$0xff] %v649
                %v651 = vld [vmem:[%s551 + $0x308] sm:$0xff]
                %652 = vst [vmem:[%s552 + $0x188] sm:$0xff] %v651
                %v653 = vld [vmem:[%s551 + $0x310] sm:$0xff]
                %654 = vst [vmem:[%s552 + $0x190] sm:$0xff] %v653
                %v655 = vld [vmem:[%s551 + $0x318] sm:$0xff]
                %656 = vst [vmem:[%s552 + $0x198] sm:$0xff] %v655
                %v657 = vld [vmem:[%s551 + $0x340] sm:$0xff]
                %658 = vst [vmem:[%s552 + $0x1a0] sm:$0xff] %v657
                %v659 = vld [vmem:[%s551 + $0x348] sm:$0xff]
                %660 = vst [vmem:[%s552 + $0x1a8] sm:$0xff] %v659
                %v661 = vld [vmem:[%s551 + $0x350] sm:$0xff]
                %662 = vst [vmem:[%s552 + $0x1b0] sm:$0xff] %v661
                %v663 = vld [vmem:[%s551 + $0x358] sm:$0xff]
                %664 = vst [vmem:[%s552 + $0x1b8] sm:$0xff] %v663
                %v665 = vld [vmem:[%s551 + $0x380] sm:$0xff]
                %666 = vst [vmem:[%s552 + $0x1c0] sm:$0xff] %v665
                %v667 = vld [vmem:[%s551 + $0x388] sm:$0xff]
                %668 = vst [vmem:[%s552 + $0x1c8] sm:$0xff] %v667
                %v669 = vld [vmem:[%s551 + $0x390] sm:$0xff]
                %670 = vst [vmem:[%s552 + $0x1d0] sm:$0xff] %v669
                %v671 = vld [vmem:[%s551 + $0x398] sm:$0xff]
                %672 = vst [vmem:[%s552 + $0x1d8] sm:$0xff] %v671
                %v673 = vld [vmem:[%s551 + $0x3c0] sm:$0xff]
                %674 = vst [vmem:[%s552 + $0x1e0] sm:$0xff] %v673
                %v675 = vld [vmem:[%s551 + $0x3c8] sm:$0xff]
                %676 = vst [vmem:[%s552 + $0x1e8] sm:$0xff] %v675
                %v677 = vld [vmem:[%s551 + $0x3d0] sm:$0xff]
                %678 = vst [vmem:[%s552 + $0x1f0] sm:$0xff] %v677
                %v679 = vld [vmem:[%s551 + $0x3d8] sm:$0xff]
                %680 = vst [vmem:[%s552 + $0x1f8] sm:$0xff] %v679
              $region80: #{dae_forward.1} parent=74 // loop_footer
                %s550 = sadd.s32 1, %s546
              $region81: #{dae_forward.1} parent=74 // loop_footer_branch
                %545 = sbr.rel target = $region77
              $region82: #{dae_forward.1} parent=74 // loop_exit
                _
            $region75: #{dae_forward.1} parent=70 // pred_fallthru
              _
            // Predicated region
            $region83: #{dae_forward.1} parent=70 // pred_check
              _
            $region84: #{dae_forward.1} parent=70 // pred_check_branch
              %682 = sbr.rel target = $region86
            $region85: #{dae_forward.1} parent=70 // pred_region
              _
            $region86: #{dae_forward.1} parent=70 // pred_fallthru
              _
          $region71: #{dae_forward.1} parent=66 // pred_fallthru
            _
          %683 = vnop
        $region67: #{dae_forward.1} parent=35 // pred_fallthru
          _
        // Predicated region
        $region87: #{dae_forward.1} parent=35 // pred_check
          %p684 = pneg %p260
        $region88: #{dae_forward.1} parent=35 // pred_check_branch
          %686 = sbr.rel (%p684) target = $region90
        $region89: #{dae_forward.1} parent=35 // pred_region
          %s687 = smul.u32 %s29, %s28
          %s688 = smul.u32 8, %s687
          %p689 = scmp.lt.s32.totalorder %s688, 15
          %s690 = scalar_select %p689, %s688, 15
          %s691 = scalar_lea.vmem %s8, %s690
          %s692 = smul.u32 %s29, %s28
          %s693 = smul.u32 8, %s692
        $region90: #{dae_forward.1} parent=35 // pred_fallthru
          _
      $region36: #{dae_forward.1} parent=5 // pred_fallthru
        _
      %p694 = scmp.le.s32.totalorder 1, %s20
      %p695 = scmp.lt.s32.totalorder %s20, 9
      %p696 = pnand %p694, %p695
      %p697 = pneg %p696
      // Predicated region
      $region91: #{dae_forward.1} parent=5 // pred_check
        _
      $region92: #{dae_forward.1} parent=5 // pred_check_branch
        %699 = sbr.rel (%p696) target = $region94
      $region93: #{dae_forward.1} parent=5 // pred_region
        %s700 = ssub.s32 %s20, 1
        %s701 = sand.u32 %s60, 1
        %s702 = sand.u32 %s60, 1
        %s703 = smul.addr %s702, 512
        %s704 = scalar_lea.vmem [#allocation6], %s703
        // Predicated region
        $region95: #{dae_forward.1} parent=93 // pred_check
          %p705 = pneg %p73
        $region96: #{dae_forward.1} parent=93 // pred_check_branch
          %707 = sbr.rel (%p705) target = $region98
        $region97: #{dae_forward.1} parent=93 // pred_region
          _
        $region98: #{dae_forward.1} parent=93 // pred_fallthru
          _
        %s708 = sand.u32 %s225, 1
        %s709 = sand.u32 %s225, 1
        %s710 = smul.addr %s709, 512
        %s711 = scalar_lea.vmem [#allocation7], %s710
        // Predicated region
        $region99: #{dae_forward.1} parent=93 // pred_check
          %p712 = pneg %p238
        $region100: #{dae_forward.1} parent=93 // pred_check_branch
          %714 = sbr.rel (%p712) target = $region102
        $region101: #{dae_forward.1} parent=93 // pred_region
          _
        $region102: #{dae_forward.1} parent=93 // pred_fallthru
          _
        %s715 = sand.u32 %s60, 1
        %s716 = sand.u32 %s60, 1
        %s717 = smul.addr %s716, 512
        %s718 = scalar_lea.vmem [#allocation6], %s717
        %p719 = pneg %p73
        %p720 = pneg %p70
        %s721 = ssub.s32 1, %s31
        %s722 = smul.u32 %s32, %s721
        %s723 = sadd.s32 %s722, %s31
        %s724 = smul.u32 128, %s723
        %p725 = scmp.lt.s32.totalorder %s724, 255
        %s726 = scalar_select %p725, %s724, 255
        %s727 = smul.addr %s726, 4
        %s728 = scalar_lea.vmem %s1, %s727
        %p729 = pneg %p105
        %p730 = pneg %p102
        %p731 = pneg %p126
        %p732 = pneg %p123
        %p733 = pneg %p147
        %p734 = pneg %p144
        %p735 = pneg %p168
        %p736 = pneg %p165
        %p737 = pneg %p189
        %p738 = pneg %p186
        %p739 = pneg %p210
        %p740 = pneg %p207
        %s741 = sand.u32 %s225, 1
        %s742 = sand.u32 %s225, 1
        %s743 = smul.addr %s742, 512
        %s744 = scalar_lea.vmem [#allocation7], %s743
        %p745 = pneg %p238
        %p746 = pneg %p235
        %s747 = smul.u32 %s32, %s31
        %s748 = smul.u32 8, %s747
        %p749 = scmp.lt.s32.totalorder %s748, 15
        %s750 = scalar_select %p749, %s748, 15
        %s751 = scalar_lea.vmem %s8, %s750
        %p752 = pneg %p266
        %p753 = pneg %p263
        %p754 = pneg %p296
        %p755 = pneg %p293
        %s756 = sand.u32 %s283, 1
        %s757 = scalar_lea.sflag [#allocation9], %s756
        %s758 = sand.u32 %s283, 1
        %s759 = smul.addr %s758, 256
        %s760 = scalar_lea.vmem [#allocation8], %s759
        %p761 = pneg %p322
        %p762 = pneg %p319
        %p763 = scmp.lt.s32.totalorder %s30, 1
        %s764 = scalar_select %p763, %s30, 1
        %s765 = smul.addr %s764, 8
        %s766 = smul.addr %s765, 8
        %s767 = scalar_lea.vmem %s10, %s766
        %s768 = ssub.s32 1, %s31
        %s769 = smul.u32 %s32, %s768
        %s770 = sadd.s32 %s769, %s31
        %s771 = smul.u32 8, %s30
        %s772 = smul.u32 8, %s770
        %s773 = ssub.s32 1, %s31
        %s774 = smul.u32 %s32, %s773
        %s775 = sadd.s32 %s774, %s31
        %s776 = smul.u32 128, %s775
        %p777 = scmp.lt.s32.totalorder %s776, 255
        %s778 = scalar_select %p777, %s776, 255
        %s779 = smul.addr %s778, 4
        %s780 = scalar_lea.vmem %s1, %s779
        %s781 = ssub.s32 1, %s31
        %s782 = smul.u32 %s32, %s781
        %s783 = sadd.s32 %s782, %s31
        %s784 = smul.u32 128, %s783
        %s785 = smul.u32 %s32, %s31
        %s786 = smul.u32 8, %s785
        %s787 = smul.u32 %s32, %s31
        %s788 = smul.u32 8, %s787
        %p789 = scmp.lt.s32.totalorder %s788, 15
        %s790 = scalar_select %p789, %s788, 15
        %s791 = scalar_lea.vmem %s8, %s790
        %s792 = smul.u32 %s32, %s31
        %s793 = smul.u32 8, %s792
        %s794 = smul.u32 %s32, %s31
        %s795 = smul.u32 8, %s30
        %s796 = smul.u32 8, %s794
        %p797 = scmp.lt.s32.totalorder %s30, 1
        %s798 = scalar_select %p797, %s30, 1
        %s799 = smul.addr %s798, 8
        %s800 = smul.addr %s799, 8
        %s801 = scalar_lea.vmem %s10, %s800
        %p803 = scmp.eq.s32.totalorder %s31, 0
        // Predicated region
        $region103: #{dae_forward.1} parent=93 // pred_check
          %p804 = pneg %p803
        $region104: #{dae_forward.1} parent=93 // pred_check_branch
          %806 = sbr.rel (%p804) target = $region106
        $region105: #{dae_forward.1} parent=93 // pred_region
          %p807 = scmp.eq.s32.totalorder %s32, 0
          // Predicated region
          $region107: #{dae_forward.1} parent=105 // pred_check
            %p808 = pneg %p807
          $region108: #{dae_forward.1} parent=105 // pred_check_branch
            %810 = sbr.rel (%p808) target = $region110
          $region109: #{dae_forward.1} parent=105 // pred_region
            %811 = vst [vmem:[#allocation2] sm:$0xff] 0.0
            %812 = vst [vmem:[#allocation2 + $0x8] sm:$0xff] 0.0
            %813 = vst [vmem:[#allocation2 + $0x10] sm:$0xff] 0.0
            %814 = vst [vmem:[#allocation2 + $0x18] sm:$0xff] 0.0
            %815 = vst [vmem:[#allocation2 + $0x20] sm:$0xff] 0.0
            %816 = vst [vmem:[#allocation2 + $0x28] sm:$0xff] 0.0
            %817 = vst [vmem:[#allocation2 + $0x30] sm:$0xff] 0.0
            %818 = vst [vmem:[#allocation2 + $0x38] sm:$0xff] 0.0
          $region110: #{dae_forward.1} parent=105 // pred_fallthru
            _
          %v819 = vld [vmem:[%s704] sm:$0xff]
          %v820 = vld [vmem:[%s704 + $0x8] sm:$0xff]
          %v821 = vld [vmem:[%s704 + $0x10] sm:$0xff]
          %v822 = vld [vmem:[%s704 + $0x18] sm:$0xff]
          %v823 = vld [vmem:[%s704 + $0x20] sm:$0xff]
          %v824 = vld [vmem:[%s704 + $0x28] sm:$0xff]
          %v825 = vld [vmem:[%s704 + $0x30] sm:$0xff]
          %v826 = vld [vmem:[%s704 + $0x38] sm:$0xff]
          %v827 = vld [vmem:[%s704 + $0x40] sm:$0xff]
          %v828 = vld [vmem:[%s704 + $0x48] sm:$0xff]
          %v829 = vld [vmem:[%s704 + $0x50] sm:$0xff]
          %v830 = vld [vmem:[%s704 + $0x58] sm:$0xff]
          %v831 = vld [vmem:[%s704 + $0x60] sm:$0xff]
          %v832 = vld [vmem:[%s704 + $0x68] sm:$0xff]
          %v833 = vld [vmem:[%s704 + $0x70] sm:$0xff]
          %v834 = vld [vmem:[%s704 + $0x78] sm:$0xff]
          %v835 = vld [vmem:[%s704 + $0x80] sm:$0xff]
          %v836 = vld [vmem:[%s704 + $0x88] sm:$0xff]
          %v837 = vld [vmem:[%s704 + $0x90] sm:$0xff]
          %v838 = vld [vmem:[%s704 + $0x98] sm:$0xff]
          %v839 = vld [vmem:[%s704 + $0xa0] sm:$0xff]
          %v840 = vld [vmem:[%s704 + $0xa8] sm:$0xff]
          %v841 = vld [vmem:[%s704 + $0xb0] sm:$0xff]
          %v842 = vld [vmem:[%s704 + $0xb8] sm:$0xff]
          %v843 = vld [vmem:[%s704 + $0xc0] sm:$0xff]
          %v844 = vld [vmem:[%s704 + $0xc8] sm:$0xff]
          %v845 = vld [vmem:[%s704 + $0xd0] sm:$0xff]
          %v846 = vld [vmem:[%s704 + $0xd8] sm:$0xff]
          %v847 = vld [vmem:[%s704 + $0xe0] sm:$0xff]
          %v848 = vld [vmem:[%s704 + $0xe8] sm:$0xff]
          %v849 = vld [vmem:[%s704 + $0xf0] sm:$0xff]
          %v850 = vld [vmem:[%s704 + $0xf8] sm:$0xff]
          %v851 = vld [vmem:[%s704 + $0x100] sm:$0xff]
          %v852 = vld [vmem:[%s704 + $0x108] sm:$0xff]
          %v853 = vld [vmem:[%s704 + $0x110] sm:$0xff]
          %v854 = vld [vmem:[%s704 + $0x118] sm:$0xff]
          %v855 = vld [vmem:[%s704 + $0x120] sm:$0xff]
          %v856 = vld [vmem:[%s704 + $0x128] sm:$0xff]
          %v857 = vld [vmem:[%s704 + $0x130] sm:$0xff]
          %v858 = vld [vmem:[%s704 + $0x138] sm:$0xff]
          %v859 = vld [vmem:[%s704 + $0x140] sm:$0xff]
          %v860 = vld [vmem:[%s704 + $0x148] sm:$0xff]
          %v861 = vld [vmem:[%s704 + $0x150] sm:$0xff]
          %v862 = vld [vmem:[%s704 + $0x158] sm:$0xff]
          %v863 = vld [vmem:[%s704 + $0x160] sm:$0xff]
          %v864 = vld [vmem:[%s704 + $0x168] sm:$0xff]
          %v865 = vld [vmem:[%s704 + $0x170] sm:$0xff]
          %v866 = vld [vmem:[%s704 + $0x178] sm:$0xff]
          %v867 = vld [vmem:[%s704 + $0x180] sm:$0xff]
          %v868 = vld [vmem:[%s704 + $0x188] sm:$0xff]
          %v869 = vld [vmem:[%s704 + $0x190] sm:$0xff]
          %v870 = vld [vmem:[%s704 + $0x198] sm:$0xff]
          %v871 = vld [vmem:[%s704 + $0x1a0] sm:$0xff]
          %v872 = vld [vmem:[%s704 + $0x1a8] sm:$0xff]
          %v873 = vld [vmem:[%s704 + $0x1b0] sm:$0xff]
          %v874 = vld [vmem:[%s704 + $0x1b8] sm:$0xff]
          %v875 = vld [vmem:[%s704 + $0x1c0] sm:$0xff]
          %v876 = vld [vmem:[%s704 + $0x1c8] sm:$0xff]
          %v877 = vld [vmem:[%s704 + $0x1d0] sm:$0xff]
          %v878 = vld [vmem:[%s704 + $0x1d8] sm:$0xff]
          %v879 = vld [vmem:[%s704 + $0x1e0] sm:$0xff]
          %v880 = vld [vmem:[%s704 + $0x1e8] sm:$0xff]
          %v881 = vld [vmem:[%s704 + $0x1f0] sm:$0xff]
          %v882 = vld [vmem:[%s704 + $0x1f8] sm:$0xff]
          %s883 = smul.u32 %s32, 1024
          %s884 = sshra.s32 %s883, 7
          %s885 = sand.u32 %s883, 127
          %s886 = smul.addr %s884, 8
          %s887 = scalar_lea.vmem [#allocation4], %s886
          %888 = vst [vmem:[%s887] sm:$0xff] %v819
          %889 = vst [vmem:[%s887 + $0x8] sm:$0xff] %v820
          %890 = vst [vmem:[%s887 + $0x10] sm:$0xff] %v821
          %891 = vst [vmem:[%s887 + $0x18] sm:$0xff] %v822
          %892 = vst [vmem:[%s887 + $0x20] sm:$0xff] %v823
          %893 = vst [vmem:[%s887 + $0x28] sm:$0xff] %v824
          %894 = vst [vmem:[%s887 + $0x30] sm:$0xff] %v825
          %895 = vst [vmem:[%s887 + $0x38] sm:$0xff] %v826
          %896 = vst [vmem:[%s887 + $0x80] sm:$0xff] %v827
          %897 = vst [vmem:[%s887 + $0x88] sm:$0xff] %v828
          %898 = vst [vmem:[%s887 + $0x90] sm:$0xff] %v829
          %899 = vst [vmem:[%s887 + $0x98] sm:$0xff] %v830
          %900 = vst [vmem:[%s887 + $0xa0] sm:$0xff] %v831
          %901 = vst [vmem:[%s887 + $0xa8] sm:$0xff] %v832
          %902 = vst [vmem:[%s887 + $0xb0] sm:$0xff] %v833
          %903 = vst [vmem:[%s887 + $0xb8] sm:$0xff] %v834
          %904 = vst [vmem:[%s887 + $0x100] sm:$0xff] %v835
          %905 = vst [vmem:[%s887 + $0x108] sm:$0xff] %v836
          %906 = vst [vmem:[%s887 + $0x110] sm:$0xff] %v837
          %907 = vst [vmem:[%s887 + $0x118] sm:$0xff] %v838
          %908 = vst [vmem:[%s887 + $0x120] sm:$0xff] %v839
          %909 = vst [vmem:[%s887 + $0x128] sm:$0xff] %v840
          %910 = vst [vmem:[%s887 + $0x130] sm:$0xff] %v841
          %911 = vst [vmem:[%s887 + $0x138] sm:$0xff] %v842
          %912 = vst [vmem:[%s887 + $0x180] sm:$0xff] %v843
          %913 = vst [vmem:[%s887 + $0x188] sm:$0xff] %v844
          %914 = vst [vmem:[%s887 + $0x190] sm:$0xff] %v845
          %915 = vst [vmem:[%s887 + $0x198] sm:$0xff] %v846
          %916 = vst [vmem:[%s887 + $0x1a0] sm:$0xff] %v847
          %917 = vst [vmem:[%s887 + $0x1a8] sm:$0xff] %v848
          %918 = vst [vmem:[%s887 + $0x1b0] sm:$0xff] %v849
          %919 = vst [vmem:[%s887 + $0x1b8] sm:$0xff] %v850
          %920 = vst [vmem:[%s887 + $0x200] sm:$0xff] %v851
          %921 = vst [vmem:[%s887 + $0x208] sm:$0xff] %v852
          %922 = vst [vmem:[%s887 + $0x210] sm:$0xff] %v853
          %923 = vst [vmem:[%s887 + $0x218] sm:$0xff] %v854
          %924 = vst [vmem:[%s887 + $0x220] sm:$0xff] %v855
          %925 = vst [vmem:[%s887 + $0x228] sm:$0xff] %v856
          %926 = vst [vmem:[%s887 + $0x230] sm:$0xff] %v857
          %927 = vst [vmem:[%s887 + $0x238] sm:$0xff] %v858
          %928 = vst [vmem:[%s887 + $0x280] sm:$0xff] %v859
          %929 = vst [vmem:[%s887 + $0x288] sm:$0xff] %v860
          %930 = vst [vmem:[%s887 + $0x290] sm:$0xff] %v861
          %931 = vst [vmem:[%s887 + $0x298] sm:$0xff] %v862
          %932 = vst [vmem:[%s887 + $0x2a0] sm:$0xff] %v863
          %933 = vst [vmem:[%s887 + $0x2a8] sm:$0xff] %v864
          %934 = vst [vmem:[%s887 + $0x2b0] sm:$0xff] %v865
          %935 = vst [vmem:[%s887 + $0x2b8] sm:$0xff] %v866
          %936 = vst [vmem:[%s887 + $0x300] sm:$0xff] %v867
          %937 = vst [vmem:[%s887 + $0x308] sm:$0xff] %v868
          %938 = vst [vmem:[%s887 + $0x310] sm:$0xff] %v869
          %939 = vst [vmem:[%s887 + $0x318] sm:$0xff] %v870
          %940 = vst [vmem:[%s887 + $0x320] sm:$0xff] %v871
          %941 = vst [vmem:[%s887 + $0x328] sm:$0xff] %v872
          %942 = vst [vmem:[%s887 + $0x330] sm:$0xff] %v873
          %943 = vst [vmem:[%s887 + $0x338] sm:$0xff] %v874
          %944 = vst [vmem:[%s887 + $0x380] sm:$0xff] %v875
          %945 = vst [vmem:[%s887 + $0x388] sm:$0xff] %v876
          %946 = vst [vmem:[%s887 + $0x390] sm:$0xff] %v877
          %947 = vst [vmem:[%s887 + $0x398] sm:$0xff] %v878
          %948 = vst [vmem:[%s887 + $0x3a0] sm:$0xff] %v879
          %949 = vst [vmem:[%s887 + $0x3a8] sm:$0xff] %v880
          %950 = vst [vmem:[%s887 + $0x3b0] sm:$0xff] %v881
          %951 = vst [vmem:[%s887 + $0x3b8] sm:$0xff] %v882
          %v952 = vld [vmem:[#allocation2] sm:$0xff]
          %v953 = vld [vmem:[#allocation2 + $0x8] sm:$0xff]
          %v954 = vld [vmem:[#allocation2 + $0x10] sm:$0xff]
          %v955 = vld [vmem:[#allocation2 + $0x18] sm:$0xff]
          %v956 = vld [vmem:[#allocation2 + $0x20] sm:$0xff]
          %v957 = vld [vmem:[#allocation2 + $0x28] sm:$0xff]
          %v958 = vld [vmem:[#allocation2 + $0x30] sm:$0xff]
          %v959 = vld [vmem:[#allocation2 + $0x38] sm:$0xff]
          %v960 = vpack.c.bf16 %v827, %v819
          %v961 = vpack.c.bf16 %v828, %v820
          %v962 = vpack.c.bf16 %v829, %v821
          %v963 = vpack.c.bf16 %v830, %v822
          %v964 = vpack.c.bf16 %v831, %v823
          %v965 = vpack.c.bf16 %v832, %v824
          %v966 = vpack.c.bf16 %v833, %v825
          %v967 = vpack.c.bf16 %v834, %v826
          %v968 = vpack.c.bf16 %v843, %v835
          %v969 = vpack.c.bf16 %v844, %v836
          %v970 = vpack.c.bf16 %v845, %v837
          %v971 = vpack.c.bf16 %v846, %v838
          %v972 = vpack.c.bf16 %v847, %v839
          %v973 = vpack.c.bf16 %v848, %v840
          %v974 = vpack.c.bf16 %v849, %v841
          %v975 = vpack.c.bf16 %v850, %v842
          %v976 = vpack.c.bf16 %v859, %v851
          %v977 = vpack.c.bf16 %v860, %v852
          %v978 = vpack.c.bf16 %v861, %v853
          %v979 = vpack.c.bf16 %v862, %v854
          %v980 = vpack.c.bf16 %v863, %v855
          %v981 = vpack.c.bf16 %v864, %v856
          %v982 = vpack.c.bf16 %v865, %v857
          %v983 = vpack.c.bf16 %v866, %v858
          %v984 = vpack.c.bf16 %v875, %v867
          %v985 = vpack.c.bf16 %v876, %v868
          %v986 = vpack.c.bf16 %v877, %v869
          %v987 = vpack.c.bf16 %v878, %v870
          %v988 = vpack.c.bf16 %v879, %v871
          %v989 = vpack.c.bf16 %v880, %v872
          %v990 = vpack.c.bf16 %v881, %v873
          %v991 = vpack.c.bf16 %v882, %v874
          %v992 = vld [vmem:[%s780] sm:$0xf]
          %v993 = vld [vmem:[%s780 + $0x4] sm:$0xf]
          %v994 = vld [vmem:[%s780 + $0x8] sm:$0xf]
          %v995 = vld [vmem:[%s780 + $0xc] sm:$0xf]
          %v996 = vld [vmem:[%s780 + $0x10] sm:$0xf]
          %v997 = vld [vmem:[%s780 + $0x14] sm:$0xf]
          %v998 = vld [vmem:[%s780 + $0x18] sm:$0xf]
          %v999 = vld [vmem:[%s780 + $0x1c] sm:$0xf]
          %v1000 = vld [vmem:[%s780 + $0x20] sm:$0xf]
          %v1001 = vld [vmem:[%s780 + $0x24] sm:$0xf]
          %v1002 = vld [vmem:[%s780 + $0x28] sm:$0xf]
          %v1003 = vld [vmem:[%s780 + $0x2c] sm:$0xf]
          %v1004 = vld [vmem:[%s780 + $0x30] sm:$0xf]
          %v1005 = vld [vmem:[%s780 + $0x34] sm:$0xf]
          %v1006 = vld [vmem:[%s780 + $0x38] sm:$0xf]
          %v1007 = vld [vmem:[%s780 + $0x3c] sm:$0xf]
          %v1008 = vld [vmem:[%s780 + $0x40] sm:$0xf]
          %v1009 = vld [vmem:[%s780 + $0x44] sm:$0xf]
          %v1010 = vld [vmem:[%s780 + $0x48] sm:$0xf]
          %v1011 = vld [vmem:[%s780 + $0x4c] sm:$0xf]
          %v1012 = vld [vmem:[%s780 + $0x50] sm:$0xf]
          %v1013 = vld [vmem:[%s780 + $0x54] sm:$0xf]
          %v1014 = vld [vmem:[%s780 + $0x58] sm:$0xf]
          %v1015 = vld [vmem:[%s780 + $0x5c] sm:$0xf]
          %v1016 = vld [vmem:[%s780 + $0x60] sm:$0xf]
          %v1017 = vld [vmem:[%s780 + $0x64] sm:$0xf]
          %v1018 = vld [vmem:[%s780 + $0x68] sm:$0xf]
          %v1019 = vld [vmem:[%s780 + $0x6c] sm:$0xf]
          %v1020 = vld [vmem:[%s780 + $0x70] sm:$0xf]
          %v1021 = vld [vmem:[%s780 + $0x74] sm:$0xf]
          %v1022 = vld [vmem:[%s780 + $0x78] sm:$0xf]
          %v1023 = vld [vmem:[%s780 + $0x7c] sm:$0xf]
          %v1024 = vld [vmem:[%s780 + $0x80] sm:$0xf]
          %v1025 = vld [vmem:[%s780 + $0x84] sm:$0xf]
          %v1026 = vld [vmem:[%s780 + $0x88] sm:$0xf]
          %v1027 = vld [vmem:[%s780 + $0x8c] sm:$0xf]
          %v1028 = vld [vmem:[%s780 + $0x90] sm:$0xf]
          %v1029 = vld [vmem:[%s780 + $0x94] sm:$0xf]
          %v1030 = vld [vmem:[%s780 + $0x98] sm:$0xf]
          %v1031 = vld [vmem:[%s780 + $0x9c] sm:$0xf]
          %v1032 = vld [vmem:[%s780 + $0xa0] sm:$0xf]
          %v1033 = vld [vmem:[%s780 + $0xa4] sm:$0xf]
          %v1034 = vld [vmem:[%s780 + $0xa8] sm:$0xf]
          %v1035 = vld [vmem:[%s780 + $0xac] sm:$0xf]
          %v1036 = vld [vmem:[%s780 + $0xb0] sm:$0xf]
          %v1037 = vld [vmem:[%s780 + $0xb4] sm:$0xf]
          %v1038 = vld [vmem:[%s780 + $0xb8] sm:$0xf]
          %v1039 = vld [vmem:[%s780 + $0xbc] sm:$0xf]
          %v1040 = vld [vmem:[%s780 + $0xc0] sm:$0xf]
          %v1041 = vld [vmem:[%s780 + $0xc4] sm:$0xf]
          %v1042 = vld [vmem:[%s780 + $0xc8] sm:$0xf]
          %v1043 = vld [vmem:[%s780 + $0xcc] sm:$0xf]
          %v1044 = vld [vmem:[%s780 + $0xd0] sm:$0xf]
          %v1045 = vld [vmem:[%s780 + $0xd4] sm:$0xf]
          %v1046 = vld [vmem:[%s780 + $0xd8] sm:$0xf]
          %v1047 = vld [vmem:[%s780 + $0xdc] sm:$0xf]
          %v1048 = vld [vmem:[%s780 + $0xe0] sm:$0xf]
          %v1049 = vld [vmem:[%s780 + $0xe4] sm:$0xf]
          %v1050 = vld [vmem:[%s780 + $0xe8] sm:$0xf]
          %v1051 = vld [vmem:[%s780 + $0xec] sm:$0xf]
          %v1052 = vld [vmem:[%s780 + $0xf0] sm:$0xf]
          %v1053 = vld [vmem:[%s780 + $0xf4] sm:$0xf]
          %v1054 = vld [vmem:[%s780 + $0xf8] sm:$0xf]
          %v1055 = vld [vmem:[%s780 + $0xfc] sm:$0xf]
          %v1056 = vld [vmem:[%s780 + $0x100] sm:$0xf]
          %v1057 = vld [vmem:[%s780 + $0x104] sm:$0xf]
          %v1058 = vld [vmem:[%s780 + $0x108] sm:$0xf]
          %v1059 = vld [vmem:[%s780 + $0x10c] sm:$0xf]
          %v1060 = vld [vmem:[%s780 + $0x110] sm:$0xf]
          %v1061 = vld [vmem:[%s780 + $0x114] sm:$0xf]
          %v1062 = vld [vmem:[%s780 + $0x118] sm:$0xf]
          %v1063 = vld [vmem:[%s780 + $0x11c] sm:$0xf]
          %v1064 = vld [vmem:[%s780 + $0x120] sm:$0xf]
          %v1065 = vld [vmem:[%s780 + $0x124] sm:$0xf]
          %v1066 = vld [vmem:[%s780 + $0x128] sm:$0xf]
          %v1067 = vld [vmem:[%s780 + $0x12c] sm:$0xf]
          %v1068 = vld [vmem:[%s780 + $0x130] sm:$0xf]
          %v1069 = vld [vmem:[%s780 + $0x134] sm:$0xf]
          %v1070 = vld [vmem:[%s780 + $0x138] sm:$0xf]
          %v1071 = vld [vmem:[%s780 + $0x13c] sm:$0xf]
          %v1072 = vld [vmem:[%s780 + $0x140] sm:$0xf]
          %v1073 = vld [vmem:[%s780 + $0x144] sm:$0xf]
          %v1074 = vld [vmem:[%s780 + $0x148] sm:$0xf]
          %v1075 = vld [vmem:[%s780 + $0x14c] sm:$0xf]
          %v1076 = vld [vmem:[%s780 + $0x150] sm:$0xf]
          %v1077 = vld [vmem:[%s780 + $0x154] sm:$0xf]
          %v1078 = vld [vmem:[%s780 + $0x158] sm:$0xf]
          %v1079 = vld [vmem:[%s780 + $0x15c] sm:$0xf]
          %v1080 = vld [vmem:[%s780 + $0x160] sm:$0xf]
          %v1081 = vld [vmem:[%s780 + $0x164] sm:$0xf]
          %v1082 = vld [vmem:[%s780 + $0x168] sm:$0xf]
          %v1083 = vld [vmem:[%s780 + $0x16c] sm:$0xf]
          %v1084 = vld [vmem:[%s780 + $0x170] sm:$0xf]
          %v1085 = vld [vmem:[%s780 + $0x174] sm:$0xf]
          %v1086 = vld [vmem:[%s780 + $0x178] sm:$0xf]
          %v1087 = vld [vmem:[%s780 + $0x17c] sm:$0xf]
          %v1088 = vld [vmem:[%s780 + $0x180] sm:$0xf]
          %v1089 = vld [vmem:[%s780 + $0x184] sm:$0xf]
          %v1090 = vld [vmem:[%s780 + $0x188] sm:$0xf]
          %v1091 = vld [vmem:[%s780 + $0x18c] sm:$0xf]
          %v1092 = vld [vmem:[%s780 + $0x190] sm:$0xf]
          %v1093 = vld [vmem:[%s780 + $0x194] sm:$0xf]
          %v1094 = vld [vmem:[%s780 + $0x198] sm:$0xf]
          %v1095 = vld [vmem:[%s780 + $0x19c] sm:$0xf]
          %v1096 = vld [vmem:[%s780 + $0x1a0] sm:$0xf]
          %v1097 = vld [vmem:[%s780 + $0x1a4] sm:$0xf]
          %v1098 = vld [vmem:[%s780 + $0x1a8] sm:$0xf]
          %v1099 = vld [vmem:[%s780 + $0x1ac] sm:$0xf]
          %v1100 = vld [vmem:[%s780 + $0x1b0] sm:$0xf]
          %v1101 = vld [vmem:[%s780 + $0x1b4] sm:$0xf]
          %v1102 = vld [vmem:[%s780 + $0x1b8] sm:$0xf]
          %v1103 = vld [vmem:[%s780 + $0x1bc] sm:$0xf]
          %v1104 = vld [vmem:[%s780 + $0x1c0] sm:$0xf]
          %v1105 = vld [vmem:[%s780 + $0x1c4] sm:$0xf]
          %v1106 = vld [vmem:[%s780 + $0x1c8] sm:$0xf]
          %v1107 = vld [vmem:[%s780 + $0x1cc] sm:$0xf]
          %v1108 = vld [vmem:[%s780 + $0x1d0] sm:$0xf]
          %v1109 = vld [vmem:[%s780 + $0x1d4] sm:$0xf]
          %v1110 = vld [vmem:[%s780 + $0x1d8] sm:$0xf]
          %v1111 = vld [vmem:[%s780 + $0x1dc] sm:$0xf]
          %v1112 = vld [vmem:[%s780 + $0x1e0] sm:$0xf]
          %v1113 = vld [vmem:[%s780 + $0x1e4] sm:$0xf]
          %v1114 = vld [vmem:[%s780 + $0x1e8] sm:$0xf]
          %v1115 = vld [vmem:[%s780 + $0x1ec] sm:$0xf]
          %v1116 = vld [vmem:[%s780 + $0x1f0] sm:$0xf]
          %v1117 = vld [vmem:[%s780 + $0x1f4] sm:$0xf]
          %v1118 = vld [vmem:[%s780 + $0x1f8] sm:$0xf]
          %v1119 = vld [vmem:[%s780 + $0x1fc] sm:$0xf]
          %v1248 = vunpack.c.l.b16 %v992
          %v1249 = vunpack.c.l.b16 %v993
          %v1250 = vunpack.c.l.b16 %v994
          %v1251 = vunpack.c.l.b16 %v995
          %v1252 = vunpack.c.l.b16 %v996
          %v1253 = vunpack.c.l.b16 %v997
          %v1254 = vunpack.c.l.b16 %v998
          %v1255 = vunpack.c.l.b16 %v999
          %v1256 = vunpack.c.l.b16 %v1000
          %v1257 = vunpack.c.l.b16 %v1001
          %v1258 = vunpack.c.l.b16 %v1002
          %v1259 = vunpack.c.l.b16 %v1003
          %v1260 = vunpack.c.l.b16 %v1004
          %v1261 = vunpack.c.l.b16 %v1005
          %v1262 = vunpack.c.l.b16 %v1006
          %v1263 = vunpack.c.l.b16 %v1007
          %v1264 = vunpack.c.l.b16 %v1008
          %v1265 = vunpack.c.l.b16 %v1009
          %v1266 = vunpack.c.l.b16 %v1010
          %v1267 = vunpack.c.l.b16 %v1011
          %v1268 = vunpack.c.l.b16 %v1012
          %v1269 = vunpack.c.l.b16 %v1013
          %v1270 = vunpack.c.l.b16 %v1014
          %v1271 = vunpack.c.l.b16 %v1015
          %v1272 = vunpack.c.l.b16 %v1016
          %v1273 = vunpack.c.l.b16 %v1017
          %v1274 = vunpack.c.l.b16 %v1018
          %v1275 = vunpack.c.l.b16 %v1019
          %v1276 = vunpack.c.l.b16 %v1020
          %v1277 = vunpack.c.l.b16 %v1021
          %v1278 = vunpack.c.l.b16 %v1022
          %v1279 = vunpack.c.l.b16 %v1023
          %v1280 = vunpack.c.l.b16 %v1024
          %v1281 = vunpack.c.l.b16 %v1025
          %v1282 = vunpack.c.l.b16 %v1026
          %v1283 = vunpack.c.l.b16 %v1027
          %v1284 = vunpack.c.l.b16 %v1028
          %v1285 = vunpack.c.l.b16 %v1029
          %v1286 = vunpack.c.l.b16 %v1030
          %v1287 = vunpack.c.l.b16 %v1031
          %v1288 = vunpack.c.l.b16 %v1032
          %v1289 = vunpack.c.l.b16 %v1033
          %v1290 = vunpack.c.l.b16 %v1034
          %v1291 = vunpack.c.l.b16 %v1035
          %v1292 = vunpack.c.l.b16 %v1036
          %v1293 = vunpack.c.l.b16 %v1037
          %v1294 = vunpack.c.l.b16 %v1038
          %v1295 = vunpack.c.l.b16 %v1039
          %v1296 = vunpack.c.l.b16 %v1040
          %v1297 = vunpack.c.l.b16 %v1041
          %v1298 = vunpack.c.l.b16 %v1042
          %v1299 = vunpack.c.l.b16 %v1043
          %v1300 = vunpack.c.l.b16 %v1044
          %v1301 = vunpack.c.l.b16 %v1045
          %v1302 = vunpack.c.l.b16 %v1046
          %v1303 = vunpack.c.l.b16 %v1047
          %v1304 = vunpack.c.l.b16 %v1048
          %v1305 = vunpack.c.l.b16 %v1049
          %v1306 = vunpack.c.l.b16 %v1050
          %v1307 = vunpack.c.l.b16 %v1051
          %v1308 = vunpack.c.l.b16 %v1052
          %v1309 = vunpack.c.l.b16 %v1053
          %v1310 = vunpack.c.l.b16 %v1054
          %v1311 = vunpack.c.l.b16 %v1055
          %v1312 = vunpack.c.l.b16 %v1056
          %v1313 = vunpack.c.l.b16 %v1057
          %v1314 = vunpack.c.l.b16 %v1058
          %v1315 = vunpack.c.l.b16 %v1059
          %v1316 = vunpack.c.l.b16 %v1060
          %v1317 = vunpack.c.l.b16 %v1061
          %v1318 = vunpack.c.l.b16 %v1062
          %v1319 = vunpack.c.l.b16 %v1063
          %v1320 = vunpack.c.l.b16 %v1064
          %v1321 = vunpack.c.l.b16 %v1065
          %v1322 = vunpack.c.l.b16 %v1066
          %v1323 = vunpack.c.l.b16 %v1067
          %v1324 = vunpack.c.l.b16 %v1068
          %v1325 = vunpack.c.l.b16 %v1069
          %v1326 = vunpack.c.l.b16 %v1070
          %v1327 = vunpack.c.l.b16 %v1071
          %v1328 = vunpack.c.l.b16 %v1072
          %v1329 = vunpack.c.l.b16 %v1073
          %v1330 = vunpack.c.l.b16 %v1074
          %v1331 = vunpack.c.l.b16 %v1075
          %v1332 = vunpack.c.l.b16 %v1076
          %v1333 = vunpack.c.l.b16 %v1077
          %v1334 = vunpack.c.l.b16 %v1078
          %v1335 = vunpack.c.l.b16 %v1079
          %v1336 = vunpack.c.l.b16 %v1080
          %v1337 = vunpack.c.l.b16 %v1081
          %v1338 = vunpack.c.l.b16 %v1082
          %v1339 = vunpack.c.l.b16 %v1083
          %v1340 = vunpack.c.l.b16 %v1084
          %v1341 = vunpack.c.l.b16 %v1085
          %v1342 = vunpack.c.l.b16 %v1086
          %v1343 = vunpack.c.l.b16 %v1087
          %v1344 = vunpack.c.l.b16 %v1088
          %v1345 = vunpack.c.l.b16 %v1089
          %v1346 = vunpack.c.l.b16 %v1090
          %v1347 = vunpack.c.l.b16 %v1091
          %v1348 = vunpack.c.l.b16 %v1092
          %v1349 = vunpack.c.l.b16 %v1093
          %v1350 = vunpack.c.l.b16 %v1094
          %v1351 = vunpack.c.l.b16 %v1095
          %v1352 = vunpack.c.l.b16 %v1096
          %v1353 = vunpack.c.l.b16 %v1097
          %v1354 = vunpack.c.l.b16 %v1098
          %v1355 = vunpack.c.l.b16 %v1099
          %v1356 = vunpack.c.l.b16 %v1100
          %v1357 = vunpack.c.l.b16 %v1101
          %v1358 = vunpack.c.l.b16 %v1102
          %v1359 = vunpack.c.l.b16 %v1103
          %v1360 = vunpack.c.l.b16 %v1104
          %v1361 = vunpack.c.l.b16 %v1105
          %v1362 = vunpack.c.l.b16 %v1106
          %v1363 = vunpack.c.l.b16 %v1107
          %v1364 = vunpack.c.l.b16 %v1108
          %v1365 = vunpack.c.l.b16 %v1109
          %v1366 = vunpack.c.l.b16 %v1110
          %v1367 = vunpack.c.l.b16 %v1111
          %v1368 = vunpack.c.l.b16 %v1112
          %v1369 = vunpack.c.l.b16 %v1113
          %v1370 = vunpack.c.l.b16 %v1114
          %v1371 = vunpack.c.l.b16 %v1115
          %v1372 = vunpack.c.l.b16 %v1116
          %v1373 = vunpack.c.l.b16 %v1117
          %v1374 = vunpack.c.l.b16 %v1118
          %v1375 = vunpack.c.l.b16 %v1119
          %v1376 = vpack.c.b16 %v1249, %v1248
          %v1377 = vpack.c.b16 %v1251, %v1250
          %v1378 = vpack.c.b16 %v1253, %v1252
          %v1379 = vpack.c.b16 %v1255, %v1254
          %v1380 = vpack.c.b16 %v1257, %v1256
          %v1381 = vpack.c.b16 %v1259, %v1258
          %v1382 = vpack.c.b16 %v1261, %v1260
          %v1383 = vpack.c.b16 %v1263, %v1262
          %v1384 = vpack.c.b16 %v1265, %v1264
          %v1385 = vpack.c.b16 %v1267, %v1266
          %v1386 = vpack.c.b16 %v1269, %v1268
          %v1387 = vpack.c.b16 %v1271, %v1270
          %v1388 = vpack.c.b16 %v1273, %v1272
          %v1389 = vpack.c.b16 %v1275, %v1274
          %v1390 = vpack.c.b16 %v1277, %v1276
          %v1391 = vpack.c.b16 %v1279, %v1278
          %v1392 = vpack.c.b16 %v1281, %v1280
          %v1393 = vpack.c.b16 %v1283, %v1282
          %v1394 = vpack.c.b16 %v1285, %v1284
          %v1395 = vpack.c.b16 %v1287, %v1286
          %v1396 = vpack.c.b16 %v1289, %v1288
          %v1397 = vpack.c.b16 %v1291, %v1290
          %v1398 = vpack.c.b16 %v1293, %v1292
          %v1399 = vpack.c.b16 %v1295, %v1294
          %v1400 = vpack.c.b16 %v1297, %v1296
          %v1401 = vpack.c.b16 %v1299, %v1298
          %v1402 = vpack.c.b16 %v1301, %v1300
          %v1403 = vpack.c.b16 %v1303, %v1302
          %v1404 = vpack.c.b16 %v1305, %v1304
          %v1405 = vpack.c.b16 %v1307, %v1306
          %v1406 = vpack.c.b16 %v1309, %v1308
          %v1407 = vpack.c.b16 %v1311, %v1310
          %v1408 = vpack.c.b16 %v1313, %v1312
          %v1409 = vpack.c.b16 %v1315, %v1314
          %v1410 = vpack.c.b16 %v1317, %v1316
          %v1411 = vpack.c.b16 %v1319, %v1318
          %v1412 = vpack.c.b16 %v1321, %v1320
          %v1413 = vpack.c.b16 %v1323, %v1322
          %v1414 = vpack.c.b16 %v1325, %v1324
          %v1415 = vpack.c.b16 %v1327, %v1326
          %v1416 = vpack.c.b16 %v1329, %v1328
          %v1417 = vpack.c.b16 %v1331, %v1330
          %v1418 = vpack.c.b16 %v1333, %v1332
          %v1419 = vpack.c.b16 %v1335, %v1334
          %v1420 = vpack.c.b16 %v1337, %v1336
          %v1421 = vpack.c.b16 %v1339, %v1338
          %v1422 = vpack.c.b16 %v1341, %v1340
          %v1423 = vpack.c.b16 %v1343, %v1342
          %v1424 = vpack.c.b16 %v1345, %v1344
          %v1425 = vpack.c.b16 %v1347, %v1346
          %v1426 = vpack.c.b16 %v1349, %v1348
          %v1427 = vpack.c.b16 %v1351, %v1350
          %v1428 = vpack.c.b16 %v1353, %v1352
          %v1429 = vpack.c.b16 %v1355, %v1354
          %v1430 = vpack.c.b16 %v1357, %v1356
          %v1431 = vpack.c.b16 %v1359, %v1358
          %v1432 = vpack.c.b16 %v1361, %v1360
          %v1433 = vpack.c.b16 %v1363, %v1362
          %v1434 = vpack.c.b16 %v1365, %v1364
          %v1435 = vpack.c.b16 %v1367, %v1366
          %v1436 = vpack.c.b16 %v1369, %v1368
          %v1437 = vpack.c.b16 %v1371, %v1370
          %v1438 = vpack.c.b16 %v1373, %v1372
          %v1439 = vpack.c.b16 %v1375, %v1374
          %1504 = vmatprep.subr.bf16.mxu0 0
          %1505 = vmatpush1.bf16.msra.mxu0 %v1383
          %1506 = vmatprep.subr.bf16.mxu0 0
          %1507 = vmatpush1.bf16.msra.mxu0 %v1382
          %1508 = vmatprep.subr.bf16.mxu0 0
          %1509 = vmatpush1.bf16.msra.mxu0 %v1381
          %1510 = vmatprep.subr.bf16.mxu0 0
          %1511 = vmatpush1.bf16.msra.mxu0 %v1380
          %1512 = vmatprep.subr.bf16.mxu0 0
          %1513 = vmatpush1.bf16.msra.mxu0 %v1379
          %1514 = vmatprep.subr.bf16.mxu0 0
          %1515 = vmatpush1.bf16.msra.mxu0 %v1378
          %1516 = vmatprep.subr.bf16.mxu0 0
          %1517 = vmatpush1.bf16.msra.mxu0 %v1377
          %1518 = vmatprep.subr.bf16.mxu0 0
          %1519 = vmatpush1.bf16.msra.mxu0 %v1376
          %1520 = vmatprep.subr.bf16.mxu0 0
          %1521 = vmatpush2.bf16.msra.mxu0 %v1391
          %1522 = vmatprep.subr.bf16.mxu0 0
          %1523 = vmatpush2.bf16.msra.mxu0 %v1390
          %1524 = vmatprep.subr.bf16.mxu0 0
          %1525 = vmatpush2.bf16.msra.mxu0 %v1389
          %1526 = vmatprep.subr.bf16.mxu0 0
          %1527 = vmatpush2.bf16.msra.mxu0 %v1388
          %1528 = vmatprep.subr.bf16.mxu0 0
          %1529 = vmatpush2.bf16.msra.mxu0 %v1387
          %1530 = vmatprep.subr.bf16.mxu0 0
          %1531 = vmatpush2.bf16.msra.mxu0 %v1386
          %1532 = vmatprep.subr.bf16.mxu0 0
          %1533 = vmatpush2.bf16.msra.mxu0 %v1385
          %1534 = vmatprep.subr.bf16.mxu0 0
          %1535 = vmatpush2.bf16.msra.mxu0 %v1384
          %1536 = vmatprep.mubr.bf16.mxu0 %v961
          %1537 = vmatmul.mubr.bf16.gmra.mxu0 %v960
          %v1538 = vpop.f32.mrf.mxu0
          %v1539 = vadd.f32 0.0, %v1538
          %v1540 = vpop.f32.mrf.mxu0
          %v1541 = vpop.f32.mrf.mxu0
          %v1542 = vadd.f32 0.0, %v1541
          %v1543 = vpop.f32.mrf.mxu0
          %1544 = vmatprep.mubr.bf16.mxu0 %v969
          %1545 = vmatmul.mubr.bf16.gmra.mxu0 %v968
          %v1546 = vpop.f32.mrf.mxu0
          %v1547 = vadd.f32 0.0, %v1546
          %v1548 = vpop.f32.mrf.mxu0
          %v1549 = vpop.f32.mrf.mxu0
          %v1550 = vadd.f32 0.0, %v1549
          %v1551 = vpop.f32.mrf.mxu0
          %1552 = vmatprep.mubr.bf16.mxu0 %v977
          %1553 = vmatmul.mubr.bf16.gmra.mxu0 %v976
          %v1554 = vpop.f32.mrf.mxu0
          %v1555 = vadd.f32 0.0, %v1554
          %v1556 = vpop.f32.mrf.mxu0
          %v1557 = vpop.f32.mrf.mxu0
          %v1558 = vadd.f32 0.0, %v1557
          %v1559 = vpop.f32.mrf.mxu0
          %1560 = vmatprep.mubr.bf16.mxu0 %v985
          %1561 = vmatmul.mubr.bf16.gmra.mxu0 %v984
          %v1562 = vpop.f32.mrf.mxu0
          %v1563 = vadd.f32 0.0, %v1562
          %v1564 = vpop.f32.mrf.mxu0
          %v1565 = vpop.f32.mrf.mxu0
          %v1566 = vadd.f32 0.0, %v1565
          %v1567 = vpop.f32.mrf.mxu0
          %1568 = vdwg.mxu0
          %1569 = vmatprep.subr.bf16.mxu0 0
          %1570 = vmatpush1.bf16.msra.mxu0 %v1399
          %1571 = vmatprep.subr.bf16.mxu0 0
          %1572 = vmatpush1.bf16.msra.mxu0 %v1398
          %1573 = vmatprep.subr.bf16.mxu0 0
          %1574 = vmatpush1.bf16.msra.mxu0 %v1397
          %1575 = vmatprep.subr.bf16.mxu0 0
          %1576 = vmatpush1.bf16.msra.mxu0 %v1396
          %1577 = vmatprep.subr.bf16.mxu0 0
          %1578 = vmatpush1.bf16.msra.mxu0 %v1395
          %1579 = vmatprep.subr.bf16.mxu0 0
          %1580 = vmatpush1.bf16.msra.mxu0 %v1394
          %1581 = vmatprep.subr.bf16.mxu0 0
          %1582 = vmatpush1.bf16.msra.mxu0 %v1393
          %1583 = vmatprep.subr.bf16.mxu0 0
          %1584 = vmatpush1.bf16.msra.mxu0 %v1392
          %1585 = vmatprep.subr.bf16.mxu0 0
          %1586 = vmatpush2.bf16.msra.mxu0 %v1407
          %1587 = vmatprep.subr.bf16.mxu0 0
          %1588 = vmatpush2.bf16.msra.mxu0 %v1406
          %1589 = vmatprep.subr.bf16.mxu0 0
          %1590 = vmatpush2.bf16.msra.mxu0 %v1405
          %1591 = vmatprep.subr.bf16.mxu0 0
          %1592 = vmatpush2.bf16.msra.mxu0 %v1404
          %1593 = vmatprep.subr.bf16.mxu0 0
          %1594 = vmatpush2.bf16.msra.mxu0 %v1403
          %1595 = vmatprep.subr.bf16.mxu0 0
          %1596 = vmatpush2.bf16.msra.mxu0 %v1402
          %1597 = vmatprep.subr.bf16.mxu0 0
          %1598 = vmatpush2.bf16.msra.mxu0 %v1401
          %1599 = vmatprep.subr.bf16.mxu0 0
          %1600 = vmatpush2.bf16.msra.mxu0 %v1400
          %1601 = vmatprep.mubr.bf16.mxu0 %v963
          %1602 = vmatmul.mubr.bf16.gmra.mxu0 %v962
          %v1603 = vpop.f32.mrf.mxu0
          %v1604 = vadd.f32 %v1539, %v1603
          %v1605 = vpop.f32.mrf.mxu0
          %v1606 = vpop.f32.mrf.mxu0
          %v1607 = vadd.f32 %v1542, %v1606
          %v1608 = vpop.f32.mrf.mxu0
          %1609 = vmatprep.mubr.bf16.mxu0 %v971
          %1610 = vmatmul.mubr.bf16.gmra.mxu0 %v970
          %v1611 = vpop.f32.mrf.mxu0
          %v1612 = vadd.f32 %v1547, %v1611
          %v1613 = vpop.f32.mrf.mxu0
          %v1614 = vpop.f32.mrf.mxu0
          %v1615 = vadd.f32 %v1550, %v1614
          %v1616 = vpop.f32.mrf.mxu0
          %1617 = vmatprep.mubr.bf16.mxu0 %v979
          %1618 = vmatmul.mubr.bf16.gmra.mxu0 %v978
          %v1619 = vpop.f32.mrf.mxu0
          %v1620 = vadd.f32 %v1555, %v1619
          %v1621 = vpop.f32.mrf.mxu0
          %v1622 = vpop.f32.mrf.mxu0
          %v1623 = vadd.f32 %v1558, %v1622
          %v1624 = vpop.f32.mrf.mxu0
          %1625 = vmatprep.mubr.bf16.mxu0 %v987
          %1626 = vmatmul.mubr.bf16.gmra.mxu0 %v986
          %v1627 = vpop.f32.mrf.mxu0
          %v1628 = vadd.f32 %v1563, %v1627
          %v1629 = vpop.f32.mrf.mxu0
          %v1630 = vpop.f32.mrf.mxu0
          %v1631 = vadd.f32 %v1566, %v1630
          %v1632 = vpop.f32.mrf.mxu0
          %1633 = vdwg.mxu0
          %1634 = vmatprep.subr.bf16.mxu0 0
          %1635 = vmatpush1.bf16.msra.mxu0 %v1415
          %1636 = vmatprep.subr.bf16.mxu0 0
          %1637 = vmatpush1.bf16.msra.mxu0 %v1414
          %1638 = vmatprep.subr.bf16.mxu0 0
          %1639 = vmatpush1.bf16.msra.mxu0 %v1413
          %1640 = vmatprep.subr.bf16.mxu0 0
          %1641 = vmatpush1.bf16.msra.mxu0 %v1412
          %1642 = vmatprep.subr.bf16.mxu0 0
          %1643 = vmatpush1.bf16.msra.mxu0 %v1411
          %1644 = vmatprep.subr.bf16.mxu0 0
          %1645 = vmatpush1.bf16.msra.mxu0 %v1410
          %1646 = vmatprep.subr.bf16.mxu0 0
          %1647 = vmatpush1.bf16.msra.mxu0 %v1409
          %1648 = vmatprep.subr.bf16.mxu0 0
          %1649 = vmatpush1.bf16.msra.mxu0 %v1408
          %1650 = vmatprep.subr.bf16.mxu0 0
          %1651 = vmatpush2.bf16.msra.mxu0 %v1423
          %1652 = vmatprep.subr.bf16.mxu0 0
          %1653 = vmatpush2.bf16.msra.mxu0 %v1422
          %1654 = vmatprep.subr.bf16.mxu0 0
          %1655 = vmatpush2.bf16.msra.mxu0 %v1421
          %1656 = vmatprep.subr.bf16.mxu0 0
          %1657 = vmatpush2.bf16.msra.mxu0 %v1420
          %1658 = vmatprep.subr.bf16.mxu0 0
          %1659 = vmatpush2.bf16.msra.mxu0 %v1419
          %1660 = vmatprep.subr.bf16.mxu0 0
          %1661 = vmatpush2.bf16.msra.mxu0 %v1418
          %1662 = vmatprep.subr.bf16.mxu0 0
          %1663 = vmatpush2.bf16.msra.mxu0 %v1417
          %1664 = vmatprep.subr.bf16.mxu0 0
          %1665 = vmatpush2.bf16.msra.mxu0 %v1416
          %1666 = vmatprep.mubr.bf16.mxu0 %v965
          %1667 = vmatmul.mubr.bf16.gmra.mxu0 %v964
          %v1668 = vpop.f32.mrf.mxu0
          %v1669 = vadd.f32 %v1604, %v1668
          %v1670 = vpop.f32.mrf.mxu0
          %v1671 = vpop.f32.mrf.mxu0
          %v1672 = vadd.f32 %v1607, %v1671
          %v1673 = vpop.f32.mrf.mxu0
          %1674 = vmatprep.mubr.bf16.mxu0 %v973
          %1675 = vmatmul.mubr.bf16.gmra.mxu0 %v972
          %v1676 = vpop.f32.mrf.mxu0
          %v1677 = vadd.f32 %v1612, %v1676
          %v1678 = vpop.f32.mrf.mxu0
          %v1679 = vpop.f32.mrf.mxu0
          %v1680 = vadd.f32 %v1615, %v1679
          %v1681 = vpop.f32.mrf.mxu0
          %1682 = vmatprep.mubr.bf16.mxu0 %v981
          %1683 = vmatmul.mubr.bf16.gmra.mxu0 %v980
          %v1684 = vpop.f32.mrf.mxu0
          %v1685 = vadd.f32 %v1620, %v1684
          %v1686 = vpop.f32.mrf.mxu0
          %v1687 = vpop.f32.mrf.mxu0
          %v1688 = vadd.f32 %v1623, %v1687
          %v1689 = vpop.f32.mrf.mxu0
          %1690 = vmatprep.mubr.bf16.mxu0 %v989
          %1691 = vmatmul.mubr.bf16.gmra.mxu0 %v988
          %v1692 = vpop.f32.mrf.mxu0
          %v1693 = vadd.f32 %v1628, %v1692
          %v1694 = vpop.f32.mrf.mxu0
          %v1695 = vpop.f32.mrf.mxu0
          %v1696 = vadd.f32 %v1631, %v1695
          %v1697 = vpop.f32.mrf.mxu0
          %1698 = vdwg.mxu0
          %1699 = vmatprep.subr.bf16.mxu0 0
          %1700 = vmatpush1.bf16.msra.mxu0 %v1431
          %1701 = vmatprep.subr.bf16.mxu0 0
          %1702 = vmatpush1.bf16.msra.mxu0 %v1430
          %1703 = vmatprep.subr.bf16.mxu0 0
          %1704 = vmatpush1.bf16.msra.mxu0 %v1429
          %1705 = vmatprep.subr.bf16.mxu0 0
          %1706 = vmatpush1.bf16.msra.mxu0 %v1428
          %1707 = vmatprep.subr.bf16.mxu0 0
          %1708 = vmatpush1.bf16.msra.mxu0 %v1427
          %1709 = vmatprep.subr.bf16.mxu0 0
          %1710 = vmatpush1.bf16.msra.mxu0 %v1426
          %1711 = vmatprep.subr.bf16.mxu0 0
          %1712 = vmatpush1.bf16.msra.mxu0 %v1425
          %1713 = vmatprep.subr.bf16.mxu0 0
          %1714 = vmatpush1.bf16.msra.mxu0 %v1424
          %1715 = vmatprep.subr.bf16.mxu0 0
          %1716 = vmatpush2.bf16.msra.mxu0 %v1439
          %1717 = vmatprep.subr.bf16.mxu0 0
          %1718 = vmatpush2.bf16.msra.mxu0 %v1438
          %1719 = vmatprep.subr.bf16.mxu0 0
          %1720 = vmatpush2.bf16.msra.mxu0 %v1437
          %1721 = vmatprep.subr.bf16.mxu0 0
          %1722 = vmatpush2.bf16.msra.mxu0 %v1436
          %1723 = vmatprep.subr.bf16.mxu0 0
          %1724 = vmatpush2.bf16.msra.mxu0 %v1435
          %1725 = vmatprep.subr.bf16.mxu0 0
          %1726 = vmatpush2.bf16.msra.mxu0 %v1434
          %1727 = vmatprep.subr.bf16.mxu0 0
          %1728 = vmatpush2.bf16.msra.mxu0 %v1433
          %1729 = vmatprep.subr.bf16.mxu0 0
          %1730 = vmatpush2.bf16.msra.mxu0 %v1432
          %1731 = vmatprep.mubr.bf16.mxu0 %v967
          %1732 = vmatmul.mubr.bf16.gmra.mxu0 %v966
          %v1733 = vpop.f32.mrf.mxu0
          %v1734 = vadd.f32 %v1669, %v1733
          %v1735 = vpop.f32.mrf.mxu0
          %v1736 = vpop.f32.mrf.mxu0
          %v1737 = vadd.f32 %v1672, %v1736
          %v1738 = vpop.f32.mrf.mxu0
          %1739 = vmatprep.mubr.bf16.mxu0 %v975
          %1740 = vmatmul.mubr.bf16.gmra.mxu0 %v974
          %v1741 = vpop.f32.mrf.mxu0
          %v1742 = vadd.f32 %v1677, %v1741
          %v1743 = vpop.f32.mrf.mxu0
          %v1744 = vpop.f32.mrf.mxu0
          %v1745 = vadd.f32 %v1680, %v1744
          %v1746 = vpop.f32.mrf.mxu0
          %1747 = vmatprep.mubr.bf16.mxu0 %v983
          %1748 = vmatmul.mubr.bf16.gmra.mxu0 %v982
          %v1749 = vpop.f32.mrf.mxu0
          %v1750 = vadd.f32 %v1685, %v1749
          %v1751 = vpop.f32.mrf.mxu0
          %v1752 = vpop.f32.mrf.mxu0
          %v1753 = vadd.f32 %v1688, %v1752
          %v1754 = vpop.f32.mrf.mxu0
          %1755 = vmatprep.mubr.bf16.mxu0 %v991
          %1756 = vmatmul.mubr.bf16.gmra.mxu0 %v990
          %v1757 = vpop.f32.mrf.mxu0
          %v1758 = vadd.f32 %v1693, %v1757
          %v1759 = vpop.f32.mrf.mxu0
          %v1760 = vpop.f32.mrf.mxu0
          %v1761 = vadd.f32 %v1696, %v1760
          %v1762 = vpop.f32.mrf.mxu0
          %1763 = vdwg.mxu0
          %v1764 = vadd.f32 %v952, %v1734
          %v1765 = vadd.f32 %v953, %v1737
          %v1766 = vadd.f32 %v954, %v1742
          %v1767 = vadd.f32 %v955, %v1745
          %v1768 = vadd.f32 %v956, %v1750
          %v1769 = vadd.f32 %v957, %v1753
          %v1770 = vadd.f32 %v958, %v1758
          %v1771 = vadd.f32 %v959, %v1761
          %1772 = vst [vmem:[#allocation2] sm:$0xff] %v1764
          %1773 = vst [vmem:[#allocation2 + $0x8] sm:$0xff] %v1765
          %1774 = vst [vmem:[#allocation2 + $0x10] sm:$0xff] %v1766
          %1775 = vst [vmem:[#allocation2 + $0x18] sm:$0xff] %v1767
          %1776 = vst [vmem:[#allocation2 + $0x20] sm:$0xff] %v1768
          %1777 = vst [vmem:[#allocation2 + $0x28] sm:$0xff] %v1769
          %1778 = vst [vmem:[#allocation2 + $0x30] sm:$0xff] %v1770
          %1779 = vst [vmem:[#allocation2 + $0x38] sm:$0xff] %v1771
        $region106: #{dae_forward.1} parent=93 // pred_fallthru
          _
        %p1780 = scmp.eq.s32.totalorder %s31, 1
        // Predicated region
        $region111: #{dae_forward.1} parent=93 // pred_check
          %p1781 = pneg %p1780
        $region112: #{dae_forward.1} parent=93 // pred_check_branch
          %1783 = sbr.rel (%p1781) target = $region114
        $region113: #{dae_forward.1} parent=93 // pred_region
          %p1784 = scmp.eq.s32.totalorder %s32, 0
          // Predicated region
          $region115: #{dae_forward.1} parent=113 // pred_check
            %p1785 = pneg %p1784
          $region116: #{dae_forward.1} parent=113 // pred_check_branch
            %1787 = sbr.rel (%p1785) target = $region118
          $region117: #{dae_forward.1} parent=113 // pred_region
            %v1788 = vld [vmem:[#allocation2] sm:$0xff]
            %v1789 = vld [vmem:[#allocation2 + $0x8] sm:$0xff]
            %v1790 = vld [vmem:[#allocation2 + $0x10] sm:$0xff]
            %v1791 = vld [vmem:[#allocation2 + $0x18] sm:$0xff]
            %v1792 = vld [vmem:[#allocation2 + $0x20] sm:$0xff]
            %v1793 = vld [vmem:[#allocation2 + $0x28] sm:$0xff]
            %v1794 = vld [vmem:[#allocation2 + $0x30] sm:$0xff]
            %v1795 = vld [vmem:[#allocation2 + $0x38] sm:$0xff]
            %v1796 = vld [vmem:[%s2] sm:$0x1]
            %v1798 = vlaneseq
            %v1799 = vshrl.u32 %v1798, 7
            %v1800 = vsub.s32 0, %v1799
            %v1801 = vrot.slane %v1796, %v1800
            %v1803 = vadd.f32 %v1788, %v1801
            %v1804 = vadd.f32 %v1789, %v1801
            %v1805 = vadd.f32 %v1790, %v1801
            %v1806 = vadd.f32 %v1791, %v1801
            %v1807 = vadd.f32 %v1792, %v1801
            %v1808 = vadd.f32 %v1793, %v1801
            %v1809 = vadd.f32 %v1794, %v1801
            %v1810 = vadd.f32 %v1795, %v1801
            %v1811 = vmax.f32 %v1803, 0.0
            %v1812 = vmax.f32 %v1804, 0.0
            %v1813 = vmax.f32 %v1805, 0.0
            %v1814 = vmax.f32 %v1806, 0.0
            %v1815 = vmax.f32 %v1807, 0.0
            %v1816 = vmax.f32 %v1808, 0.0
            %v1817 = vmax.f32 %v1809, 0.0
            %v1818 = vmax.f32 %v1810, 0.0
            %v1819 = vpack.c.bf16 %v1812, %v1811
            %v1820 = vpack.c.bf16 %v1814, %v1813
            %v1821 = vpack.c.bf16 %v1816, %v1815
            %v1822 = vpack.c.bf16 %v1818, %v1817
            %v1823 = vld [vmem:[%s3] sm:$0xff]
            %v1824 = vld [vmem:[%s3 + $0x8] sm:$0xff]
            %v1825 = vld [vmem:[%s3 + $0x10] sm:$0xff]
            %v1826 = vld [vmem:[%s3 + $0x18] sm:$0xff]
            %v1827 = vld [vmem:[%s3 + $0x20] sm:$0xff]
            %v1828 = vld [vmem:[%s3 + $0x28] sm:$0xff]
            %v1829 = vld [vmem:[%s3 + $0x30] sm:$0xff]
            %v1830 = vld [vmem:[%s3 + $0x38] sm:$0xff]
            %v1831 = vld [vmem:[%s3 + $0x40] sm:$0xff]
            %v1832 = vld [vmem:[%s3 + $0x48] sm:$0xff]
            %v1833 = vld [vmem:[%s3 + $0x50] sm:$0xff]
            %v1834 = vld [vmem:[%s3 + $0x58] sm:$0xff]
            %v1835 = vld [vmem:[%s3 + $0x60] sm:$0xff]
            %v1836 = vld [vmem:[%s3 + $0x68] sm:$0xff]
            %v1837 = vld [vmem:[%s3 + $0x70] sm:$0xff]
            %v1838 = vld [vmem:[%s3 + $0x78] sm:$0xff]
            %v1839 = vld [vmem:[%s3 + $0x80] sm:$0xff]
            %v1840 = vld [vmem:[%s3 + $0x88] sm:$0xff]
            %v1841 = vld [vmem:[%s3 + $0x90] sm:$0xff]
            %v1842 = vld [vmem:[%s3 + $0x98] sm:$0xff]
            %v1843 = vld [vmem:[%s3 + $0xa0] sm:$0xff]
            %v1844 = vld [vmem:[%s3 + $0xa8] sm:$0xff]
            %v1845 = vld [vmem:[%s3 + $0xb0] sm:$0xff]
            %v1846 = vld [vmem:[%s3 + $0xb8] sm:$0xff]
            %v1847 = vld [vmem:[%s3 + $0xc0] sm:$0xff]
            %v1848 = vld [vmem:[%s3 + $0xc8] sm:$0xff]
            %v1849 = vld [vmem:[%s3 + $0xd0] sm:$0xff]
            %v1850 = vld [vmem:[%s3 + $0xd8] sm:$0xff]
            %v1851 = vld [vmem:[%s3 + $0xe0] sm:$0xff]
            %v1852 = vld [vmem:[%s3 + $0xe8] sm:$0xff]
            %v1853 = vld [vmem:[%s3 + $0xf0] sm:$0xff]
            %v1854 = vld [vmem:[%s3 + $0xf8] sm:$0xff]
            %v1855 = vld [vmem:[%s3 + $0x100] sm:$0xff]
            %v1856 = vld [vmem:[%s3 + $0x108] sm:$0xff]
            %v1857 = vld [vmem:[%s3 + $0x110] sm:$0xff]
            %v1858 = vld [vmem:[%s3 + $0x118] sm:$0xff]
            %v1859 = vld [vmem:[%s3 + $0x120] sm:$0xff]
            %v1860 = vld [vmem:[%s3 + $0x128] sm:$0xff]
            %v1861 = vld [vmem:[%s3 + $0x130] sm:$0xff]
            %v1862 = vld [vmem:[%s3 + $0x138] sm:$0xff]
            %v1863 = vld [vmem:[%s3 + $0x140] sm:$0xff]
            %v1864 = vld [vmem:[%s3 + $0x148] sm:$0xff]
            %v1865 = vld [vmem:[%s3 + $0x150] sm:$0xff]
            %v1866 = vld [vmem:[%s3 + $0x158] sm:$0xff]
            %v1867 = vld [vmem:[%s3 + $0x160] sm:$0xff]
            %v1868 = vld [vmem:[%s3 + $0x168] sm:$0xff]
            %v1869 = vld [vmem:[%s3 + $0x170] sm:$0xff]
            %v1870 = vld [vmem:[%s3 + $0x178] sm:$0xff]
            %v1871 = vld [vmem:[%s3 + $0x180] sm:$0xff]
            %v1872 = vld [vmem:[%s3 + $0x188] sm:$0xff]
            %v1873 = vld [vmem:[%s3 + $0x190] sm:$0xff]
            %v1874 = vld [vmem:[%s3 + $0x198] sm:$0xff]
            %v1875 = vld [vmem:[%s3 + $0x1a0] sm:$0xff]
            %v1876 = vld [vmem:[%s3 + $0x1a8] sm:$0xff]
            %v1877 = vld [vmem:[%s3 + $0x1b0] sm:$0xff]
            %v1878 = vld [vmem:[%s3 + $0x1b8] sm:$0xff]
            %v1879 = vld [vmem:[%s3 + $0x1c0] sm:$0xff]
            %v1880 = vld [vmem:[%s3 + $0x1c8] sm:$0xff]
            %v1881 = vld [vmem:[%s3 + $0x1d0] sm:$0xff]
            %v1882 = vld [vmem:[%s3 + $0x1d8] sm:$0xff]
            %v1883 = vld [vmem:[%s3 + $0x1e0] sm:$0xff]
            %v1884 = vld [vmem:[%s3 + $0x1e8] sm:$0xff]
            %v1885 = vld [vmem:[%s3 + $0x1f0] sm:$0xff]
            %v1886 = vld [vmem:[%s3 + $0x1f8] sm:$0xff]
            %v1887 = vld [vmem:[%s4] sm:$0xff]
            %v1889 = vlaneseq
            %v1890 = vshrl.u32 %v1889, 7
            %v1891 = vsub.s32 0, %v1890
            %v1892 = vrot.slane %v1887, %v1891
            %v1893 = vlaneseq
            %v1894 = vshrl.u32 %v1893, 7
            %v1895 = vsub.s32 1, %v1894
            %v1896 = vrot.slane %v1887, %v1895
            %v1897 = vlaneseq
            %v1898 = vshrl.u32 %v1897, 7
            %v1899 = vsub.s32 2, %v1898
            %v1900 = vrot.slane %v1887, %v1899
            %v1901 = vlaneseq
            %v1902 = vshrl.u32 %v1901, 7
            %v1903 = vsub.s32 3, %v1902
            %v1904 = vrot.slane %v1887, %v1903
            %v1905 = vlaneseq
            %v1906 = vshrl.u32 %v1905, 7
            %v1907 = vsub.s32 4, %v1906
            %v1908 = vrot.slane %v1887, %v1907
            %v1909 = vlaneseq
            %v1910 = vshrl.u32 %v1909, 7
            %v1911 = vsub.s32 5, %v1910
            %v1912 = vrot.slane %v1887, %v1911
            %v1913 = vlaneseq
            %v1914 = vshrl.u32 %v1913, 7
            %v1915 = vsub.s32 6, %v1914
            %v1916 = vrot.slane %v1887, %v1915
            %v1917 = vlaneseq
            %v1918 = vshrl.u32 %v1917, 7
            %v1919 = vsub.s32 7, %v1918
            %v1920 = vrot.slane %v1887, %v1919
            %v1993 = vunpack.c.l.b16 %v1823
            %v1994 = vunpack.c.h.b16 %v1823
            %v1995 = vunpack.c.l.b16 %v1824
            %v1996 = vunpack.c.h.b16 %v1824
            %v1997 = vunpack.c.l.b16 %v1825
            %v1998 = vunpack.c.h.b16 %v1825
            %v1999 = vunpack.c.l.b16 %v1826
            %v2000 = vunpack.c.h.b16 %v1826
            %v2001 = vunpack.c.l.b16 %v1827
            %v2002 = vunpack.c.h.b16 %v1827
            %v2003 = vunpack.c.l.b16 %v1828
            %v2004 = vunpack.c.h.b16 %v1828
            %v2005 = vunpack.c.l.b16 %v1829
            %v2006 = vunpack.c.h.b16 %v1829
            %v2007 = vunpack.c.l.b16 %v1830
            %v2008 = vunpack.c.h.b16 %v1830
            %v2009 = vunpack.c.l.b16 %v1831
            %v2010 = vunpack.c.h.b16 %v1831
            %v2011 = vunpack.c.l.b16 %v1832
            %v2012 = vunpack.c.h.b16 %v1832
            %v2013 = vunpack.c.l.b16 %v1833
            %v2014 = vunpack.c.h.b16 %v1833
            %v2015 = vunpack.c.l.b16 %v1834
            %v2016 = vunpack.c.h.b16 %v1834
            %v2017 = vunpack.c.l.b16 %v1835
            %v2018 = vunpack.c.h.b16 %v1835
            %v2019 = vunpack.c.l.b16 %v1836
            %v2020 = vunpack.c.h.b16 %v1836
            %v2021 = vunpack.c.l.b16 %v1837
            %v2022 = vunpack.c.h.b16 %v1837
            %v2023 = vunpack.c.l.b16 %v1838
            %v2024 = vunpack.c.h.b16 %v1838
            %v2025 = vunpack.c.l.b16 %v1839
            %v2026 = vunpack.c.h.b16 %v1839
            %v2027 = vunpack.c.l.b16 %v1840
            %v2028 = vunpack.c.h.b16 %v1840
            %v2029 = vunpack.c.l.b16 %v1841
            %v2030 = vunpack.c.h.b16 %v1841
            %v2031 = vunpack.c.l.b16 %v1842
            %v2032 = vunpack.c.h.b16 %v1842
            %v2033 = vunpack.c.l.b16 %v1843
            %v2034 = vunpack.c.h.b16 %v1843
            %v2035 = vunpack.c.l.b16 %v1844
            %v2036 = vunpack.c.h.b16 %v1844
            %v2037 = vunpack.c.l.b16 %v1845
            %v2038 = vunpack.c.h.b16 %v1845
            %v2039 = vunpack.c.l.b16 %v1846
            %v2040 = vunpack.c.h.b16 %v1846
            %v2041 = vunpack.c.l.b16 %v1847
            %v2042 = vunpack.c.h.b16 %v1847
            %v2043 = vunpack.c.l.b16 %v1848
            %v2044 = vunpack.c.h.b16 %v1848
            %v2045 = vunpack.c.l.b16 %v1849
            %v2046 = vunpack.c.h.b16 %v1849
            %v2047 = vunpack.c.l.b16 %v1850
            %v2048 = vunpack.c.h.b16 %v1850
            %v2049 = vunpack.c.l.b16 %v1851
            %v2050 = vunpack.c.h.b16 %v1851
            %v2051 = vunpack.c.l.b16 %v1852
            %v2052 = vunpack.c.h.b16 %v1852
            %v2053 = vunpack.c.l.b16 %v1853
            %v2054 = vunpack.c.h.b16 %v1853
            %v2055 = vunpack.c.l.b16 %v1854
            %v2056 = vunpack.c.h.b16 %v1854
            %v2057 = vunpack.c.l.b16 %v1855
            %v2058 = vunpack.c.h.b16 %v1855
            %v2059 = vunpack.c.l.b16 %v1856
            %v2060 = vunpack.c.h.b16 %v1856
            %v2061 = vunpack.c.l.b16 %v1857
            %v2062 = vunpack.c.h.b16 %v1857
            %v2063 = vunpack.c.l.b16 %v1858
            %v2064 = vunpack.c.h.b16 %v1858
            %v2065 = vunpack.c.l.b16 %v1859
            %v2066 = vunpack.c.h.b16 %v1859
            %v2067 = vunpack.c.l.b16 %v1860
            %v2068 = vunpack.c.h.b16 %v1860
            %v2069 = vunpack.c.l.b16 %v1861
            %v2070 = vunpack.c.h.b16 %v1861
            %v2071 = vunpack.c.l.b16 %v1862
            %v2072 = vunpack.c.h.b16 %v1862
            %v2073 = vunpack.c.l.b16 %v1863
            %v2074 = vunpack.c.h.b16 %v1863
            %v2075 = vunpack.c.l.b16 %v1864
            %v2076 = vunpack.c.h.b16 %v1864
            %v2077 = vunpack.c.l.b16 %v1865
            %v2078 = vunpack.c.h.b16 %v1865
            %v2079 = vunpack.c.l.b16 %v1866
            %v2080 = vunpack.c.h.b16 %v1866
            %v2081 = vunpack.c.l.b16 %v1867
            %v2082 = vunpack.c.h.b16 %v1867
            %v2083 = vunpack.c.l.b16 %v1868
            %v2084 = vunpack.c.h.b16 %v1868
            %v2085 = vunpack.c.l.b16 %v1869
            %v2086 = vunpack.c.h.b16 %v1869
            %v2087 = vunpack.c.l.b16 %v1870
            %v2088 = vunpack.c.h.b16 %v1870
            %v2089 = vunpack.c.l.b16 %v1871
            %v2090 = vunpack.c.h.b16 %v1871
            %v2091 = vunpack.c.l.b16 %v1872
            %v2092 = vunpack.c.h.b16 %v1872
            %v2093 = vunpack.c.l.b16 %v1873
            %v2094 = vunpack.c.h.b16 %v1873
            %v2095 = vunpack.c.l.b16 %v1874
            %v2096 = vunpack.c.h.b16 %v1874
            %v2097 = vunpack.c.l.b16 %v1875
            %v2098 = vunpack.c.h.b16 %v1875
            %v2099 = vunpack.c.l.b16 %v1876
            %v2100 = vunpack.c.h.b16 %v1876
            %v2101 = vunpack.c.l.b16 %v1877
            %v2102 = vunpack.c.h.b16 %v1877
            %v2103 = vunpack.c.l.b16 %v1878
            %v2104 = vunpack.c.h.b16 %v1878
            %v2105 = vunpack.c.l.b16 %v1879
            %v2106 = vunpack.c.h.b16 %v1879
            %v2107 = vunpack.c.l.b16 %v1880
            %v2108 = vunpack.c.h.b16 %v1880
            %v2109 = vunpack.c.l.b16 %v1881
            %v2110 = vunpack.c.h.b16 %v1881
            %v2111 = vunpack.c.l.b16 %v1882
            %v2112 = vunpack.c.h.b16 %v1882
            %v2113 = vunpack.c.l.b16 %v1883
            %v2114 = vunpack.c.h.b16 %v1883
            %v2115 = vunpack.c.l.b16 %v1884
            %v2116 = vunpack.c.h.b16 %v1884
            %v2117 = vunpack.c.l.b16 %v1885
            %v2118 = vunpack.c.h.b16 %v1885
            %v2119 = vunpack.c.l.b16 %v1886
            %v2120 = vunpack.c.h.b16 %v1886
            %v2121 = vpack.c.b16 %v2001, %v1993
            %v2122 = vpack.c.b16 %v2002, %v1994
            %v2123 = vpack.c.b16 %v2003, %v1995
            %v2124 = vpack.c.b16 %v2004, %v1996
            %v2125 = vpack.c.b16 %v2005, %v1997
            %v2126 = vpack.c.b16 %v2006, %v1998
            %v2127 = vpack.c.b16 %v2007, %v1999
            %v2128 = vpack.c.b16 %v2008, %v2000
            %v2129 = vpack.c.b16 %v2017, %v2009
            %v2130 = vpack.c.b16 %v2018, %v2010
            %v2131 = vpack.c.b16 %v2019, %v2011
            %v2132 = vpack.c.b16 %v2020, %v2012
            %v2133 = vpack.c.b16 %v2021, %v2013
            %v2134 = vpack.c.b16 %v2022, %v2014
            %v2135 = vpack.c.b16 %v2023, %v2015
            %v2136 = vpack.c.b16 %v2024, %v2016
            %v2137 = vpack.c.b16 %v2033, %v2025
            %v2138 = vpack.c.b16 %v2034, %v2026
            %v2139 = vpack.c.b16 %v2035, %v2027
            %v2140 = vpack.c.b16 %v2036, %v2028
            %v2141 = vpack.c.b16 %v2037, %v2029
            %v2142 = vpack.c.b16 %v2038, %v2030
            %v2143 = vpack.c.b16 %v2039, %v2031
            %v2144 = vpack.c.b16 %v2040, %v2032
            %v2145 = vpack.c.b16 %v2049, %v2041
            %v2146 = vpack.c.b16 %v2050, %v2042
            %v2147 = vpack.c.b16 %v2051, %v2043
            %v2148 = vpack.c.b16 %v2052, %v2044
            %v2149 = vpack.c.b16 %v2053, %v2045
            %v2150 = vpack.c.b16 %v2054, %v2046
            %v2151 = vpack.c.b16 %v2055, %v2047
            %v2152 = vpack.c.b16 %v2056, %v2048
            %v2153 = vpack.c.b16 %v2065, %v2057
            %v2154 = vpack.c.b16 %v2066, %v2058
            %v2155 = vpack.c.b16 %v2067, %v2059
            %v2156 = vpack.c.b16 %v2068, %v2060
            %v2157 = vpack.c.b16 %v2069, %v2061
            %v2158 = vpack.c.b16 %v2070, %v2062
            %v2159 = vpack.c.b16 %v2071, %v2063
            %v2160 = vpack.c.b16 %v2072, %v2064
            %v2161 = vpack.c.b16 %v2081, %v2073
            %v2162 = vpack.c.b16 %v2082, %v2074
            %v2163 = vpack.c.b16 %v2083, %v2075
            %v2164 = vpack.c.b16 %v2084, %v2076
            %v2165 = vpack.c.b16 %v2085, %v2077
            %v2166 = vpack.c.b16 %v2086, %v2078
            %v2167 = vpack.c.b16 %v2087, %v2079
            %v2168 = vpack.c.b16 %v2088, %v2080
            %v2169 = vpack.c.b16 %v2097, %v2089
            %v2170 = vpack.c.b16 %v2098, %v2090
            %v2171 = vpack.c.b16 %v2099, %v2091
            %v2172 = vpack.c.b16 %v2100, %v2092
            %v2173 = vpack.c.b16 %v2101, %v2093
            %v2174 = vpack.c.b16 %v2102, %v2094
            %v2175 = vpack.c.b16 %v2103, %v2095
            %v2176 = vpack.c.b16 %v2104, %v2096
            %v2177 = vpack.c.b16 %v2113, %v2105
            %v2178 = vpack.c.b16 %v2114, %v2106
            %v2179 = vpack.c.b16 %v2115, %v2107
            %v2180 = vpack.c.b16 %v2116, %v2108
            %v2181 = vpack.c.b16 %v2117, %v2109
            %v2182 = vpack.c.b16 %v2118, %v2110
            %v2183 = vpack.c.b16 %v2119, %v2111
            %v2184 = vpack.c.b16 %v2120, %v2112
            %2249 = vmatprep.subr.bf16.mxu0 %v2178
            %2250 = vmatpush1.bf16.msra.mxu0 %v2177
            %2251 = vmatprep.subr.bf16.mxu0 %v2170
            %2252 = vmatpush1.bf16.msra.mxu0 %v2169
            %2253 = vmatprep.subr.bf16.mxu0 %v2162
            %2254 = vmatpush1.bf16.msra.mxu0 %v2161
            %2255 = vmatprep.subr.bf16.mxu0 %v2154
            %2256 = vmatpush1.bf16.msra.mxu0 %v2153
            %2257 = vmatprep.subr.bf16.mxu0 %v2146
            %2258 = vmatpush1.bf16.msra.mxu0 %v2145
            %2259 = vmatprep.subr.bf16.mxu0 %v2138
            %2260 = vmatpush1.bf16.msra.mxu0 %v2137
            %2261 = vmatprep.subr.bf16.mxu0 %v2130
            %2262 = vmatpush1.bf16.msra.mxu0 %v2129
            %2263 = vmatprep.subr.bf16.mxu0 %v2122
            %2264 = vmatpush1.bf16.msra.mxu0 %v2121
            %2265 = vmatprep.subr.bf16.mxu0 0
            %2266 = vmatpush2.bf16.msra.mxu0 0
            %2267 = vmatprep.subr.bf16.mxu0 0
            %2268 = vmatpush2.bf16.msra.mxu0 0
            %2269 = vmatprep.subr.bf16.mxu0 0
            %2270 = vmatpush2.bf16.msra.mxu0 0
            %2271 = vmatprep.subr.bf16.mxu0 0
            %2272 = vmatpush2.bf16.msra.mxu0 0
            %2273 = vmatprep.subr.bf16.mxu0 0
            %2274 = vmatpush2.bf16.msra.mxu0 0
            %2275 = vmatprep.subr.bf16.mxu0 0
            %2276 = vmatpush2.bf16.msra.mxu0 0
            %2277 = vmatprep.subr.bf16.mxu0 0
            %2278 = vmatpush2.bf16.msra.mxu0 0
            %2279 = vmatprep.subr.bf16.mxu0 0
            %2280 = vmatpush2.bf16.msra.mxu0 0
            %2281 = vmatprep.mubr.bf16.mxu0 0
            %2282 = vmatmul.mubr.bf16.gmra.mxu0 %v1819
            %v2283 = vpop.f32.mrf.mxu0
            %v2284 = vadd.f32 %v1892, %v2283
            %v2285 = vpop.f32.mrf.mxu0
            %v2286 = vadd.f32 %v1896, %v2285
            %v2287 = vpop.f32.mrf.mxu0
            %v2288 = vadd.f32 %v1892, %v2287
            %v2289 = vpop.f32.mrf.mxu0
            %v2290 = vadd.f32 %v1896, %v2289
            %2291 = vmatprep.mubr.bf16.mxu0 0
            %2292 = vmatmul.mubr.bf16.gmra.mxu0 %v1820
            %v2293 = vpop.f32.mrf.mxu0
            %v2294 = vadd.f32 %v1892, %v2293
            %v2295 = vpop.f32.mrf.mxu0
            %v2296 = vadd.f32 %v1896, %v2295
            %v2297 = vpop.f32.mrf.mxu0
            %v2298 = vadd.f32 %v1892, %v2297
            %v2299 = vpop.f32.mrf.mxu0
            %v2300 = vadd.f32 %v1896, %v2299
            %2301 = vmatprep.mubr.bf16.mxu0 0
            %2302 = vmatmul.mubr.bf16.gmra.mxu0 %v1821
            %v2303 = vpop.f32.mrf.mxu0
            %v2304 = vadd.f32 %v1892, %v2303
            %v2305 = vpop.f32.mrf.mxu0
            %v2306 = vadd.f32 %v1896, %v2305
            %v2307 = vpop.f32.mrf.mxu0
            %v2308 = vadd.f32 %v1892, %v2307
            %v2309 = vpop.f32.mrf.mxu0
            %v2310 = vadd.f32 %v1896, %v2309
            %2311 = vmatprep.mubr.bf16.mxu0 0
            %2312 = vmatmul.mubr.bf16.gmra.mxu0 %v1822
            %v2313 = vpop.f32.mrf.mxu0
            %v2314 = vadd.f32 %v1892, %v2313
            %v2315 = vpop.f32.mrf.mxu0
            %v2316 = vadd.f32 %v1896, %v2315
            %v2317 = vpop.f32.mrf.mxu0
            %v2318 = vadd.f32 %v1892, %v2317
            %v2319 = vpop.f32.mrf.mxu0
            %v2320 = vadd.f32 %v1896, %v2319
            %2321 = vdwg.mxu0
            %2322 = vmatprep.subr.bf16.mxu0 %v2180
            %2323 = vmatpush1.bf16.msra.mxu0 %v2179
            %2324 = vmatprep.subr.bf16.mxu0 %v2172
            %2325 = vmatpush1.bf16.msra.mxu0 %v2171
            %2326 = vmatprep.subr.bf16.mxu0 %v2164
            %2327 = vmatpush1.bf16.msra.mxu0 %v2163
            %2328 = vmatprep.subr.bf16.mxu0 %v2156
            %2329 = vmatpush1.bf16.msra.mxu0 %v2155
            %2330 = vmatprep.subr.bf16.mxu0 %v2148
            %2331 = vmatpush1.bf16.msra.mxu0 %v2147
            %2332 = vmatprep.subr.bf16.mxu0 %v2140
            %2333 = vmatpush1.bf16.msra.mxu0 %v2139
            %2334 = vmatprep.subr.bf16.mxu0 %v2132
            %2335 = vmatpush1.bf16.msra.mxu0 %v2131
            %2336 = vmatprep.subr.bf16.mxu0 %v2124
            %2337 = vmatpush1.bf16.msra.mxu0 %v2123
            %2338 = vmatprep.subr.bf16.mxu0 0
            %2339 = vmatpush2.bf16.msra.mxu0 0
            %2340 = vmatprep.subr.bf16.mxu0 0
            %2341 = vmatpush2.bf16.msra.mxu0 0
            %2342 = vmatprep.subr.bf16.mxu0 0
            %2343 = vmatpush2.bf16.msra.mxu0 0
            %2344 = vmatprep.subr.bf16.mxu0 0
            %2345 = vmatpush2.bf16.msra.mxu0 0
            %2346 = vmatprep.subr.bf16.mxu0 0
            %2347 = vmatpush2.bf16.msra.mxu0 0
            %2348 = vmatprep.subr.bf16.mxu0 0
            %2349 = vmatpush2.bf16.msra.mxu0 0
            %2350 = vmatprep.subr.bf16.mxu0 0
            %2351 = vmatpush2.bf16.msra.mxu0 0
            %2352 = vmatprep.subr.bf16.mxu0 0
            %2353 = vmatpush2.bf16.msra.mxu0 0
            %2354 = vmatprep.mubr.bf16.mxu0 0
            %2355 = vmatmul.mubr.bf16.gmra.mxu0 %v1819
            %v2356 = vpop.f32.mrf.mxu0
            %v2357 = vadd.f32 %v1900, %v2356
            %v2358 = vpop.f32.mrf.mxu0
            %v2359 = vadd.f32 %v1904, %v2358
            %v2360 = vpop.f32.mrf.mxu0
            %v2361 = vadd.f32 %v1900, %v2360
            %v2362 = vpop.f32.mrf.mxu0
            %v2363 = vadd.f32 %v1904, %v2362
            %2364 = vmatprep.mubr.bf16.mxu0 0
            %2365 = vmatmul.mubr.bf16.gmra.mxu0 %v1820
            %v2366 = vpop.f32.mrf.mxu0
            %v2367 = vadd.f32 %v1900, %v2366
            %v2368 = vpop.f32.mrf.mxu0
            %v2369 = vadd.f32 %v1904, %v2368
            %v2370 = vpop.f32.mrf.mxu0
            %v2371 = vadd.f32 %v1900, %v2370
            %v2372 = vpop.f32.mrf.mxu0
            %v2373 = vadd.f32 %v1904, %v2372
            %2374 = vmatprep.mubr.bf16.mxu0 0
            %2375 = vmatmul.mubr.bf16.gmra.mxu0 %v1821
            %v2376 = vpop.f32.mrf.mxu0
            %v2377 = vadd.f32 %v1900, %v2376
            %v2378 = vpop.f32.mrf.mxu0
            %v2379 = vadd.f32 %v1904, %v2378
            %v2380 = vpop.f32.mrf.mxu0
            %v2381 = vadd.f32 %v1900, %v2380
            %v2382 = vpop.f32.mrf.mxu0
            %v2383 = vadd.f32 %v1904, %v2382
            %2384 = vmatprep.mubr.bf16.mxu0 0
            %2385 = vmatmul.mubr.bf16.gmra.mxu0 %v1822
            %v2386 = vpop.f32.mrf.mxu0
            %v2387 = vadd.f32 %v1900, %v2386
            %v2388 = vpop.f32.mrf.mxu0
            %v2389 = vadd.f32 %v1904, %v2388
            %v2390 = vpop.f32.mrf.mxu0
            %v2391 = vadd.f32 %v1900, %v2390
            %v2392 = vpop.f32.mrf.mxu0
            %v2393 = vadd.f32 %v1904, %v2392
            %2394 = vdwg.mxu0
            %2395 = vmatprep.subr.bf16.mxu0 %v2182
            %2396 = vmatpush1.bf16.msra.mxu0 %v2181
            %2397 = vmatprep.subr.bf16.mxu0 %v2174
            %2398 = vmatpush1.bf16.msra.mxu0 %v2173
            %2399 = vmatprep.subr.bf16.mxu0 %v2166
            %2400 = vmatpush1.bf16.msra.mxu0 %v2165
            %2401 = vmatprep.subr.bf16.mxu0 %v2158
            %2402 = vmatpush1.bf16.msra.mxu0 %v2157
            %2403 = vmatprep.subr.bf16.mxu0 %v2150
            %2404 = vmatpush1.bf16.msra.mxu0 %v2149
            %2405 = vmatprep.subr.bf16.mxu0 %v2142
            %2406 = vmatpush1.bf16.msra.mxu0 %v2141
            %2407 = vmatprep.subr.bf16.mxu0 %v2134
            %2408 = vmatpush1.bf16.msra.mxu0 %v2133
            %2409 = vmatprep.subr.bf16.mxu0 %v2126
            %2410 = vmatpush1.bf16.msra.mxu0 %v2125
            %2411 = vmatprep.subr.bf16.mxu0 0
            %2412 = vmatpush2.bf16.msra.mxu0 0
            %2413 = vmatprep.subr.bf16.mxu0 0
            %2414 = vmatpush2.bf16.msra.mxu0 0
            %2415 = vmatprep.subr.bf16.mxu0 0
            %2416 = vmatpush2.bf16.msra.mxu0 0
            %2417 = vmatprep.subr.bf16.mxu0 0
            %2418 = vmatpush2.bf16.msra.mxu0 0
            %2419 = vmatprep.subr.bf16.mxu0 0
            %2420 = vmatpush2.bf16.msra.mxu0 0
            %2421 = vmatprep.subr.bf16.mxu0 0
            %2422 = vmatpush2.bf16.msra.mxu0 0
            %2423 = vmatprep.subr.bf16.mxu0 0
            %2424 = vmatpush2.bf16.msra.mxu0 0
            %2425 = vmatprep.subr.bf16.mxu0 0
            %2426 = vmatpush2.bf16.msra.mxu0 0
            %2427 = vmatprep.mubr.bf16.mxu0 0
            %2428 = vmatmul.mubr.bf16.gmra.mxu0 %v1819
            %v2429 = vpop.f32.mrf.mxu0
            %v2430 = vadd.f32 %v1908, %v2429
            %v2431 = vpop.f32.mrf.mxu0
            %v2432 = vadd.f32 %v1912, %v2431
            %v2433 = vpop.f32.mrf.mxu0
            %v2434 = vadd.f32 %v1908, %v2433
            %v2435 = vpop.f32.mrf.mxu0
            %v2436 = vadd.f32 %v1912, %v2435
            %2437 = vmatprep.mubr.bf16.mxu0 0
            %2438 = vmatmul.mubr.bf16.gmra.mxu0 %v1820
            %v2439 = vpop.f32.mrf.mxu0
            %v2440 = vadd.f32 %v1908, %v2439
            %v2441 = vpop.f32.mrf.mxu0
            %v2442 = vadd.f32 %v1912, %v2441
            %v2443 = vpop.f32.mrf.mxu0
            %v2444 = vadd.f32 %v1908, %v2443
            %v2445 = vpop.f32.mrf.mxu0
            %v2446 = vadd.f32 %v1912, %v2445
            %2447 = vmatprep.mubr.bf16.mxu0 0
            %2448 = vmatmul.mubr.bf16.gmra.mxu0 %v1821
            %v2449 = vpop.f32.mrf.mxu0
            %v2450 = vadd.f32 %v1908, %v2449
            %v2451 = vpop.f32.mrf.mxu0
            %v2452 = vadd.f32 %v1912, %v2451
            %v2453 = vpop.f32.mrf.mxu0
            %v2454 = vadd.f32 %v1908, %v2453
            %v2455 = vpop.f32.mrf.mxu0
            %v2456 = vadd.f32 %v1912, %v2455
            %2457 = vmatprep.mubr.bf16.mxu0 0
            %2458 = vmatmul.mubr.bf16.gmra.mxu0 %v1822
            %v2459 = vpop.f32.mrf.mxu0
            %v2460 = vadd.f32 %v1908, %v2459
            %v2461 = vpop.f32.mrf.mxu0
            %v2462 = vadd.f32 %v1912, %v2461
            %v2463 = vpop.f32.mrf.mxu0
            %v2464 = vadd.f32 %v1908, %v2463
            %v2465 = vpop.f32.mrf.mxu0
            %v2466 = vadd.f32 %v1912, %v2465
            %2467 = vdwg.mxu0
            %2468 = vmatprep.subr.bf16.mxu0 %v2184
            %2469 = vmatpush1.bf16.msra.mxu0 %v2183
            %2470 = vmatprep.subr.bf16.mxu0 %v2176
            %2471 = vmatpush1.bf16.msra.mxu0 %v2175
            %2472 = vmatprep.subr.bf16.mxu0 %v2168
            %2473 = vmatpush1.bf16.msra.mxu0 %v2167
            %2474 = vmatprep.subr.bf16.mxu0 %v2160
            %2475 = vmatpush1.bf16.msra.mxu0 %v2159
            %2476 = vmatprep.subr.bf16.mxu0 %v2152
            %2477 = vmatpush1.bf16.msra.mxu0 %v2151
            %2478 = vmatprep.subr.bf16.mxu0 %v2144
            %2479 = vmatpush1.bf16.msra.mxu0 %v2143
            %2480 = vmatprep.subr.bf16.mxu0 %v2136
            %2481 = vmatpush1.bf16.msra.mxu0 %v2135
            %2482 = vmatprep.subr.bf16.mxu0 %v2128
            %2483 = vmatpush1.bf16.msra.mxu0 %v2127
            %2484 = vmatprep.subr.bf16.mxu0 0
            %2485 = vmatpush2.bf16.msra.mxu0 0
            %2486 = vmatprep.subr.bf16.mxu0 0
            %2487 = vmatpush2.bf16.msra.mxu0 0
            %2488 = vmatprep.subr.bf16.mxu0 0
            %2489 = vmatpush2.bf16.msra.mxu0 0
            %2490 = vmatprep.subr.bf16.mxu0 0
            %2491 = vmatpush2.bf16.msra.mxu0 0
            %2492 = vmatprep.subr.bf16.mxu0 0
            %2493 = vmatpush2.bf16.msra.mxu0 0
            %2494 = vmatprep.subr.bf16.mxu0 0
            %2495 = vmatpush2.bf16.msra.mxu0 0
            %2496 = vmatprep.subr.bf16.mxu0 0
            %2497 = vmatpush2.bf16.msra.mxu0 0
            %2498 = vmatprep.subr.bf16.mxu0 0
            %2499 = vmatpush2.bf16.msra.mxu0 0
            %2500 = vmatprep.mubr.bf16.mxu0 0
            %2501 = vmatmul.mubr.bf16.gmra.mxu0 %v1819
            %v2502 = vpop.f32.mrf.mxu0
            %v2503 = vadd.f32 %v1916, %v2502
            %v2504 = vpop.f32.mrf.mxu0
            %v2505 = vadd.f32 %v1920, %v2504
            %v2506 = vpop.f32.mrf.mxu0
            %v2507 = vadd.f32 %v1916, %v2506
            %v2508 = vpop.f32.mrf.mxu0
            %v2509 = vadd.f32 %v1920, %v2508
            %2510 = vmatprep.mubr.bf16.mxu0 0
            %2511 = vmatmul.mubr.bf16.gmra.mxu0 %v1820
            %v2512 = vpop.f32.mrf.mxu0
            %v2513 = vadd.f32 %v1916, %v2512
            %v2514 = vpop.f32.mrf.mxu0
            %v2515 = vadd.f32 %v1920, %v2514
            %v2516 = vpop.f32.mrf.mxu0
            %v2517 = vadd.f32 %v1916, %v2516
            %v2518 = vpop.f32.mrf.mxu0
            %v2519 = vadd.f32 %v1920, %v2518
            %2520 = vmatprep.mubr.bf16.mxu0 0
            %2521 = vmatmul.mubr.bf16.gmra.mxu0 %v1821
            %v2522 = vpop.f32.mrf.mxu0
            %v2523 = vadd.f32 %v1916, %v2522
            %v2524 = vpop.f32.mrf.mxu0
            %v2525 = vadd.f32 %v1920, %v2524
            %v2526 = vpop.f32.mrf.mxu0
            %v2527 = vadd.f32 %v1916, %v2526
            %v2528 = vpop.f32.mrf.mxu0
            %v2529 = vadd.f32 %v1920, %v2528
            %2530 = vmatprep.mubr.bf16.mxu0 0
            %2531 = vmatmul.mubr.bf16.gmra.mxu0 %v1822
            %v2532 = vpop.f32.mrf.mxu0
            %v2533 = vadd.f32 %v1916, %v2532
            %v2534 = vpop.f32.mrf.mxu0
            %v2535 = vadd.f32 %v1920, %v2534
            %v2536 = vpop.f32.mrf.mxu0
            %v2537 = vadd.f32 %v1916, %v2536
            %v2538 = vpop.f32.mrf.mxu0
            %v2539 = vadd.f32 %v1920, %v2538
            %2540 = vdwg.mxu0
            %v2541 = vmax.f32 %v2284, 0.0
            %v2542 = vmax.f32 %v2286, 0.0
            %v2543 = vmax.f32 %v2357, 0.0
            %v2544 = vmax.f32 %v2359, 0.0
            %v2545 = vmax.f32 %v2430, 0.0
            %v2546 = vmax.f32 %v2432, 0.0
            %v2547 = vmax.f32 %v2503, 0.0
            %v2548 = vmax.f32 %v2505, 0.0
            %v2549 = vmax.f32 %v2288, 0.0
            %v2550 = vmax.f32 %v2290, 0.0
            %v2551 = vmax.f32 %v2361, 0.0
            %v2552 = vmax.f32 %v2363, 0.0
            %v2553 = vmax.f32 %v2434, 0.0
            %v2554 = vmax.f32 %v2436, 0.0
            %v2555 = vmax.f32 %v2507, 0.0
            %v2556 = vmax.f32 %v2509, 0.0
            %v2557 = vmax.f32 %v2294, 0.0
            %v2558 = vmax.f32 %v2296, 0.0
            %v2559 = vmax.f32 %v2367, 0.0
            %v2560 = vmax.f32 %v2369, 0.0
            %v2561 = vmax.f32 %v2440, 0.0
            %v2562 = vmax.f32 %v2442, 0.0
            %v2563 = vmax.f32 %v2513, 0.0
            %v2564 = vmax.f32 %v2515, 0.0
            %v2565 = vmax.f32 %v2298, 0.0
            %v2566 = vmax.f32 %v2300, 0.0
            %v2567 = vmax.f32 %v2371, 0.0
            %v2568 = vmax.f32 %v2373, 0.0
            %v2569 = vmax.f32 %v2444, 0.0
            %v2570 = vmax.f32 %v2446, 0.0
            %v2571 = vmax.f32 %v2517, 0.0
            %v2572 = vmax.f32 %v2519, 0.0
            %v2573 = vmax.f32 %v2304, 0.0
            %v2574 = vmax.f32 %v2306, 0.0
            %v2575 = vmax.f32 %v2377, 0.0
            %v2576 = vmax.f32 %v2379, 0.0
            %v2577 = vmax.f32 %v2450, 0.0
            %v2578 = vmax.f32 %v2452, 0.0
            %v2579 = vmax.f32 %v2523, 0.0
            %v2580 = vmax.f32 %v2525, 0.0
            %v2581 = vmax.f32 %v2308, 0.0
            %v2582 = vmax.f32 %v2310, 0.0
            %v2583 = vmax.f32 %v2381, 0.0
            %v2584 = vmax.f32 %v2383, 0.0
            %v2585 = vmax.f32 %v2454, 0.0
            %v2586 = vmax.f32 %v2456, 0.0
            %v2587 = vmax.f32 %v2527, 0.0
            %v2588 = vmax.f32 %v2529, 0.0
            %v2589 = vmax.f32 %v2314, 0.0
            %v2590 = vmax.f32 %v2316, 0.0
            %v2591 = vmax.f32 %v2387, 0.0
            %v2592 = vmax.f32 %v2389, 0.0
            %v2593 = vmax.f32 %v2460, 0.0
            %v2594 = vmax.f32 %v2462, 0.0
            %v2595 = vmax.f32 %v2533, 0.0
            %v2596 = vmax.f32 %v2535, 0.0
            %v2597 = vmax.f32 %v2318, 0.0
            %v2598 = vmax.f32 %v2320, 0.0
            %v2599 = vmax.f32 %v2391, 0.0
            %v2600 = vmax.f32 %v2393, 0.0
            %v2601 = vmax.f32 %v2464, 0.0
            %v2602 = vmax.f32 %v2466, 0.0
            %v2603 = vmax.f32 %v2537, 0.0
            %v2604 = vmax.f32 %v2539, 0.0
            %v2605 = vpack.c.bf16 %v2549, %v2541
            %v2606 = vpack.c.bf16 %v2550, %v2542
            %v2607 = vpack.c.bf16 %v2551, %v2543
            %v2608 = vpack.c.bf16 %v2552, %v2544
            %v2609 = vpack.c.bf16 %v2553, %v2545
            %v2610 = vpack.c.bf16 %v2554, %v2546
            %v2611 = vpack.c.bf16 %v2555, %v2547
            %v2612 = vpack.c.bf16 %v2556, %v2548
            %v2613 = vpack.c.bf16 %v2565, %v2557
            %v2614 = vpack.c.bf16 %v2566, %v2558
            %v2615 = vpack.c.bf16 %v2567, %v2559
            %v2616 = vpack.c.bf16 %v2568, %v2560
            %v2617 = vpack.c.bf16 %v2569, %v2561
            %v2618 = vpack.c.bf16 %v2570, %v2562
            %v2619 = vpack.c.bf16 %v2571, %v2563
            %v2620 = vpack.c.bf16 %v2572, %v2564
            %v2621 = vpack.c.bf16 %v2581, %v2573
            %v2622 = vpack.c.bf16 %v2582, %v2574
            %v2623 = vpack.c.bf16 %v2583, %v2575
            %v2624 = vpack.c.bf16 %v2584, %v2576
            %v2625 = vpack.c.bf16 %v2585, %v2577
            %v2626 = vpack.c.bf16 %v2586, %v2578
            %v2627 = vpack.c.bf16 %v2587, %v2579
            %v2628 = vpack.c.bf16 %v2588, %v2580
            %v2629 = vpack.c.bf16 %v2597, %v2589
            %v2630 = vpack.c.bf16 %v2598, %v2590
            %v2631 = vpack.c.bf16 %v2599, %v2591
            %v2632 = vpack.c.bf16 %v2600, %v2592
            %v2633 = vpack.c.bf16 %v2601, %v2593
            %v2634 = vpack.c.bf16 %v2602, %v2594
            %v2635 = vpack.c.bf16 %v2603, %v2595
            %v2636 = vpack.c.bf16 %v2604, %v2596
            %v2637 = vld [vmem:[%s5] sm:$0xf]
            %v2638 = vld [vmem:[%s5 + $0x4] sm:$0xf]
            %v2639 = vld [vmem:[%s5 + $0x8] sm:$0xf]
            %v2640 = vld [vmem:[%s5 + $0xc] sm:$0xf]
            %v2641 = vld [vmem:[%s5 + $0x10] sm:$0xf]
            %v2642 = vld [vmem:[%s5 + $0x14] sm:$0xf]
            %v2643 = vld [vmem:[%s5 + $0x18] sm:$0xf]
            %v2644 = vld [vmem:[%s5 + $0x1c] sm:$0xf]
            %v2645 = vld [vmem:[%s5 + $0x20] sm:$0xf]
            %v2646 = vld [vmem:[%s5 + $0x24] sm:$0xf]
            %v2647 = vld [vmem:[%s5 + $0x28] sm:$0xf]
            %v2648 = vld [vmem:[%s5 + $0x2c] sm:$0xf]
            %v2649 = vld [vmem:[%s5 + $0x30] sm:$0xf]
            %v2650 = vld [vmem:[%s5 + $0x34] sm:$0xf]
            %v2651 = vld [vmem:[%s5 + $0x38] sm:$0xf]
            %v2652 = vld [vmem:[%s5 + $0x3c] sm:$0xf]
            %v2653 = vld [vmem:[%s5 + $0x40] sm:$0xf]
            %v2654 = vld [vmem:[%s5 + $0x44] sm:$0xf]
            %v2655 = vld [vmem:[%s5 + $0x48] sm:$0xf]
            %v2656 = vld [vmem:[%s5 + $0x4c] sm:$0xf]
            %v2657 = vld [vmem:[%s5 + $0x50] sm:$0xf]
            %v2658 = vld [vmem:[%s5 + $0x54] sm:$0xf]
            %v2659 = vld [vmem:[%s5 + $0x58] sm:$0xf]
            %v2660 = vld [vmem:[%s5 + $0x5c] sm:$0xf]
            %v2661 = vld [vmem:[%s5 + $0x60] sm:$0xf]
            %v2662 = vld [vmem:[%s5 + $0x64] sm:$0xf]
            %v2663 = vld [vmem:[%s5 + $0x68] sm:$0xf]
            %v2664 = vld [vmem:[%s5 + $0x6c] sm:$0xf]
            %v2665 = vld [vmem:[%s5 + $0x70] sm:$0xf]
            %v2666 = vld [vmem:[%s5 + $0x74] sm:$0xf]
            %v2667 = vld [vmem:[%s5 + $0x78] sm:$0xf]
            %v2668 = vld [vmem:[%s5 + $0x7c] sm:$0xf]
            %v2669 = vld [vmem:[%s5 + $0x80] sm:$0xf]
            %v2670 = vld [vmem:[%s5 + $0x84] sm:$0xf]
            %v2671 = vld [vmem:[%s5 + $0x88] sm:$0xf]
            %v2672 = vld [vmem:[%s5 + $0x8c] sm:$0xf]
            %v2673 = vld [vmem:[%s5 + $0x90] sm:$0xf]
            %v2674 = vld [vmem:[%s5 + $0x94] sm:$0xf]
            %v2675 = vld [vmem:[%s5 + $0x98] sm:$0xf]
            %v2676 = vld [vmem:[%s5 + $0x9c] sm:$0xf]
            %v2677 = vld [vmem:[%s5 + $0xa0] sm:$0xf]
            %v2678 = vld [vmem:[%s5 + $0xa4] sm:$0xf]
            %v2679 = vld [vmem:[%s5 + $0xa8] sm:$0xf]
            %v2680 = vld [vmem:[%s5 + $0xac] sm:$0xf]
            %v2681 = vld [vmem:[%s5 + $0xb0] sm:$0xf]
            %v2682 = vld [vmem:[%s5 + $0xb4] sm:$0xf]
            %v2683 = vld [vmem:[%s5 + $0xb8] sm:$0xf]
            %v2684 = vld [vmem:[%s5 + $0xbc] sm:$0xf]
            %v2685 = vld [vmem:[%s5 + $0xc0] sm:$0xf]
            %v2686 = vld [vmem:[%s5 + $0xc4] sm:$0xf]
            %v2687 = vld [vmem:[%s5 + $0xc8] sm:$0xf]
            %v2688 = vld [vmem:[%s5 + $0xcc] sm:$0xf]
            %v2689 = vld [vmem:[%s5 + $0xd0] sm:$0xf]
            %v2690 = vld [vmem:[%s5 + $0xd4] sm:$0xf]
            %v2691 = vld [vmem:[%s5 + $0xd8] sm:$0xf]
            %v2692 = vld [vmem:[%s5 + $0xdc] sm:$0xf]
            %v2693 = vld [vmem:[%s5 + $0xe0] sm:$0xf]
            %v2694 = vld [vmem:[%s5 + $0xe4] sm:$0xf]
            %v2695 = vld [vmem:[%s5 + $0xe8] sm:$0xf]
            %v2696 = vld [vmem:[%s5 + $0xec] sm:$0xf]
            %v2697 = vld [vmem:[%s5 + $0xf0] sm:$0xf]
            %v2698 = vld [vmem:[%s5 + $0xf4] sm:$0xf]
            %v2699 = vld [vmem:[%s5 + $0xf8] sm:$0xf]
            %v2700 = vld [vmem:[%s5 + $0xfc] sm:$0xf]
            %v2701 = vld [vmem:[%s5 + $0x100] sm:$0xf]
            %v2702 = vld [vmem:[%s5 + $0x104] sm:$0xf]
            %v2703 = vld [vmem:[%s5 + $0x108] sm:$0xf]
            %v2704 = vld [vmem:[%s5 + $0x10c] sm:$0xf]
            %v2705 = vld [vmem:[%s5 + $0x110] sm:$0xf]
            %v2706 = vld [vmem:[%s5 + $0x114] sm:$0xf]
            %v2707 = vld [vmem:[%s5 + $0x118] sm:$0xf]
            %v2708 = vld [vmem:[%s5 + $0x11c] sm:$0xf]
            %v2709 = vld [vmem:[%s5 + $0x120] sm:$0xf]
            %v2710 = vld [vmem:[%s5 + $0x124] sm:$0xf]
            %v2711 = vld [vmem:[%s5 + $0x128] sm:$0xf]
            %v2712 = vld [vmem:[%s5 + $0x12c] sm:$0xf]
            %v2713 = vld [vmem:[%s5 + $0x130] sm:$0xf]
            %v2714 = vld [vmem:[%s5 + $0x134] sm:$0xf]
            %v2715 = vld [vmem:[%s5 + $0x138] sm:$0xf]
            %v2716 = vld [vmem:[%s5 + $0x13c] sm:$0xf]
            %v2717 = vld [vmem:[%s5 + $0x140] sm:$0xf]
            %v2718 = vld [vmem:[%s5 + $0x144] sm:$0xf]
            %v2719 = vld [vmem:[%s5 + $0x148] sm:$0xf]
            %v2720 = vld [vmem:[%s5 + $0x14c] sm:$0xf]
            %v2721 = vld [vmem:[%s5 + $0x150] sm:$0xf]
            %v2722 = vld [vmem:[%s5 + $0x154] sm:$0xf]
            %v2723 = vld [vmem:[%s5 + $0x158] sm:$0xf]
            %v2724 = vld [vmem:[%s5 + $0x15c] sm:$0xf]
            %v2725 = vld [vmem:[%s5 + $0x160] sm:$0xf]
            %v2726 = vld [vmem:[%s5 + $0x164] sm:$0xf]
            %v2727 = vld [vmem:[%s5 + $0x168] sm:$0xf]
            %v2728 = vld [vmem:[%s5 + $0x16c] sm:$0xf]
            %v2729 = vld [vmem:[%s5 + $0x170] sm:$0xf]
            %v2730 = vld [vmem:[%s5 + $0x174] sm:$0xf]
            %v2731 = vld [vmem:[%s5 + $0x178] sm:$0xf]
            %v2732 = vld [vmem:[%s5 + $0x17c] sm:$0xf]
            %v2733 = vld [vmem:[%s5 + $0x180] sm:$0xf]
            %v2734 = vld [vmem:[%s5 + $0x184] sm:$0xf]
            %v2735 = vld [vmem:[%s5 + $0x188] sm:$0xf]
            %v2736 = vld [vmem:[%s5 + $0x18c] sm:$0xf]
            %v2737 = vld [vmem:[%s5 + $0x190] sm:$0xf]
            %v2738 = vld [vmem:[%s5 + $0x194] sm:$0xf]
            %v2739 = vld [vmem:[%s5 + $0x198] sm:$0xf]
            %v2740 = vld [vmem:[%s5 + $0x19c] sm:$0xf]
            %v2741 = vld [vmem:[%s5 + $0x1a0] sm:$0xf]
            %v2742 = vld [vmem:[%s5 + $0x1a4] sm:$0xf]
            %v2743 = vld [vmem:[%s5 + $0x1a8] sm:$0xf]
            %v2744 = vld [vmem:[%s5 + $0x1ac] sm:$0xf]
            %v2745 = vld [vmem:[%s5 + $0x1b0] sm:$0xf]
            %v2746 = vld [vmem:[%s5 + $0x1b4] sm:$0xf]
            %v2747 = vld [vmem:[%s5 + $0x1b8] sm:$0xf]
            %v2748 = vld [vmem:[%s5 + $0x1bc] sm:$0xf]
            %v2749 = vld [vmem:[%s5 + $0x1c0] sm:$0xf]
            %v2750 = vld [vmem:[%s5 + $0x1c4] sm:$0xf]
            %v2751 = vld [vmem:[%s5 + $0x1c8] sm:$0xf]
            %v2752 = vld [vmem:[%s5 + $0x1cc] sm:$0xf]
            %v2753 = vld [vmem:[%s5 + $0x1d0] sm:$0xf]
            %v2754 = vld [vmem:[%s5 + $0x1d4] sm:$0xf]
            %v2755 = vld [vmem:[%s5 + $0x1d8] sm:$0xf]
            %v2756 = vld [vmem:[%s5 + $0x1dc] sm:$0xf]
            %v2757 = vld [vmem:[%s5 + $0x1e0] sm:$0xf]
            %v2758 = vld [vmem:[%s5 + $0x1e4] sm:$0xf]
            %v2759 = vld [vmem:[%s5 + $0x1e8] sm:$0xf]
            %v2760 = vld [vmem:[%s5 + $0x1ec] sm:$0xf]
            %v2761 = vld [vmem:[%s5 + $0x1f0] sm:$0xf]
            %v2762 = vld [vmem:[%s5 + $0x1f4] sm:$0xf]
            %v2763 = vld [vmem:[%s5 + $0x1f8] sm:$0xf]
            %v2764 = vld [vmem:[%s5 + $0x1fc] sm:$0xf]
            %v2765 = vld [vmem:[%s6] sm:$0x1]
            %v2767 = vlaneseq
            %v2768 = vshrl.u32 %v2767, 7
            %v2769 = vsub.s32 0, %v2768
            %v2770 = vrot.slane %v2765, %v2769
            %v2900 = vunpack.c.l.b16 %v2637
            %v2901 = vunpack.c.l.b16 %v2638
            %v2902 = vunpack.c.l.b16 %v2639
            %v2903 = vunpack.c.l.b16 %v2640
            %v2904 = vunpack.c.l.b16 %v2641
            %v2905 = vunpack.c.l.b16 %v2642
            %v2906 = vunpack.c.l.b16 %v2643
            %v2907 = vunpack.c.l.b16 %v2644
            %v2908 = vunpack.c.l.b16 %v2645
            %v2909 = vunpack.c.l.b16 %v2646
            %v2910 = vunpack.c.l.b16 %v2647
            %v2911 = vunpack.c.l.b16 %v2648
            %v2912 = vunpack.c.l.b16 %v2649
            %v2913 = vunpack.c.l.b16 %v2650
            %v2914 = vunpack.c.l.b16 %v2651
            %v2915 = vunpack.c.l.b16 %v2652
            %v2916 = vunpack.c.l.b16 %v2653
            %v2917 = vunpack.c.l.b16 %v2654
            %v2918 = vunpack.c.l.b16 %v2655
            %v2919 = vunpack.c.l.b16 %v2656
            %v2920 = vunpack.c.l.b16 %v2657
            %v2921 = vunpack.c.l.b16 %v2658
            %v2922 = vunpack.c.l.b16 %v2659
            %v2923 = vunpack.c.l.b16 %v2660
            %v2924 = vunpack.c.l.b16 %v2661
            %v2925 = vunpack.c.l.b16 %v2662
            %v2926 = vunpack.c.l.b16 %v2663
            %v2927 = vunpack.c.l.b16 %v2664
            %v2928 = vunpack.c.l.b16 %v2665
            %v2929 = vunpack.c.l.b16 %v2666
            %v2930 = vunpack.c.l.b16 %v2667
            %v2931 = vunpack.c.l.b16 %v2668
            %v2932 = vunpack.c.l.b16 %v2669
            %v2933 = vunpack.c.l.b16 %v2670
            %v2934 = vunpack.c.l.b16 %v2671
            %v2935 = vunpack.c.l.b16 %v2672
            %v2936 = vunpack.c.l.b16 %v2673
            %v2937 = vunpack.c.l.b16 %v2674
            %v2938 = vunpack.c.l.b16 %v2675
            %v2939 = vunpack.c.l.b16 %v2676
            %v2940 = vunpack.c.l.b16 %v2677
            %v2941 = vunpack.c.l.b16 %v2678
            %v2942 = vunpack.c.l.b16 %v2679
            %v2943 = vunpack.c.l.b16 %v2680
            %v2944 = vunpack.c.l.b16 %v2681
            %v2945 = vunpack.c.l.b16 %v2682
            %v2946 = vunpack.c.l.b16 %v2683
            %v2947 = vunpack.c.l.b16 %v2684
            %v2948 = vunpack.c.l.b16 %v2685
            %v2949 = vunpack.c.l.b16 %v2686
            %v2950 = vunpack.c.l.b16 %v2687
            %v2951 = vunpack.c.l.b16 %v2688
            %v2952 = vunpack.c.l.b16 %v2689
            %v2953 = vunpack.c.l.b16 %v2690
            %v2954 = vunpack.c.l.b16 %v2691
            %v2955 = vunpack.c.l.b16 %v2692
            %v2956 = vunpack.c.l.b16 %v2693
            %v2957 = vunpack.c.l.b16 %v2694
            %v2958 = vunpack.c.l.b16 %v2695
            %v2959 = vunpack.c.l.b16 %v2696
            %v2960 = vunpack.c.l.b16 %v2697
            %v2961 = vunpack.c.l.b16 %v2698
            %v2962 = vunpack.c.l.b16 %v2699
            %v2963 = vunpack.c.l.b16 %v2700
            %v2964 = vunpack.c.l.b16 %v2701
            %v2965 = vunpack.c.l.b16 %v2702
            %v2966 = vunpack.c.l.b16 %v2703
            %v2967 = vunpack.c.l.b16 %v2704
            %v2968 = vunpack.c.l.b16 %v2705
            %v2969 = vunpack.c.l.b16 %v2706
            %v2970 = vunpack.c.l.b16 %v2707
            %v2971 = vunpack.c.l.b16 %v2708
            %v2972 = vunpack.c.l.b16 %v2709
            %v2973 = vunpack.c.l.b16 %v2710
            %v2974 = vunpack.c.l.b16 %v2711
            %v2975 = vunpack.c.l.b16 %v2712
            %v2976 = vunpack.c.l.b16 %v2713
            %v2977 = vunpack.c.l.b16 %v2714
            %v2978 = vunpack.c.l.b16 %v2715
            %v2979 = vunpack.c.l.b16 %v2716
            %v2980 = vunpack.c.l.b16 %v2717
            %v2981 = vunpack.c.l.b16 %v2718
            %v2982 = vunpack.c.l.b16 %v2719
            %v2983 = vunpack.c.l.b16 %v2720
            %v2984 = vunpack.c.l.b16 %v2721
            %v2985 = vunpack.c.l.b16 %v2722
            %v2986 = vunpack.c.l.b16 %v2723
            %v2987 = vunpack.c.l.b16 %v2724
            %v2988 = vunpack.c.l.b16 %v2725
            %v2989 = vunpack.c.l.b16 %v2726
            %v2990 = vunpack.c.l.b16 %v2727
            %v2991 = vunpack.c.l.b16 %v2728
            %v2992 = vunpack.c.l.b16 %v2729
            %v2993 = vunpack.c.l.b16 %v2730
            %v2994 = vunpack.c.l.b16 %v2731
            %v2995 = vunpack.c.l.b16 %v2732
            %v2996 = vunpack.c.l.b16 %v2733
            %v2997 = vunpack.c.l.b16 %v2734
            %v2998 = vunpack.c.l.b16 %v2735
            %v2999 = vunpack.c.l.b16 %v2736
            %v3000 = vunpack.c.l.b16 %v2737
            %v3001 = vunpack.c.l.b16 %v2738
            %v3002 = vunpack.c.l.b16 %v2739
            %v3003 = vunpack.c.l.b16 %v2740
            %v3004 = vunpack.c.l.b16 %v2741
            %v3005 = vunpack.c.l.b16 %v2742
            %v3006 = vunpack.c.l.b16 %v2743
            %v3007 = vunpack.c.l.b16 %v2744
            %v3008 = vunpack.c.l.b16 %v2745
            %v3009 = vunpack.c.l.b16 %v2746
            %v3010 = vunpack.c.l.b16 %v2747
            %v3011 = vunpack.c.l.b16 %v2748
            %v3012 = vunpack.c.l.b16 %v2749
            %v3013 = vunpack.c.l.b16 %v2750
            %v3014 = vunpack.c.l.b16 %v2751
            %v3015 = vunpack.c.l.b16 %v2752
            %v3016 = vunpack.c.l.b16 %v2753
            %v3017 = vunpack.c.l.b16 %v2754
            %v3018 = vunpack.c.l.b16 %v2755
            %v3019 = vunpack.c.l.b16 %v2756
            %v3020 = vunpack.c.l.b16 %v2757
            %v3021 = vunpack.c.l.b16 %v2758
            %v3022 = vunpack.c.l.b16 %v2759
            %v3023 = vunpack.c.l.b16 %v2760
            %v3024 = vunpack.c.l.b16 %v2761
            %v3025 = vunpack.c.l.b16 %v2762
            %v3026 = vunpack.c.l.b16 %v2763
            %v3027 = vunpack.c.l.b16 %v2764
            %v3028 = vpack.c.b16 %v2901, %v2900
            %v3029 = vpack.c.b16 %v2903, %v2902
            %v3030 = vpack.c.b16 %v2905, %v2904
            %v3031 = vpack.c.b16 %v2907, %v2906
            %v3032 = vpack.c.b16 %v2909, %v2908
            %v3033 = vpack.c.b16 %v2911, %v2910
            %v3034 = vpack.c.b16 %v2913, %v2912
            %v3035 = vpack.c.b16 %v2915, %v2914
            %v3036 = vpack.c.b16 %v2917, %v2916
            %v3037 = vpack.c.b16 %v2919, %v2918
            %v3038 = vpack.c.b16 %v2921, %v2920
            %v3039 = vpack.c.b16 %v2923, %v2922
            %v3040 = vpack.c.b16 %v2925, %v2924
            %v3041 = vpack.c.b16 %v2927, %v2926
            %v3042 = vpack.c.b16 %v2929, %v2928
            %v3043 = vpack.c.b16 %v2931, %v2930
            %v3044 = vpack.c.b16 %v2933, %v2932
            %v3045 = vpack.c.b16 %v2935, %v2934
            %v3046 = vpack.c.b16 %v2937, %v2936
            %v3047 = vpack.c.b16 %v2939, %v2938
            %v3048 = vpack.c.b16 %v2941, %v2940
            %v3049 = vpack.c.b16 %v2943, %v2942
            %v3050 = vpack.c.b16 %v2945, %v2944
            %v3051 = vpack.c.b16 %v2947, %v2946
            %v3052 = vpack.c.b16 %v2949, %v2948
            %v3053 = vpack.c.b16 %v2951, %v2950
            %v3054 = vpack.c.b16 %v2953, %v2952
            %v3055 = vpack.c.b16 %v2955, %v2954
            %v3056 = vpack.c.b16 %v2957, %v2956
            %v3057 = vpack.c.b16 %v2959, %v2958
            %v3058 = vpack.c.b16 %v2961, %v2960
            %v3059 = vpack.c.b16 %v2963, %v2962
            %v3060 = vpack.c.b16 %v2965, %v2964
            %v3061 = vpack.c.b16 %v2967, %v2966
            %v3062 = vpack.c.b16 %v2969, %v2968
            %v3063 = vpack.c.b16 %v2971, %v2970
            %v3064 = vpack.c.b16 %v2973, %v2972
            %v3065 = vpack.c.b16 %v2975, %v2974
            %v3066 = vpack.c.b16 %v2977, %v2976
            %v3067 = vpack.c.b16 %v2979, %v2978
            %v3068 = vpack.c.b16 %v2981, %v2980
            %v3069 = vpack.c.b16 %v2983, %v2982
            %v3070 = vpack.c.b16 %v2985, %v2984
            %v3071 = vpack.c.b16 %v2987, %v2986
            %v3072 = vpack.c.b16 %v2989, %v2988
            %v3073 = vpack.c.b16 %v2991, %v2990
            %v3074 = vpack.c.b16 %v2993, %v2992
            %v3075 = vpack.c.b16 %v2995, %v2994
            %v3076 = vpack.c.b16 %v2997, %v2996
            %v3077 = vpack.c.b16 %v2999, %v2998
            %v3078 = vpack.c.b16 %v3001, %v3000
            %v3079 = vpack.c.b16 %v3003, %v3002
            %v3080 = vpack.c.b16 %v3005, %v3004
            %v3081 = vpack.c.b16 %v3007, %v3006
            %v3082 = vpack.c.b16 %v3009, %v3008
            %v3083 = vpack.c.b16 %v3011, %v3010
            %v3084 = vpack.c.b16 %v3013, %v3012
            %v3085 = vpack.c.b16 %v3015, %v3014
            %v3086 = vpack.c.b16 %v3017, %v3016
            %v3087 = vpack.c.b16 %v3019, %v3018
            %v3088 = vpack.c.b16 %v3021, %v3020
            %v3089 = vpack.c.b16 %v3023, %v3022
            %v3090 = vpack.c.b16 %v3025, %v3024
            %v3091 = vpack.c.b16 %v3027, %v3026
            %3156 = vmatprep.subr.bf16.mxu0 0
            %3157 = vmatpush1.bf16.msra.mxu0 %v3035
            %3158 = vmatprep.subr.bf16.mxu0 0
            %3159 = vmatpush1.bf16.msra.mxu0 %v3034
            %3160 = vmatprep.subr.bf16.mxu0 0
            %3161 = vmatpush1.bf16.msra.mxu0 %v3033
            %3162 = vmatprep.subr.bf16.mxu0 0
            %3163 = vmatpush1.bf16.msra.mxu0 %v3032
            %3164 = vmatprep.subr.bf16.mxu0 0
            %3165 = vmatpush1.bf16.msra.mxu0 %v3031
            %3166 = vmatprep.subr.bf16.mxu0 0
            %3167 = vmatpush1.bf16.msra.mxu0 %v3030
            %3168 = vmatprep.subr.bf16.mxu0 0
            %3169 = vmatpush1.bf16.msra.mxu0 %v3029
            %3170 = vmatprep.subr.bf16.mxu0 0
            %3171 = vmatpush1.bf16.msra.mxu0 %v3028
            %3172 = vmatprep.subr.bf16.mxu0 0
            %3173 = vmatpush2.bf16.msra.mxu0 %v3043
            %3174 = vmatprep.subr.bf16.mxu0 0
            %3175 = vmatpush2.bf16.msra.mxu0 %v3042
            %3176 = vmatprep.subr.bf16.mxu0 0
            %3177 = vmatpush2.bf16.msra.mxu0 %v3041
            %3178 = vmatprep.subr.bf16.mxu0 0
            %3179 = vmatpush2.bf16.msra.mxu0 %v3040
            %3180 = vmatprep.subr.bf16.mxu0 0
            %3181 = vmatpush2.bf16.msra.mxu0 %v3039
            %3182 = vmatprep.subr.bf16.mxu0 0
            %3183 = vmatpush2.bf16.msra.mxu0 %v3038
            %3184 = vmatprep.subr.bf16.mxu0 0
            %3185 = vmatpush2.bf16.msra.mxu0 %v3037
            %3186 = vmatprep.subr.bf16.mxu0 0
            %3187 = vmatpush2.bf16.msra.mxu0 %v3036
            %3188 = vmatprep.mubr.bf16.mxu0 %v2606
            %3189 = vmatmul.mubr.bf16.gmra.mxu0 %v2605
            %v3190 = vpop.f32.mrf.mxu0
            %v3191 = vadd.f32 %v2770, %v3190
            %v3192 = vpop.f32.mrf.mxu0
            %v3193 = vpop.f32.mrf.mxu0
            %v3194 = vadd.f32 %v2770, %v3193
            %v3195 = vpop.f32.mrf.mxu0
            %3196 = vmatprep.mubr.bf16.mxu0 %v2614
            %3197 = vmatmul.mubr.bf16.gmra.mxu0 %v2613
            %v3198 = vpop.f32.mrf.mxu0
            %v3199 = vadd.f32 %v2770, %v3198
            %v3200 = vpop.f32.mrf.mxu0
            %v3201 = vpop.f32.mrf.mxu0
            %v3202 = vadd.f32 %v2770, %v3201
            %v3203 = vpop.f32.mrf.mxu0
            %3204 = vmatprep.mubr.bf16.mxu0 %v2622
            %3205 = vmatmul.mubr.bf16.gmra.mxu0 %v2621
            %v3206 = vpop.f32.mrf.mxu0
            %v3207 = vadd.f32 %v2770, %v3206
            %v3208 = vpop.f32.mrf.mxu0
            %v3209 = vpop.f32.mrf.mxu0
            %v3210 = vadd.f32 %v2770, %v3209
            %v3211 = vpop.f32.mrf.mxu0
            %3212 = vmatprep.mubr.bf16.mxu0 %v2630
            %3213 = vmatmul.mubr.bf16.gmra.mxu0 %v2629
            %v3214 = vpop.f32.mrf.mxu0
            %v3215 = vadd.f32 %v2770, %v3214
            %v3216 = vpop.f32.mrf.mxu0
            %v3217 = vpop.f32.mrf.mxu0
            %v3218 = vadd.f32 %v2770, %v3217
            %v3219 = vpop.f32.mrf.mxu0
            %3220 = vdwg.mxu0
            %3221 = vmatprep.subr.bf16.mxu0 0
            %3222 = vmatpush1.bf16.msra.mxu0 %v3051
            %3223 = vmatprep.subr.bf16.mxu0 0
            %3224 = vmatpush1.bf16.msra.mxu0 %v3050
            %3225 = vmatprep.subr.bf16.mxu0 0
            %3226 = vmatpush1.bf16.msra.mxu0 %v3049
            %3227 = vmatprep.subr.bf16.mxu0 0
            %3228 = vmatpush1.bf16.msra.mxu0 %v3048
            %3229 = vmatprep.subr.bf16.mxu0 0
            %3230 = vmatpush1.bf16.msra.mxu0 %v3047
            %3231 = vmatprep.subr.bf16.mxu0 0
            %3232 = vmatpush1.bf16.msra.mxu0 %v3046
            %3233 = vmatprep.subr.bf16.mxu0 0
            %3234 = vmatpush1.bf16.msra.mxu0 %v3045
            %3235 = vmatprep.subr.bf16.mxu0 0
            %3236 = vmatpush1.bf16.msra.mxu0 %v3044
            %3237 = vmatprep.subr.bf16.mxu0 0
            %3238 = vmatpush2.bf16.msra.mxu0 %v3059
            %3239 = vmatprep.subr.bf16.mxu0 0
            %3240 = vmatpush2.bf16.msra.mxu0 %v3058
            %3241 = vmatprep.subr.bf16.mxu0 0
            %3242 = vmatpush2.bf16.msra.mxu0 %v3057
            %3243 = vmatprep.subr.bf16.mxu0 0
            %3244 = vmatpush2.bf16.msra.mxu0 %v3056
            %3245 = vmatprep.subr.bf16.mxu0 0
            %3246 = vmatpush2.bf16.msra.mxu0 %v3055
            %3247 = vmatprep.subr.bf16.mxu0 0
            %3248 = vmatpush2.bf16.msra.mxu0 %v3054
            %3249 = vmatprep.subr.bf16.mxu0 0
            %3250 = vmatpush2.bf16.msra.mxu0 %v3053
            %3251 = vmatprep.subr.bf16.mxu0 0
            %3252 = vmatpush2.bf16.msra.mxu0 %v3052
            %3253 = vmatprep.mubr.bf16.mxu0 %v2608
            %3254 = vmatmul.mubr.bf16.gmra.mxu0 %v2607
            %v3255 = vpop.f32.mrf.mxu0
            %v3256 = vadd.f32 %v3191, %v3255
            %v3257 = vpop.f32.mrf.mxu0
            %v3258 = vpop.f32.mrf.mxu0
            %v3259 = vadd.f32 %v3194, %v3258
            %v3260 = vpop.f32.mrf.mxu0
            %3261 = vmatprep.mubr.bf16.mxu0 %v2616
            %3262 = vmatmul.mubr.bf16.gmra.mxu0 %v2615
            %v3263 = vpop.f32.mrf.mxu0
            %v3264 = vadd.f32 %v3199, %v3263
            %v3265 = vpop.f32.mrf.mxu0
            %v3266 = vpop.f32.mrf.mxu0
            %v3267 = vadd.f32 %v3202, %v3266
            %v3268 = vpop.f32.mrf.mxu0
            %3269 = vmatprep.mubr.bf16.mxu0 %v2624
            %3270 = vmatmul.mubr.bf16.gmra.mxu0 %v2623
            %v3271 = vpop.f32.mrf.mxu0
            %v3272 = vadd.f32 %v3207, %v3271
            %v3273 = vpop.f32.mrf.mxu0
            %v3274 = vpop.f32.mrf.mxu0
            %v3275 = vadd.f32 %v3210, %v3274
            %v3276 = vpop.f32.mrf.mxu0
            %3277 = vmatprep.mubr.bf16.mxu0 %v2632
            %3278 = vmatmul.mubr.bf16.gmra.mxu0 %v2631
            %v3279 = vpop.f32.mrf.mxu0
            %v3280 = vadd.f32 %v3215, %v3279
            %v3281 = vpop.f32.mrf.mxu0
            %v3282 = vpop.f32.mrf.mxu0
            %v3283 = vadd.f32 %v3218, %v3282
            %v3284 = vpop.f32.mrf.mxu0
            %3285 = vdwg.mxu0
            %3286 = vmatprep.subr.bf16.mxu0 0
            %3287 = vmatpush1.bf16.msra.mxu0 %v3067
            %3288 = vmatprep.subr.bf16.mxu0 0
            %3289 = vmatpush1.bf16.msra.mxu0 %v3066
            %3290 = vmatprep.subr.bf16.mxu0 0
            %3291 = vmatpush1.bf16.msra.mxu0 %v3065
            %3292 = vmatprep.subr.bf16.mxu0 0
            %3293 = vmatpush1.bf16.msra.mxu0 %v3064
            %3294 = vmatprep.subr.bf16.mxu0 0
            %3295 = vmatpush1.bf16.msra.mxu0 %v3063
            %3296 = vmatprep.subr.bf16.mxu0 0
            %3297 = vmatpush1.bf16.msra.mxu0 %v3062
            %3298 = vmatprep.subr.bf16.mxu0 0
            %3299 = vmatpush1.bf16.msra.mxu0 %v3061
            %3300 = vmatprep.subr.bf16.mxu0 0
            %3301 = vmatpush1.bf16.msra.mxu0 %v3060
            %3302 = vmatprep.subr.bf16.mxu0 0
            %3303 = vmatpush2.bf16.msra.mxu0 %v3075
            %3304 = vmatprep.subr.bf16.mxu0 0
            %3305 = vmatpush2.bf16.msra.mxu0 %v3074
            %3306 = vmatprep.subr.bf16.mxu0 0
            %3307 = vmatpush2.bf16.msra.mxu0 %v3073
            %3308 = vmatprep.subr.bf16.mxu0 0
            %3309 = vmatpush2.bf16.msra.mxu0 %v3072
            %3310 = vmatprep.subr.bf16.mxu0 0
            %3311 = vmatpush2.bf16.msra.mxu0 %v3071
            %3312 = vmatprep.subr.bf16.mxu0 0
            %3313 = vmatpush2.bf16.msra.mxu0 %v3070
            %3314 = vmatprep.subr.bf16.mxu0 0
            %3315 = vmatpush2.bf16.msra.mxu0 %v3069
            %3316 = vmatprep.subr.bf16.mxu0 0
            %3317 = vmatpush2.bf16.msra.mxu0 %v3068
            %3318 = vmatprep.mubr.bf16.mxu0 %v2610
            %3319 = vmatmul.mubr.bf16.gmra.mxu0 %v2609
            %v3320 = vpop.f32.mrf.mxu0
            %v3321 = vadd.f32 %v3256, %v3320
            %v3322 = vpop.f32.mrf.mxu0
            %v3323 = vpop.f32.mrf.mxu0
            %v3324 = vadd.f32 %v3259, %v3323
            %v3325 = vpop.f32.mrf.mxu0
            %3326 = vmatprep.mubr.bf16.mxu0 %v2618
            %3327 = vmatmul.mubr.bf16.gmra.mxu0 %v2617
            %v3328 = vpop.f32.mrf.mxu0
            %v3329 = vadd.f32 %v3264, %v3328
            %v3330 = vpop.f32.mrf.mxu0
            %v3331 = vpop.f32.mrf.mxu0
            %v3332 = vadd.f32 %v3267, %v3331
            %v3333 = vpop.f32.mrf.mxu0
            %3334 = vmatprep.mubr.bf16.mxu0 %v2626
            %3335 = vmatmul.mubr.bf16.gmra.mxu0 %v2625
            %v3336 = vpop.f32.mrf.mxu0
            %v3337 = vadd.f32 %v3272, %v3336
            %v3338 = vpop.f32.mrf.mxu0
            %v3339 = vpop.f32.mrf.mxu0
            %v3340 = vadd.f32 %v3275, %v3339
            %v3341 = vpop.f32.mrf.mxu0
            %3342 = vmatprep.mubr.bf16.mxu0 %v2634
            %3343 = vmatmul.mubr.bf16.gmra.mxu0 %v2633
            %v3344 = vpop.f32.mrf.mxu0
            %v3345 = vadd.f32 %v3280, %v3344
            %v3346 = vpop.f32.mrf.mxu0
            %v3347 = vpop.f32.mrf.mxu0
            %v3348 = vadd.f32 %v3283, %v3347
            %v3349 = vpop.f32.mrf.mxu0
            %3350 = vdwg.mxu0
            %3351 = vmatprep.subr.bf16.mxu0 0
            %3352 = vmatpush1.bf16.msra.mxu0 %v3083
            %3353 = vmatprep.subr.bf16.mxu0 0
            %3354 = vmatpush1.bf16.msra.mxu0 %v3082
            %3355 = vmatprep.subr.bf16.mxu0 0
            %3356 = vmatpush1.bf16.msra.mxu0 %v3081
            %3357 = vmatprep.subr.bf16.mxu0 0
            %3358 = vmatpush1.bf16.msra.mxu0 %v3080
            %3359 = vmatprep.subr.bf16.mxu0 0
            %3360 = vmatpush1.bf16.msra.mxu0 %v3079
            %3361 = vmatprep.subr.bf16.mxu0 0
            %3362 = vmatpush1.bf16.msra.mxu0 %v3078
            %3363 = vmatprep.subr.bf16.mxu0 0
            %3364 = vmatpush1.bf16.msra.mxu0 %v3077
            %3365 = vmatprep.subr.bf16.mxu0 0
            %3366 = vmatpush1.bf16.msra.mxu0 %v3076
            %3367 = vmatprep.subr.bf16.mxu0 0
            %3368 = vmatpush2.bf16.msra.mxu0 %v3091
            %3369 = vmatprep.subr.bf16.mxu0 0
            %3370 = vmatpush2.bf16.msra.mxu0 %v3090
            %3371 = vmatprep.subr.bf16.mxu0 0
            %3372 = vmatpush2.bf16.msra.mxu0 %v3089
            %3373 = vmatprep.subr.bf16.mxu0 0
            %3374 = vmatpush2.bf16.msra.mxu0 %v3088
            %3375 = vmatprep.subr.bf16.mxu0 0
            %3376 = vmatpush2.bf16.msra.mxu0 %v3087
            %3377 = vmatprep.subr.bf16.mxu0 0
            %3378 = vmatpush2.bf16.msra.mxu0 %v3086
            %3379 = vmatprep.subr.bf16.mxu0 0
            %3380 = vmatpush2.bf16.msra.mxu0 %v3085
            %3381 = vmatprep.subr.bf16.mxu0 0
            %3382 = vmatpush2.bf16.msra.mxu0 %v3084
            %3383 = vmatprep.mubr.bf16.mxu0 %v2612
            %3384 = vmatmul.mubr.bf16.gmra.mxu0 %v2611
            %v3385 = vpop.f32.mrf.mxu0
            %v3386 = vadd.f32 %v3321, %v3385
            %v3387 = vpop.f32.mrf.mxu0
            %v3388 = vpop.f32.mrf.mxu0
            %v3389 = vadd.f32 %v3324, %v3388
            %v3390 = vpop.f32.mrf.mxu0
            %3391 = vmatprep.mubr.bf16.mxu0 %v2620
            %3392 = vmatmul.mubr.bf16.gmra.mxu0 %v2619
            %v3393 = vpop.f32.mrf.mxu0
            %v3394 = vadd.f32 %v3329, %v3393
            %v3395 = vpop.f32.mrf.mxu0
            %v3396 = vpop.f32.mrf.mxu0
            %v3397 = vadd.f32 %v3332, %v3396
            %v3398 = vpop.f32.mrf.mxu0
            %3399 = vmatprep.mubr.bf16.mxu0 %v2628
            %3400 = vmatmul.mubr.bf16.gmra.mxu0 %v2627
            %v3401 = vpop.f32.mrf.mxu0
            %v3402 = vadd.f32 %v3337, %v3401
            %v3403 = vpop.f32.mrf.mxu0
            %v3404 = vpop.f32.mrf.mxu0
            %v3405 = vadd.f32 %v3340, %v3404
            %v3406 = vpop.f32.mrf.mxu0
            %3407 = vmatprep.mubr.bf16.mxu0 %v2636
            %3408 = vmatmul.mubr.bf16.gmra.mxu0 %v2635
            %v3409 = vpop.f32.mrf.mxu0
            %v3410 = vadd.f32 %v3345, %v3409
            %v3411 = vpop.f32.mrf.mxu0
            %v3412 = vpop.f32.mrf.mxu0
            %v3413 = vadd.f32 %v3348, %v3412
            %v3414 = vpop.f32.mrf.mxu0
            %3415 = vdwg.mxu0
            %v3416 = vmax.f32 %v3386, 0.0
            %v3417 = vmax.f32 %v3389, 0.0
            %v3418 = vmax.f32 %v3394, 0.0
            %v3419 = vmax.f32 %v3397, 0.0
            %v3420 = vmax.f32 %v3402, 0.0
            %v3421 = vmax.f32 %v3405, 0.0
            %v3422 = vmax.f32 %v3410, 0.0
            %v3423 = vmax.f32 %v3413, 0.0
            %v3424 = vpack.c.bf16 %v3417, %v3416
            %v3425 = vpack.c.bf16 %v3419, %v3418
            %v3426 = vpack.c.bf16 %v3421, %v3420
            %v3427 = vpack.c.bf16 %v3423, %v3422
            %v3432 = vunpack.c.l.b16 %v3424
            %v3433 = vunpack.c.h.b16 %v3424
            %v3434 = vunpack.c.l.b16 %v3425
            %v3435 = vunpack.c.h.b16 %v3425
            %v3436 = vunpack.c.l.b16 %v3426
            %v3437 = vunpack.c.h.b16 %v3426
            %v3438 = vunpack.c.l.b16 %v3427
            %v3439 = vunpack.c.h.b16 %v3427
            %v3440 = vpack.c.b16 %v3432, %v3432
            %v3441 = vpack.c.b16 %v3433, %v3433
            %v3442 = vpack.c.b16 %v3434, %v3434
            %v3443 = vpack.c.b16 %v3435, %v3435
            %v3444 = vpack.c.b16 %v3436, %v3436
            %v3445 = vpack.c.b16 %v3437, %v3437
            %v3446 = vpack.c.b16 %v3438, %v3438
            %v3447 = vpack.c.b16 %v3439, %v3439
            %3456 = vst [vmem:[#allocation3] sm:$0xf] %v3440
            %3457 = vst [vmem:[#allocation3 + $0x4] sm:$0xf] %v3441
            %3458 = vst [vmem:[#allocation3 + $0x8] sm:$0xf] %v3442
            %3459 = vst [vmem:[#allocation3 + $0xc] sm:$0xf] %v3443
            %3460 = vst [vmem:[#allocation3 + $0x10] sm:$0xf] %v3444
            %3461 = vst [vmem:[#allocation3 + $0x14] sm:$0xf] %v3445
            %3462 = vst [vmem:[#allocation3 + $0x18] sm:$0xf] %v3446
            %3463 = vst [vmem:[#allocation3 + $0x1c] sm:$0xf] %v3447
            %3464 = vst [vmem:[#allocation5] sm:$0xff] 0.0
            %3465 = vst [vmem:[#allocation5 + $0x8] sm:$0xff] 0.0
            %3466 = vst [vmem:[#allocation5 + $0x10] sm:$0xff] 0.0
            %3467 = vst [vmem:[#allocation5 + $0x18] sm:$0xff] 0.0
            %3468 = vst [vmem:[#allocation5 + $0x20] sm:$0xff] 0.0
            %3469 = vst [vmem:[#allocation5 + $0x28] sm:$0xff] 0.0
            %3470 = vst [vmem:[#allocation5 + $0x30] sm:$0xff] 0.0
            %3471 = vst [vmem:[#allocation5 + $0x38] sm:$0xff] 0.0
          $region118: #{dae_forward.1} parent=113 // pred_fallthru
            _
          %v3472 = vld [vmem:[#allocation3] sm:$0xf]
          %v3473 = vld [vmem:[#allocation3 + $0x4] sm:$0xf]
          %v3474 = vld [vmem:[#allocation3 + $0x8] sm:$0xf]
          %v3475 = vld [vmem:[#allocation3 + $0xc] sm:$0xf]
          %v3476 = vld [vmem:[#allocation3 + $0x10] sm:$0xf]
          %v3477 = vld [vmem:[#allocation3 + $0x14] sm:$0xf]
          %v3478 = vld [vmem:[#allocation3 + $0x18] sm:$0xf]
          %v3479 = vld [vmem:[#allocation3 + $0x1c] sm:$0xf]
          %v3480 = vld [vmem:[%s711] sm:$0xff]
          %v3481 = vld [vmem:[%s711 + $0x8] sm:$0xff]
          %v3482 = vld [vmem:[%s711 + $0x10] sm:$0xff]
          %v3483 = vld [vmem:[%s711 + $0x18] sm:$0xff]
          %v3484 = vld [vmem:[%s711 + $0x20] sm:$0xff]
          %v3485 = vld [vmem:[%s711 + $0x28] sm:$0xff]
          %v3486 = vld [vmem:[%s711 + $0x30] sm:$0xff]
          %v3487 = vld [vmem:[%s711 + $0x38] sm:$0xff]
          %v3488 = vld [vmem:[%s711 + $0x40] sm:$0xff]
          %v3489 = vld [vmem:[%s711 + $0x48] sm:$0xff]
          %v3490 = vld [vmem:[%s711 + $0x50] sm:$0xff]
          %v3491 = vld [vmem:[%s711 + $0x58] sm:$0xff]
          %v3492 = vld [vmem:[%s711 + $0x60] sm:$0xff]
          %v3493 = vld [vmem:[%s711 + $0x68] sm:$0xff]
          %v3494 = vld [vmem:[%s711 + $0x70] sm:$0xff]
          %v3495 = vld [vmem:[%s711 + $0x78] sm:$0xff]
          %v3496 = vld [vmem:[%s711 + $0x80] sm:$0xff]
          %v3497 = vld [vmem:[%s711 + $0x88] sm:$0xff]
          %v3498 = vld [vmem:[%s711 + $0x90] sm:$0xff]
          %v3499 = vld [vmem:[%s711 + $0x98] sm:$0xff]
          %v3500 = vld [vmem:[%s711 + $0xa0] sm:$0xff]
          %v3501 = vld [vmem:[%s711 + $0xa8] sm:$0xff]
          %v3502 = vld [vmem:[%s711 + $0xb0] sm:$0xff]
          %v3503 = vld [vmem:[%s711 + $0xb8] sm:$0xff]
          %v3504 = vld [vmem:[%s711 + $0xc0] sm:$0xff]
          %v3505 = vld [vmem:[%s711 + $0xc8] sm:$0xff]
          %v3506 = vld [vmem:[%s711 + $0xd0] sm:$0xff]
          %v3507 = vld [vmem:[%s711 + $0xd8] sm:$0xff]
          %v3508 = vld [vmem:[%s711 + $0xe0] sm:$0xff]
          %v3509 = vld [vmem:[%s711 + $0xe8] sm:$0xff]
          %v3510 = vld [vmem:[%s711 + $0xf0] sm:$0xff]
          %v3511 = vld [vmem:[%s711 + $0xf8] sm:$0xff]
          %v3512 = vld [vmem:[%s711 + $0x100] sm:$0xff]
          %v3513 = vld [vmem:[%s711 + $0x108] sm:$0xff]
          %v3514 = vld [vmem:[%s711 + $0x110] sm:$0xff]
          %v3515 = vld [vmem:[%s711 + $0x118] sm:$0xff]
          %v3516 = vld [vmem:[%s711 + $0x120] sm:$0xff]
          %v3517 = vld [vmem:[%s711 + $0x128] sm:$0xff]
          %v3518 = vld [vmem:[%s711 + $0x130] sm:$0xff]
          %v3519 = vld [vmem:[%s711 + $0x138] sm:$0xff]
          %v3520 = vld [vmem:[%s711 + $0x140] sm:$0xff]
          %v3521 = vld [vmem:[%s711 + $0x148] sm:$0xff]
          %v3522 = vld [vmem:[%s711 + $0x150] sm:$0xff]
          %v3523 = vld [vmem:[%s711 + $0x158] sm:$0xff]
          %v3524 = vld [vmem:[%s711 + $0x160] sm:$0xff]
          %v3525 = vld [vmem:[%s711 + $0x168] sm:$0xff]
          %v3526 = vld [vmem:[%s711 + $0x170] sm:$0xff]
          %v3527 = vld [vmem:[%s711 + $0x178] sm:$0xff]
          %v3528 = vld [vmem:[%s711 + $0x180] sm:$0xff]
          %v3529 = vld [vmem:[%s711 + $0x188] sm:$0xff]
          %v3530 = vld [vmem:[%s711 + $0x190] sm:$0xff]
          %v3531 = vld [vmem:[%s711 + $0x198] sm:$0xff]
          %v3532 = vld [vmem:[%s711 + $0x1a0] sm:$0xff]
          %v3533 = vld [vmem:[%s711 + $0x1a8] sm:$0xff]
          %v3534 = vld [vmem:[%s711 + $0x1b0] sm:$0xff]
          %v3535 = vld [vmem:[%s711 + $0x1b8] sm:$0xff]
          %v3536 = vld [vmem:[%s711 + $0x1c0] sm:$0xff]
          %v3537 = vld [vmem:[%s711 + $0x1c8] sm:$0xff]
          %v3538 = vld [vmem:[%s711 + $0x1d0] sm:$0xff]
          %v3539 = vld [vmem:[%s711 + $0x1d8] sm:$0xff]
          %v3540 = vld [vmem:[%s711 + $0x1e0] sm:$0xff]
          %v3541 = vld [vmem:[%s711 + $0x1e8] sm:$0xff]
          %v3542 = vld [vmem:[%s711 + $0x1f0] sm:$0xff]
          %v3543 = vld [vmem:[%s711 + $0x1f8] sm:$0xff]
          %v3544 = vld [vmem:[%s791] sm:$0xff]
          %v3546 = vlaneseq
          %v3547 = vshrl.u32 %v3546, 7
          %v3548 = vsub.s32 0, %v3547
          %v3549 = vrot.slane %v3544, %v3548
          %v3550 = vlaneseq
          %v3551 = vshrl.u32 %v3550, 7
          %v3552 = vsub.s32 1, %v3551
          %v3553 = vrot.slane %v3544, %v3552
          %v3554 = vlaneseq
          %v3555 = vshrl.u32 %v3554, 7
          %v3556 = vsub.s32 2, %v3555
          %v3557 = vrot.slane %v3544, %v3556
          %v3558 = vlaneseq
          %v3559 = vshrl.u32 %v3558, 7
          %v3560 = vsub.s32 3, %v3559
          %v3561 = vrot.slane %v3544, %v3560
          %v3562 = vlaneseq
          %v3563 = vshrl.u32 %v3562, 7
          %v3564 = vsub.s32 4, %v3563
          %v3565 = vrot.slane %v3544, %v3564
          %v3566 = vlaneseq
          %v3567 = vshrl.u32 %v3566, 7
          %v3568 = vsub.s32 5, %v3567
          %v3569 = vrot.slane %v3544, %v3568
          %v3570 = vlaneseq
          %v3571 = vshrl.u32 %v3570, 7
          %v3572 = vsub.s32 6, %v3571
          %v3573 = vrot.slane %v3544, %v3572
          %v3574 = vlaneseq
          %v3575 = vshrl.u32 %v3574, 7
          %v3576 = vsub.s32 7, %v3575
          %v3577 = vrot.slane %v3544, %v3576
          %v3594 = vunpack.c.l.b16 %v3472
          %v3595 = vunpack.c.l.b16 %v3473
          %v3596 = vunpack.c.l.b16 %v3474
          %v3597 = vunpack.c.l.b16 %v3475
          %v3598 = vunpack.c.l.b16 %v3476
          %v3599 = vunpack.c.l.b16 %v3477
          %v3600 = vunpack.c.l.b16 %v3478
          %v3601 = vunpack.c.l.b16 %v3479
          %v3602 = vpack.c.b16 %v3595, %v3594
          %v3603 = vpack.c.b16 %v3597, %v3596
          %v3604 = vpack.c.b16 %v3599, %v3598
          %v3605 = vpack.c.b16 %v3601, %v3600
          %v3674 = vunpack.c.l.b16 %v3480
          %v3675 = vunpack.c.h.b16 %v3480
          %v3676 = vunpack.c.l.b16 %v3481
          %v3677 = vunpack.c.h.b16 %v3481
          %v3678 = vunpack.c.l.b16 %v3482
          %v3679 = vunpack.c.h.b16 %v3482
          %v3680 = vunpack.c.l.b16 %v3483
          %v3681 = vunpack.c.h.b16 %v3483
          %v3682 = vunpack.c.l.b16 %v3484
          %v3683 = vunpack.c.h.b16 %v3484
          %v3684 = vunpack.c.l.b16 %v3485
          %v3685 = vunpack.c.h.b16 %v3485
          %v3686 = vunpack.c.l.b16 %v3486
          %v3687 = vunpack.c.h.b16 %v3486
          %v3688 = vunpack.c.l.b16 %v3487
          %v3689 = vunpack.c.h.b16 %v3487
          %v3690 = vunpack.c.l.b16 %v3488
          %v3691 = vunpack.c.h.b16 %v3488
          %v3692 = vunpack.c.l.b16 %v3489
          %v3693 = vunpack.c.h.b16 %v3489
          %v3694 = vunpack.c.l.b16 %v3490
          %v3695 = vunpack.c.h.b16 %v3490
          %v3696 = vunpack.c.l.b16 %v3491
          %v3697 = vunpack.c.h.b16 %v3491
          %v3698 = vunpack.c.l.b16 %v3492
          %v3699 = vunpack.c.h.b16 %v3492
          %v3700 = vunpack.c.l.b16 %v3493
          %v3701 = vunpack.c.h.b16 %v3493
          %v3702 = vunpack.c.l.b16 %v3494
          %v3703 = vunpack.c.h.b16 %v3494
          %v3704 = vunpack.c.l.b16 %v3495
          %v3705 = vunpack.c.h.b16 %v3495
          %v3706 = vunpack.c.l.b16 %v3496
          %v3707 = vunpack.c.h.b16 %v3496
          %v3708 = vunpack.c.l.b16 %v3497
          %v3709 = vunpack.c.h.b16 %v3497
          %v3710 = vunpack.c.l.b16 %v3498
          %v3711 = vunpack.c.h.b16 %v3498
          %v3712 = vunpack.c.l.b16 %v3499
          %v3713 = vunpack.c.h.b16 %v3499
          %v3714 = vunpack.c.l.b16 %v3500
          %v3715 = vunpack.c.h.b16 %v3500
          %v3716 = vunpack.c.l.b16 %v3501
          %v3717 = vunpack.c.h.b16 %v3501
          %v3718 = vunpack.c.l.b16 %v3502
          %v3719 = vunpack.c.h.b16 %v3502
          %v3720 = vunpack.c.l.b16 %v3503
          %v3721 = vunpack.c.h.b16 %v3503
          %v3722 = vunpack.c.l.b16 %v3504
          %v3723 = vunpack.c.h.b16 %v3504
          %v3724 = vunpack.c.l.b16 %v3505
          %v3725 = vunpack.c.h.b16 %v3505
          %v3726 = vunpack.c.l.b16 %v3506
          %v3727 = vunpack.c.h.b16 %v3506
          %v3728 = vunpack.c.l.b16 %v3507
          %v3729 = vunpack.c.h.b16 %v3507
          %v3730 = vunpack.c.l.b16 %v3508
          %v3731 = vunpack.c.h.b16 %v3508
          %v3732 = vunpack.c.l.b16 %v3509
          %v3733 = vunpack.c.h.b16 %v3509
          %v3734 = vunpack.c.l.b16 %v3510
          %v3735 = vunpack.c.h.b16 %v3510
          %v3736 = vunpack.c.l.b16 %v3511
          %v3737 = vunpack.c.h.b16 %v3511
          %v3738 = vunpack.c.l.b16 %v3512
          %v3739 = vunpack.c.h.b16 %v3512
          %v3740 = vunpack.c.l.b16 %v3513
          %v3741 = vunpack.c.h.b16 %v3513
          %v3742 = vunpack.c.l.b16 %v3514
          %v3743 = vunpack.c.h.b16 %v3514
          %v3744 = vunpack.c.l.b16 %v3515
          %v3745 = vunpack.c.h.b16 %v3515
          %v3746 = vunpack.c.l.b16 %v3516
          %v3747 = vunpack.c.h.b16 %v3516
          %v3748 = vunpack.c.l.b16 %v3517
          %v3749 = vunpack.c.h.b16 %v3517
          %v3750 = vunpack.c.l.b16 %v3518
          %v3751 = vunpack.c.h.b16 %v3518
          %v3752 = vunpack.c.l.b16 %v3519
          %v3753 = vunpack.c.h.b16 %v3519
          %v3754 = vunpack.c.l.b16 %v3520
          %v3755 = vunpack.c.h.b16 %v3520
          %v3756 = vunpack.c.l.b16 %v3521
          %v3757 = vunpack.c.h.b16 %v3521
          %v3758 = vunpack.c.l.b16 %v3522
          %v3759 = vunpack.c.h.b16 %v3522
          %v3760 = vunpack.c.l.b16 %v3523
          %v3761 = vunpack.c.h.b16 %v3523
          %v3762 = vunpack.c.l.b16 %v3524
          %v3763 = vunpack.c.h.b16 %v3524
          %v3764 = vunpack.c.l.b16 %v3525
          %v3765 = vunpack.c.h.b16 %v3525
          %v3766 = vunpack.c.l.b16 %v3526
          %v3767 = vunpack.c.h.b16 %v3526
          %v3768 = vunpack.c.l.b16 %v3527
          %v3769 = vunpack.c.h.b16 %v3527
          %v3770 = vunpack.c.l.b16 %v3528
          %v3771 = vunpack.c.h.b16 %v3528
          %v3772 = vunpack.c.l.b16 %v3529
          %v3773 = vunpack.c.h.b16 %v3529
          %v3774 = vunpack.c.l.b16 %v3530
          %v3775 = vunpack.c.h.b16 %v3530
          %v3776 = vunpack.c.l.b16 %v3531
          %v3777 = vunpack.c.h.b16 %v3531
          %v3778 = vunpack.c.l.b16 %v3532
          %v3779 = vunpack.c.h.b16 %v3532
          %v3780 = vunpack.c.l.b16 %v3533
          %v3781 = vunpack.c.h.b16 %v3533
          %v3782 = vunpack.c.l.b16 %v3534
          %v3783 = vunpack.c.h.b16 %v3534
          %v3784 = vunpack.c.l.b16 %v3535
          %v3785 = vunpack.c.h.b16 %v3535
          %v3786 = vunpack.c.l.b16 %v3536
          %v3787 = vunpack.c.h.b16 %v3536
          %v3788 = vunpack.c.l.b16 %v3537
          %v3789 = vunpack.c.h.b16 %v3537
          %v3790 = vunpack.c.l.b16 %v3538
          %v3791 = vunpack.c.h.b16 %v3538
          %v3792 = vunpack.c.l.b16 %v3539
          %v3793 = vunpack.c.h.b16 %v3539
          %v3794 = vunpack.c.l.b16 %v3540
          %v3795 = vunpack.c.h.b16 %v3540
          %v3796 = vunpack.c.l.b16 %v3541
          %v3797 = vunpack.c.h.b16 %v3541
          %v3798 = vunpack.c.l.b16 %v3542
          %v3799 = vunpack.c.h.b16 %v3542
          %v3800 = vunpack.c.l.b16 %v3543
          %v3801 = vunpack.c.h.b16 %v3543
          %v3802 = vpack.c.b16 %v3682, %v3674
          %v3803 = vpack.c.b16 %v3683, %v3675
          %v3804 = vpack.c.b16 %v3684, %v3676
          %v3805 = vpack.c.b16 %v3685, %v3677
          %v3806 = vpack.c.b16 %v3686, %v3678
          %v3807 = vpack.c.b16 %v3687, %v3679
          %v3808 = vpack.c.b16 %v3688, %v3680
          %v3809 = vpack.c.b16 %v3689, %v3681
          %v3810 = vpack.c.b16 %v3698, %v3690
          %v3811 = vpack.c.b16 %v3699, %v3691
          %v3812 = vpack.c.b16 %v3700, %v3692
          %v3813 = vpack.c.b16 %v3701, %v3693
          %v3814 = vpack.c.b16 %v3702, %v3694
          %v3815 = vpack.c.b16 %v3703, %v3695
          %v3816 = vpack.c.b16 %v3704, %v3696
          %v3817 = vpack.c.b16 %v3705, %v3697
          %v3818 = vpack.c.b16 %v3714, %v3706
          %v3819 = vpack.c.b16 %v3715, %v3707
          %v3820 = vpack.c.b16 %v3716, %v3708
          %v3821 = vpack.c.b16 %v3717, %v3709
          %v3822 = vpack.c.b16 %v3718, %v3710
          %v3823 = vpack.c.b16 %v3719, %v3711
          %v3824 = vpack.c.b16 %v3720, %v3712
          %v3825 = vpack.c.b16 %v3721, %v3713
          %v3826 = vpack.c.b16 %v3730, %v3722
          %v3827 = vpack.c.b16 %v3731, %v3723
          %v3828 = vpack.c.b16 %v3732, %v3724
          %v3829 = vpack.c.b16 %v3733, %v3725
          %v3830 = vpack.c.b16 %v3734, %v3726
          %v3831 = vpack.c.b16 %v3735, %v3727
          %v3832 = vpack.c.b16 %v3736, %v3728
          %v3833 = vpack.c.b16 %v3737, %v3729
          %v3834 = vpack.c.b16 %v3746, %v3738
          %v3835 = vpack.c.b16 %v3747, %v3739
          %v3836 = vpack.c.b16 %v3748, %v3740
          %v3837 = vpack.c.b16 %v3749, %v3741
          %v3838 = vpack.c.b16 %v3750, %v3742
          %v3839 = vpack.c.b16 %v3751, %v3743
          %v3840 = vpack.c.b16 %v3752, %v3744
          %v3841 = vpack.c.b16 %v3753, %v3745
          %v3842 = vpack.c.b16 %v3762, %v3754
          %v3843 = vpack.c.b16 %v3763, %v3755
          %v3844 = vpack.c.b16 %v3764, %v3756
          %v3845 = vpack.c.b16 %v3765, %v3757
          %v3846 = vpack.c.b16 %v3766, %v3758
          %v3847 = vpack.c.b16 %v3767, %v3759
          %v3848 = vpack.c.b16 %v3768, %v3760
          %v3849 = vpack.c.b16 %v3769, %v3761
          %v3850 = vpack.c.b16 %v3778, %v3770
          %v3851 = vpack.c.b16 %v3779, %v3771
          %v3852 = vpack.c.b16 %v3780, %v3772
          %v3853 = vpack.c.b16 %v3781, %v3773
          %v3854 = vpack.c.b16 %v3782, %v3774
          %v3855 = vpack.c.b16 %v3783, %v3775
          %v3856 = vpack.c.b16 %v3784, %v3776
          %v3857 = vpack.c.b16 %v3785, %v3777
          %v3858 = vpack.c.b16 %v3794, %v3786
          %v3859 = vpack.c.b16 %v3795, %v3787
          %v3860 = vpack.c.b16 %v3796, %v3788
          %v3861 = vpack.c.b16 %v3797, %v3789
          %v3862 = vpack.c.b16 %v3798, %v3790
          %v3863 = vpack.c.b16 %v3799, %v3791
          %v3864 = vpack.c.b16 %v3800, %v3792
          %v3865 = vpack.c.b16 %v3801, %v3793
          %3930 = vmatprep.subr.bf16.mxu0 %v3859
          %3931 = vmatpush1.bf16.msra.mxu0 %v3858
          %3932 = vmatprep.subr.bf16.mxu0 %v3851
          %3933 = vmatpush1.bf16.msra.mxu0 %v3850
          %3934 = vmatprep.subr.bf16.mxu0 %v3843
          %3935 = vmatpush1.bf16.msra.mxu0 %v3842
          %3936 = vmatprep.subr.bf16.mxu0 %v3835
          %3937 = vmatpush1.bf16.msra.mxu0 %v3834
          %3938 = vmatprep.subr.bf16.mxu0 %v3827
          %3939 = vmatpush1.bf16.msra.mxu0 %v3826
          %3940 = vmatprep.subr.bf16.mxu0 %v3819
          %3941 = vmatpush1.bf16.msra.mxu0 %v3818
          %3942 = vmatprep.subr.bf16.mxu0 %v3811
          %3943 = vmatpush1.bf16.msra.mxu0 %v3810
          %3944 = vmatprep.subr.bf16.mxu0 %v3803
          %3945 = vmatpush1.bf16.msra.mxu0 %v3802
          %3946 = vmatprep.subr.bf16.mxu0 0
          %3947 = vmatpush2.bf16.msra.mxu0 0
          %3948 = vmatprep.subr.bf16.mxu0 0
          %3949 = vmatpush2.bf16.msra.mxu0 0
          %3950 = vmatprep.subr.bf16.mxu0 0
          %3951 = vmatpush2.bf16.msra.mxu0 0
          %3952 = vmatprep.subr.bf16.mxu0 0
          %3953 = vmatpush2.bf16.msra.mxu0 0
          %3954 = vmatprep.subr.bf16.mxu0 0
          %3955 = vmatpush2.bf16.msra.mxu0 0
          %3956 = vmatprep.subr.bf16.mxu0 0
          %3957 = vmatpush2.bf16.msra.mxu0 0
          %3958 = vmatprep.subr.bf16.mxu0 0
          %3959 = vmatpush2.bf16.msra.mxu0 0
          %3960 = vmatprep.subr.bf16.mxu0 0
          %3961 = vmatpush2.bf16.msra.mxu0 0
          %3962 = vmatprep.mubr.bf16.mxu0 0
          %3963 = vmatmul.mubr.bf16.gmra.mxu0 %v3602
          %v3964 = vpop.f32.mrf.mxu0
          %v3965 = vadd.f32 %v3549, %v3964
          %v3966 = vpop.f32.mrf.mxu0
          %v3967 = vadd.f32 %v3553, %v3966
          %v3968 = vpop.f32.mrf.mxu0
          %v3969 = vadd.f32 %v3549, %v3968
          %v3970 = vpop.f32.mrf.mxu0
          %v3971 = vadd.f32 %v3553, %v3970
          %3972 = vmatprep.mubr.bf16.mxu0 0
          %3973 = vmatmul.mubr.bf16.gmra.mxu0 %v3603
          %v3974 = vpop.f32.mrf.mxu0
          %v3975 = vadd.f32 %v3549, %v3974
          %v3976 = vpop.f32.mrf.mxu0
          %v3977 = vadd.f32 %v3553, %v3976
          %v3978 = vpop.f32.mrf.mxu0
          %v3979 = vadd.f32 %v3549, %v3978
          %v3980 = vpop.f32.mrf.mxu0
          %v3981 = vadd.f32 %v3553, %v3980
          %3982 = vmatprep.mubr.bf16.mxu0 0
          %3983 = vmatmul.mubr.bf16.gmra.mxu0 %v3604
          %v3984 = vpop.f32.mrf.mxu0
          %v3985 = vadd.f32 %v3549, %v3984
          %v3986 = vpop.f32.mrf.mxu0
          %v3987 = vadd.f32 %v3553, %v3986
          %v3988 = vpop.f32.mrf.mxu0
          %v3989 = vadd.f32 %v3549, %v3988
          %v3990 = vpop.f32.mrf.mxu0
          %v3991 = vadd.f32 %v3553, %v3990
          %3992 = vmatprep.mubr.bf16.mxu0 0
          %3993 = vmatmul.mubr.bf16.gmra.mxu0 %v3605
          %v3994 = vpop.f32.mrf.mxu0
          %v3995 = vadd.f32 %v3549, %v3994
          %v3996 = vpop.f32.mrf.mxu0
          %v3997 = vadd.f32 %v3553, %v3996
          %v3998 = vpop.f32.mrf.mxu0
          %v3999 = vadd.f32 %v3549, %v3998
          %v4000 = vpop.f32.mrf.mxu0
          %v4001 = vadd.f32 %v3553, %v4000
          %4002 = vdwg.mxu0
          %4003 = vmatprep.subr.bf16.mxu0 %v3861
          %4004 = vmatpush1.bf16.msra.mxu0 %v3860
          %4005 = vmatprep.subr.bf16.mxu0 %v3853
          %4006 = vmatpush1.bf16.msra.mxu0 %v3852
          %4007 = vmatprep.subr.bf16.mxu0 %v3845
          %4008 = vmatpush1.bf16.msra.mxu0 %v3844
          %4009 = vmatprep.subr.bf16.mxu0 %v3837
          %4010 = vmatpush1.bf16.msra.mxu0 %v3836
          %4011 = vmatprep.subr.bf16.mxu0 %v3829
          %4012 = vmatpush1.bf16.msra.mxu0 %v3828
          %4013 = vmatprep.subr.bf16.mxu0 %v3821
          %4014 = vmatpush1.bf16.msra.mxu0 %v3820
          %4015 = vmatprep.subr.bf16.mxu0 %v3813
          %4016 = vmatpush1.bf16.msra.mxu0 %v3812
          %4017 = vmatprep.subr.bf16.mxu0 %v3805
          %4018 = vmatpush1.bf16.msra.mxu0 %v3804
          %4019 = vmatprep.subr.bf16.mxu0 0
          %4020 = vmatpush2.bf16.msra.mxu0 0
          %4021 = vmatprep.subr.bf16.mxu0 0
          %4022 = vmatpush2.bf16.msra.mxu0 0
          %4023 = vmatprep.subr.bf16.mxu0 0
          %4024 = vmatpush2.bf16.msra.mxu0 0
          %4025 = vmatprep.subr.bf16.mxu0 0
          %4026 = vmatpush2.bf16.msra.mxu0 0
          %4027 = vmatprep.subr.bf16.mxu0 0
          %4028 = vmatpush2.bf16.msra.mxu0 0
          %4029 = vmatprep.subr.bf16.mxu0 0
          %4030 = vmatpush2.bf16.msra.mxu0 0
          %4031 = vmatprep.subr.bf16.mxu0 0
          %4032 = vmatpush2.bf16.msra.mxu0 0
          %4033 = vmatprep.subr.bf16.mxu0 0
          %4034 = vmatpush2.bf16.msra.mxu0 0
          %4035 = vmatprep.mubr.bf16.mxu0 0
          %4036 = vmatmul.mubr.bf16.gmra.mxu0 %v3602
          %v4037 = vpop.f32.mrf.mxu0
          %v4038 = vadd.f32 %v3557, %v4037
          %v4039 = vpop.f32.mrf.mxu0
          %v4040 = vadd.f32 %v3561, %v4039
          %v4041 = vpop.f32.mrf.mxu0
          %v4042 = vadd.f32 %v3557, %v4041
          %v4043 = vpop.f32.mrf.mxu0
          %v4044 = vadd.f32 %v3561, %v4043
          %4045 = vmatprep.mubr.bf16.mxu0 0
          %4046 = vmatmul.mubr.bf16.gmra.mxu0 %v3603
          %v4047 = vpop.f32.mrf.mxu0
          %v4048 = vadd.f32 %v3557, %v4047
          %v4049 = vpop.f32.mrf.mxu0
          %v4050 = vadd.f32 %v3561, %v4049
          %v4051 = vpop.f32.mrf.mxu0
          %v4052 = vadd.f32 %v3557, %v4051
          %v4053 = vpop.f32.mrf.mxu0
          %v4054 = vadd.f32 %v3561, %v4053
          %4055 = vmatprep.mubr.bf16.mxu0 0
          %4056 = vmatmul.mubr.bf16.gmra.mxu0 %v3604
          %v4057 = vpop.f32.mrf.mxu0
          %v4058 = vadd.f32 %v3557, %v4057
          %v4059 = vpop.f32.mrf.mxu0
          %v4060 = vadd.f32 %v3561, %v4059
          %v4061 = vpop.f32.mrf.mxu0
          %v4062 = vadd.f32 %v3557, %v4061
          %v4063 = vpop.f32.mrf.mxu0
          %v4064 = vadd.f32 %v3561, %v4063
          %4065 = vmatprep.mubr.bf16.mxu0 0
          %4066 = vmatmul.mubr.bf16.gmra.mxu0 %v3605
          %v4067 = vpop.f32.mrf.mxu0
          %v4068 = vadd.f32 %v3557, %v4067
          %v4069 = vpop.f32.mrf.mxu0
          %v4070 = vadd.f32 %v3561, %v4069
          %v4071 = vpop.f32.mrf.mxu0
          %v4072 = vadd.f32 %v3557, %v4071
          %v4073 = vpop.f32.mrf.mxu0
          %v4074 = vadd.f32 %v3561, %v4073
          %4075 = vdwg.mxu0
          %4076 = vmatprep.subr.bf16.mxu0 %v3863
          %4077 = vmatpush1.bf16.msra.mxu0 %v3862
          %4078 = vmatprep.subr.bf16.mxu0 %v3855
          %4079 = vmatpush1.bf16.msra.mxu0 %v3854
          %4080 = vmatprep.subr.bf16.mxu0 %v3847
          %4081 = vmatpush1.bf16.msra.mxu0 %v3846
          %4082 = vmatprep.subr.bf16.mxu0 %v3839
          %4083 = vmatpush1.bf16.msra.mxu0 %v3838
          %4084 = vmatprep.subr.bf16.mxu0 %v3831
          %4085 = vmatpush1.bf16.msra.mxu0 %v3830
          %4086 = vmatprep.subr.bf16.mxu0 %v3823
          %4087 = vmatpush1.bf16.msra.mxu0 %v3822
          %4088 = vmatprep.subr.bf16.mxu0 %v3815
          %4089 = vmatpush1.bf16.msra.mxu0 %v3814
          %4090 = vmatprep.subr.bf16.mxu0 %v3807
          %4091 = vmatpush1.bf16.msra.mxu0 %v3806
          %4092 = vmatprep.subr.bf16.mxu0 0
          %4093 = vmatpush2.bf16.msra.mxu0 0
          %4094 = vmatprep.subr.bf16.mxu0 0
          %4095 = vmatpush2.bf16.msra.mxu0 0
          %4096 = vmatprep.subr.bf16.mxu0 0
          %4097 = vmatpush2.bf16.msra.mxu0 0
          %4098 = vmatprep.subr.bf16.mxu0 0
          %4099 = vmatpush2.bf16.msra.mxu0 0
          %4100 = vmatprep.subr.bf16.mxu0 0
          %4101 = vmatpush2.bf16.msra.mxu0 0
          %4102 = vmatprep.subr.bf16.mxu0 0
          %4103 = vmatpush2.bf16.msra.mxu0 0
          %4104 = vmatprep.subr.bf16.mxu0 0
          %4105 = vmatpush2.bf16.msra.mxu0 0
          %4106 = vmatprep.subr.bf16.mxu0 0
          %4107 = vmatpush2.bf16.msra.mxu0 0
          %4108 = vmatprep.mubr.bf16.mxu0 0
          %4109 = vmatmul.mubr.bf16.gmra.mxu0 %v3602
          %v4110 = vpop.f32.mrf.mxu0
          %v4111 = vadd.f32 %v3565, %v4110
          %v4112 = vpop.f32.mrf.mxu0
          %v4113 = vadd.f32 %v3569, %v4112
          %v4114 = vpop.f32.mrf.mxu0
          %v4115 = vadd.f32 %v3565, %v4114
          %v4116 = vpop.f32.mrf.mxu0
          %v4117 = vadd.f32 %v3569, %v4116
          %4118 = vmatprep.mubr.bf16.mxu0 0
          %4119 = vmatmul.mubr.bf16.gmra.mxu0 %v3603
          %v4120 = vpop.f32.mrf.mxu0
          %v4121 = vadd.f32 %v3565, %v4120
          %v4122 = vpop.f32.mrf.mxu0
          %v4123 = vadd.f32 %v3569, %v4122
          %v4124 = vpop.f32.mrf.mxu0
          %v4125 = vadd.f32 %v3565, %v4124
          %v4126 = vpop.f32.mrf.mxu0
          %v4127 = vadd.f32 %v3569, %v4126
          %4128 = vmatprep.mubr.bf16.mxu0 0
          %4129 = vmatmul.mubr.bf16.gmra.mxu0 %v3604
          %v4130 = vpop.f32.mrf.mxu0
          %v4131 = vadd.f32 %v3565, %v4130
          %v4132 = vpop.f32.mrf.mxu0
          %v4133 = vadd.f32 %v3569, %v4132
          %v4134 = vpop.f32.mrf.mxu0
          %v4135 = vadd.f32 %v3565, %v4134
          %v4136 = vpop.f32.mrf.mxu0
          %v4137 = vadd.f32 %v3569, %v4136
          %4138 = vmatprep.mubr.bf16.mxu0 0
          %4139 = vmatmul.mubr.bf16.gmra.mxu0 %v3605
          %v4140 = vpop.f32.mrf.mxu0
          %v4141 = vadd.f32 %v3565, %v4140
          %v4142 = vpop.f32.mrf.mxu0
          %v4143 = vadd.f32 %v3569, %v4142
          %v4144 = vpop.f32.mrf.mxu0
          %v4145 = vadd.f32 %v3565, %v4144
          %v4146 = vpop.f32.mrf.mxu0
          %v4147 = vadd.f32 %v3569, %v4146
          %4148 = vdwg.mxu0
          %4149 = vmatprep.subr.bf16.mxu0 %v3865
          %4150 = vmatpush1.bf16.msra.mxu0 %v3864
          %4151 = vmatprep.subr.bf16.mxu0 %v3857
          %4152 = vmatpush1.bf16.msra.mxu0 %v3856
          %4153 = vmatprep.subr.bf16.mxu0 %v3849
          %4154 = vmatpush1.bf16.msra.mxu0 %v3848
          %4155 = vmatprep.subr.bf16.mxu0 %v3841
          %4156 = vmatpush1.bf16.msra.mxu0 %v3840
          %4157 = vmatprep.subr.bf16.mxu0 %v3833
          %4158 = vmatpush1.bf16.msra.mxu0 %v3832
          %4159 = vmatprep.subr.bf16.mxu0 %v3825
          %4160 = vmatpush1.bf16.msra.mxu0 %v3824
          %4161 = vmatprep.subr.bf16.mxu0 %v3817
          %4162 = vmatpush1.bf16.msra.mxu0 %v3816
          %4163 = vmatprep.subr.bf16.mxu0 %v3809
          %4164 = vmatpush1.bf16.msra.mxu0 %v3808
          %4165 = vmatprep.subr.bf16.mxu0 0
          %4166 = vmatpush2.bf16.msra.mxu0 0
          %4167 = vmatprep.subr.bf16.mxu0 0
          %4168 = vmatpush2.bf16.msra.mxu0 0
          %4169 = vmatprep.subr.bf16.mxu0 0
          %4170 = vmatpush2.bf16.msra.mxu0 0
          %4171 = vmatprep.subr.bf16.mxu0 0
          %4172 = vmatpush2.bf16.msra.mxu0 0
          %4173 = vmatprep.subr.bf16.mxu0 0
          %4174 = vmatpush2.bf16.msra.mxu0 0
          %4175 = vmatprep.subr.bf16.mxu0 0
          %4176 = vmatpush2.bf16.msra.mxu0 0
          %4177 = vmatprep.subr.bf16.mxu0 0
          %4178 = vmatpush2.bf16.msra.mxu0 0
          %4179 = vmatprep.subr.bf16.mxu0 0
          %4180 = vmatpush2.bf16.msra.mxu0 0
          %4181 = vmatprep.mubr.bf16.mxu0 0
          %4182 = vmatmul.mubr.bf16.gmra.mxu0 %v3602
          %v4183 = vpop.f32.mrf.mxu0
          %v4184 = vadd.f32 %v3573, %v4183
          %v4185 = vpop.f32.mrf.mxu0
          %v4186 = vadd.f32 %v3577, %v4185
          %v4187 = vpop.f32.mrf.mxu0
          %v4188 = vadd.f32 %v3573, %v4187
          %v4189 = vpop.f32.mrf.mxu0
          %v4190 = vadd.f32 %v3577, %v4189
          %4191 = vmatprep.mubr.bf16.mxu0 0
          %4192 = vmatmul.mubr.bf16.gmra.mxu0 %v3603
          %v4193 = vpop.f32.mrf.mxu0
          %v4194 = vadd.f32 %v3573, %v4193
          %v4195 = vpop.f32.mrf.mxu0
          %v4196 = vadd.f32 %v3577, %v4195
          %v4197 = vpop.f32.mrf.mxu0
          %v4198 = vadd.f32 %v3573, %v4197
          %v4199 = vpop.f32.mrf.mxu0
          %v4200 = vadd.f32 %v3577, %v4199
          %4201 = vmatprep.mubr.bf16.mxu0 0
          %4202 = vmatmul.mubr.bf16.gmra.mxu0 %v3604
          %v4203 = vpop.f32.mrf.mxu0
          %v4204 = vadd.f32 %v3573, %v4203
          %v4205 = vpop.f32.mrf.mxu0
          %v4206 = vadd.f32 %v3577, %v4205
          %v4207 = vpop.f32.mrf.mxu0
          %v4208 = vadd.f32 %v3573, %v4207
          %v4209 = vpop.f32.mrf.mxu0
          %v4210 = vadd.f32 %v3577, %v4209
          %4211 = vmatprep.mubr.bf16.mxu0 0
          %4212 = vmatmul.mubr.bf16.gmra.mxu0 %v3605
          %v4213 = vpop.f32.mrf.mxu0
          %v4214 = vadd.f32 %v3573, %v4213
          %v4215 = vpop.f32.mrf.mxu0
          %v4216 = vadd.f32 %v3577, %v4215
          %v4217 = vpop.f32.mrf.mxu0
          %v4218 = vadd.f32 %v3573, %v4217
          %v4219 = vpop.f32.mrf.mxu0
          %v4220 = vadd.f32 %v3577, %v4219
          %4221 = vdwg.mxu0
          %v4222 = vpack.c.bf16 %v3969, %v3965
          %v4223 = vpack.c.bf16 %v3971, %v3967
          %v4224 = vpack.c.bf16 %v4042, %v4038
          %v4225 = vpack.c.bf16 %v4044, %v4040
          %v4226 = vpack.c.bf16 %v4115, %v4111
          %v4227 = vpack.c.bf16 %v4117, %v4113
          %v4228 = vpack.c.bf16 %v4188, %v4184
          %v4229 = vpack.c.bf16 %v4190, %v4186
          %v4230 = vpack.c.bf16 %v3979, %v3975
          %v4231 = vpack.c.bf16 %v3981, %v3977
          %v4232 = vpack.c.bf16 %v4052, %v4048
          %v4233 = vpack.c.bf16 %v4054, %v4050
          %v4234 = vpack.c.bf16 %v4125, %v4121
          %v4235 = vpack.c.bf16 %v4127, %v4123
          %v4236 = vpack.c.bf16 %v4198, %v4194
          %v4237 = vpack.c.bf16 %v4200, %v4196
          %v4238 = vpack.c.bf16 %v3989, %v3985
          %v4239 = vpack.c.bf16 %v3991, %v3987
          %v4240 = vpack.c.bf16 %v4062, %v4058
          %v4241 = vpack.c.bf16 %v4064, %v4060
          %v4242 = vpack.c.bf16 %v4135, %v4131
          %v4243 = vpack.c.bf16 %v4137, %v4133
          %v4244 = vpack.c.bf16 %v4208, %v4204
          %v4245 = vpack.c.bf16 %v4210, %v4206
          %v4246 = vpack.c.bf16 %v3999, %v3995
          %v4247 = vpack.c.bf16 %v4001, %v3997
          %v4248 = vpack.c.bf16 %v4072, %v4068
          %v4249 = vpack.c.bf16 %v4074, %v4070
          %v4250 = vpack.c.bf16 %v4145, %v4141
          %v4251 = vpack.c.bf16 %v4147, %v4143
          %v4252 = vpack.c.bf16 %v4218, %v4214
          %v4253 = vpack.c.bf16 %v4220, %v4216
          %v4286 = vunpack.c.l.b16 %v4222
          %v4287 = vunpack.c.l.b16 %v4223
          %v4288 = vunpack.c.l.b16 %v4224
          %v4289 = vunpack.c.l.b16 %v4225
          %v4290 = vunpack.c.l.b16 %v4226
          %v4291 = vunpack.c.l.b16 %v4227
          %v4292 = vunpack.c.l.b16 %v4228
          %v4293 = vunpack.c.l.b16 %v4229
          %v4294 = vunpack.c.h.b16 %v4222
          %v4295 = vunpack.c.h.b16 %v4223
          %v4296 = vunpack.c.h.b16 %v4224
          %v4297 = vunpack.c.h.b16 %v4225
          %v4298 = vunpack.c.h.b16 %v4226
          %v4299 = vunpack.c.h.b16 %v4227
          %v4300 = vunpack.c.h.b16 %v4228
          %v4301 = vunpack.c.h.b16 %v4229
          %v4302 = vunpack.c.l.b16 %v4230
          %v4303 = vunpack.c.l.b16 %v4231
          %v4304 = vunpack.c.l.b16 %v4232
          %v4305 = vunpack.c.l.b16 %v4233
          %v4306 = vunpack.c.l.b16 %v4234
          %v4307 = vunpack.c.l.b16 %v4235
          %v4308 = vunpack.c.l.b16 %v4236
          %v4309 = vunpack.c.l.b16 %v4237
          %v4310 = vunpack.c.h.b16 %v4230
          %v4311 = vunpack.c.h.b16 %v4231
          %v4312 = vunpack.c.h.b16 %v4232
          %v4313 = vunpack.c.h.b16 %v4233
          %v4314 = vunpack.c.h.b16 %v4234
          %v4315 = vunpack.c.h.b16 %v4235
          %v4316 = vunpack.c.h.b16 %v4236
          %v4317 = vunpack.c.h.b16 %v4237
          %v4318 = vunpack.c.l.b16 %v4238
          %v4319 = vunpack.c.l.b16 %v4239
          %v4320 = vunpack.c.l.b16 %v4240
          %v4321 = vunpack.c.l.b16 %v4241
          %v4322 = vunpack.c.l.b16 %v4242
          %v4323 = vunpack.c.l.b16 %v4243
          %v4324 = vunpack.c.l.b16 %v4244
          %v4325 = vunpack.c.l.b16 %v4245
          %v4326 = vunpack.c.h.b16 %v4238
          %v4327 = vunpack.c.h.b16 %v4239
          %v4328 = vunpack.c.h.b16 %v4240
          %v4329 = vunpack.c.h.b16 %v4241
          %v4330 = vunpack.c.h.b16 %v4242
          %v4331 = vunpack.c.h.b16 %v4243
          %v4332 = vunpack.c.h.b16 %v4244
          %v4333 = vunpack.c.h.b16 %v4245
          %v4334 = vunpack.c.l.b16 %v4246
          %v4335 = vunpack.c.l.b16 %v4247
          %v4336 = vunpack.c.l.b16 %v4248
          %v4337 = vunpack.c.l.b16 %v4249
          %v4338 = vunpack.c.l.b16 %v4250
          %v4339 = vunpack.c.l.b16 %v4251
          %v4340 = vunpack.c.l.b16 %v4252
          %v4341 = vunpack.c.l.b16 %v4253
          %v4342 = vunpack.c.h.b16 %v4246
          %v4343 = vunpack.c.h.b16 %v4247
          %v4344 = vunpack.c.h.b16 %v4248
          %v4345 = vunpack.c.h.b16 %v4249
          %v4346 = vunpack.c.h.b16 %v4250
          %v4347 = vunpack.c.h.b16 %v4251
          %v4348 = vunpack.c.h.b16 %v4252
          %v4349 = vunpack.c.h.b16 %v4253
          %v4350 = vpack.c.b16 %v4287, %v4286
          %v4351 = vpack.c.b16 %v4289, %v4288
          %v4352 = vpack.c.b16 %v4291, %v4290
          %v4353 = vpack.c.b16 %v4293, %v4292
          %v4354 = vpack.c.b16 %v4295, %v4294
          %v4355 = vpack.c.b16 %v4297, %v4296
          %v4356 = vpack.c.b16 %v4299, %v4298
          %v4357 = vpack.c.b16 %v4301, %v4300
          %v4358 = vpack.c.b16 %v4303, %v4302
          %v4359 = vpack.c.b16 %v4305, %v4304
          %v4360 = vpack.c.b16 %v4307, %v4306
          %v4361 = vpack.c.b16 %v4309, %v4308
          %v4362 = vpack.c.b16 %v4311, %v4310
          %v4363 = vpack.c.b16 %v4313, %v4312
          %v4364 = vpack.c.b16 %v4315, %v4314
          %v4365 = vpack.c.b16 %v4317, %v4316
          %v4366 = vpack.c.b16 %v4319, %v4318
          %v4367 = vpack.c.b16 %v4321, %v4320
          %v4368 = vpack.c.b16 %v4323, %v4322
          %v4369 = vpack.c.b16 %v4325, %v4324
          %v4370 = vpack.c.b16 %v4327, %v4326
          %v4371 = vpack.c.b16 %v4329, %v4328
          %v4372 = vpack.c.b16 %v4331, %v4330
          %v4373 = vpack.c.b16 %v4333, %v4332
          %v4374 = vpack.c.b16 %v4335, %v4334
          %v4375 = vpack.c.b16 %v4337, %v4336
          %v4376 = vpack.c.b16 %v4339, %v4338
          %v4377 = vpack.c.b16 %v4341, %v4340
          %v4378 = vpack.c.b16 %v4343, %v4342
          %v4379 = vpack.c.b16 %v4345, %v4344
          %v4380 = vpack.c.b16 %v4347, %v4346
          %v4381 = vpack.c.b16 %v4349, %v4348
          %4414 = vst [vmem:[%s760] sm:$0xff] %v4350
          %4415 = vst [vmem:[%s760 + $0x8] sm:$0xff] %v4351
          %4416 = vst [vmem:[%s760 + $0x10] sm:$0xff] %v4352
          %4417 = vst [vmem:[%s760 + $0x18] sm:$0xff] %v4353
          %4418 = vst [vmem:[%s760 + $0x20] sm:$0xff] %v4354
          %4419 = vst [vmem:[%s760 + $0x28] sm:$0xff] %v4355
          %4420 = vst [vmem:[%s760 + $0x30] sm:$0xff] %v4356
          %4421 = vst [vmem:[%s760 + $0x38] sm:$0xff] %v4357
          %4422 = vst [vmem:[%s760 + $0x40] sm:$0xff] %v4358
          %4423 = vst [vmem:[%s760 + $0x48] sm:$0xff] %v4359
          %4424 = vst [vmem:[%s760 + $0x50] sm:$0xff] %v4360
          %4425 = vst [vmem:[%s760 + $0x58] sm:$0xff] %v4361
          %4426 = vst [vmem:[%s760 + $0x60] sm:$0xff] %v4362
          %4427 = vst [vmem:[%s760 + $0x68] sm:$0xff] %v4363
          %4428 = vst [vmem:[%s760 + $0x70] sm:$0xff] %v4364
          %4429 = vst [vmem:[%s760 + $0x78] sm:$0xff] %v4365
          %4430 = vst [vmem:[%s760 + $0x80] sm:$0xff] %v4366
          %4431 = vst [vmem:[%s760 + $0x88] sm:$0xff] %v4367
          %4432 = vst [vmem:[%s760 + $0x90] sm:$0xff] %v4368
          %4433 = vst [vmem:[%s760 + $0x98] sm:$0xff] %v4369
          %4434 = vst [vmem:[%s760 + $0xa0] sm:$0xff] %v4370
          %4435 = vst [vmem:[%s760 + $0xa8] sm:$0xff] %v4371
          %4436 = vst [vmem:[%s760 + $0xb0] sm:$0xff] %v4372
          %4437 = vst [vmem:[%s760 + $0xb8] sm:$0xff] %v4373
          %4438 = vst [vmem:[%s760 + $0xc0] sm:$0xff] %v4374
          %4439 = vst [vmem:[%s760 + $0xc8] sm:$0xff] %v4375
          %4440 = vst [vmem:[%s760 + $0xd0] sm:$0xff] %v4376
          %4441 = vst [vmem:[%s760 + $0xd8] sm:$0xff] %v4377
          %4442 = vst [vmem:[%s760 + $0xe0] sm:$0xff] %v4378
          %4443 = vst [vmem:[%s760 + $0xe8] sm:$0xff] %v4379
          %4444 = vst [vmem:[%s760 + $0xf0] sm:$0xff] %v4380
          %4445 = vst [vmem:[%s760 + $0xf8] sm:$0xff] %v4381
          %s4446 = smul.u32 %s32, 1024
          %s4447 = sshra.s32 %s4446, 7
          %s4448 = sand.u32 %s4446, 127
          %s4449 = smul.addr %s4447, 8
          %s4450 = scalar_lea.vmem [#allocation4], %s4449
          %v4451 = vld [vmem:[%s4450] sm:$0xff]
          %v4452 = vld [vmem:[%s4450 + $0x8] sm:$0xff]
          %v4453 = vld [vmem:[%s4450 + $0x10] sm:$0xff]
          %v4454 = vld [vmem:[%s4450 + $0x18] sm:$0xff]
          %v4455 = vld [vmem:[%s4450 + $0x20] sm:$0xff]
          %v4456 = vld [vmem:[%s4450 + $0x28] sm:$0xff]
          %v4457 = vld [vmem:[%s4450 + $0x30] sm:$0xff]
          %v4458 = vld [vmem:[%s4450 + $0x38] sm:$0xff]
          %v4459 = vld [vmem:[%s4450 + $0x80] sm:$0xff]
          %v4460 = vld [vmem:[%s4450 + $0x88] sm:$0xff]
          %v4461 = vld [vmem:[%s4450 + $0x90] sm:$0xff]
          %v4462 = vld [vmem:[%s4450 + $0x98] sm:$0xff]
          %v4463 = vld [vmem:[%s4450 + $0xa0] sm:$0xff]
          %v4464 = vld [vmem:[%s4450 + $0xa8] sm:$0xff]
          %v4465 = vld [vmem:[%s4450 + $0xb0] sm:$0xff]
          %v4466 = vld [vmem:[%s4450 + $0xb8] sm:$0xff]
          %v4467 = vld [vmem:[%s4450 + $0x100] sm:$0xff]
          %v4468 = vld [vmem:[%s4450 + $0x108] sm:$0xff]
          %v4469 = vld [vmem:[%s4450 + $0x110] sm:$0xff]
          %v4470 = vld [vmem:[%s4450 + $0x118] sm:$0xff]
          %v4471 = vld [vmem:[%s4450 + $0x120] sm:$0xff]
          %v4472 = vld [vmem:[%s4450 + $0x128] sm:$0xff]
          %v4473 = vld [vmem:[%s4450 + $0x130] sm:$0xff]
          %v4474 = vld [vmem:[%s4450 + $0x138] sm:$0xff]
          %v4475 = vld [vmem:[%s4450 + $0x180] sm:$0xff]
          %v4476 = vld [vmem:[%s4450 + $0x188] sm:$0xff]
          %v4477 = vld [vmem:[%s4450 + $0x190] sm:$0xff]
          %v4478 = vld [vmem:[%s4450 + $0x198] sm:$0xff]
          %v4479 = vld [vmem:[%s4450 + $0x1a0] sm:$0xff]
          %v4480 = vld [vmem:[%s4450 + $0x1a8] sm:$0xff]
          %v4481 = vld [vmem:[%s4450 + $0x1b0] sm:$0xff]
          %v4482 = vld [vmem:[%s4450 + $0x1b8] sm:$0xff]
          %v4483 = vld [vmem:[%s4450 + $0x200] sm:$0xff]
          %v4484 = vld [vmem:[%s4450 + $0x208] sm:$0xff]
          %v4485 = vld [vmem:[%s4450 + $0x210] sm:$0xff]
          %v4486 = vld [vmem:[%s4450 + $0x218] sm:$0xff]
          %v4487 = vld [vmem:[%s4450 + $0x220] sm:$0xff]
          %v4488 = vld [vmem:[%s4450 + $0x228] sm:$0xff]
          %v4489 = vld [vmem:[%s4450 + $0x230] sm:$0xff]
          %v4490 = vld [vmem:[%s4450 + $0x238] sm:$0xff]
          %v4491 = vld [vmem:[%s4450 + $0x280] sm:$0xff]
          %v4492 = vld [vmem:[%s4450 + $0x288] sm:$0xff]
          %v4493 = vld [vmem:[%s4450 + $0x290] sm:$0xff]
          %v4494 = vld [vmem:[%s4450 + $0x298] sm:$0xff]
          %v4495 = vld [vmem:[%s4450 + $0x2a0] sm:$0xff]
          %v4496 = vld [vmem:[%s4450 + $0x2a8] sm:$0xff]
          %v4497 = vld [vmem:[%s4450 + $0x2b0] sm:$0xff]
          %v4498 = vld [vmem:[%s4450 + $0x2b8] sm:$0xff]
          %v4499 = vld [vmem:[%s4450 + $0x300] sm:$0xff]
          %v4500 = vld [vmem:[%s4450 + $0x308] sm:$0xff]
          %v4501 = vld [vmem:[%s4450 + $0x310] sm:$0xff]
          %v4502 = vld [vmem:[%s4450 + $0x318] sm:$0xff]
          %v4503 = vld [vmem:[%s4450 + $0x320] sm:$0xff]
          %v4504 = vld [vmem:[%s4450 + $0x328] sm:$0xff]
          %v4505 = vld [vmem:[%s4450 + $0x330] sm:$0xff]
          %v4506 = vld [vmem:[%s4450 + $0x338] sm:$0xff]
          %v4507 = vld [vmem:[%s4450 + $0x380] sm:$0xff]
          %v4508 = vld [vmem:[%s4450 + $0x388] sm:$0xff]
          %v4509 = vld [vmem:[%s4450 + $0x390] sm:$0xff]
          %v4510 = vld [vmem:[%s4450 + $0x398] sm:$0xff]
          %v4511 = vld [vmem:[%s4450 + $0x3a0] sm:$0xff]
          %v4512 = vld [vmem:[%s4450 + $0x3a8] sm:$0xff]
          %v4513 = vld [vmem:[%s4450 + $0x3b0] sm:$0xff]
          %v4514 = vld [vmem:[%s4450 + $0x3b8] sm:$0xff]
          %v4515 = vsub.f32 %v3965, %v4451
          %v4516 = vsub.f32 %v3967, %v4452
          %v4517 = vsub.f32 %v4038, %v4453
          %v4518 = vsub.f32 %v4040, %v4454
          %v4519 = vsub.f32 %v4111, %v4455
          %v4520 = vsub.f32 %v4113, %v4456
          %v4521 = vsub.f32 %v4184, %v4457
          %v4522 = vsub.f32 %v4186, %v4458
          %v4523 = vsub.f32 %v3969, %v4459
          %v4524 = vsub.f32 %v3971, %v4460
          %v4525 = vsub.f32 %v4042, %v4461
          %v4526 = vsub.f32 %v4044, %v4462
          %v4527 = vsub.f32 %v4115, %v4463
          %v4528 = vsub.f32 %v4117, %v4464
          %v4529 = vsub.f32 %v4188, %v4465
          %v4530 = vsub.f32 %v4190, %v4466
          %v4531 = vsub.f32 %v3975, %v4467
          %v4532 = vsub.f32 %v3977, %v4468
          %v4533 = vsub.f32 %v4048, %v4469
          %v4534 = vsub.f32 %v4050, %v4470
          %v4535 = vsub.f32 %v4121, %v4471
          %v4536 = vsub.f32 %v4123, %v4472
          %v4537 = vsub.f32 %v4194, %v4473
          %v4538 = vsub.f32 %v4196, %v4474
          %v4539 = vsub.f32 %v3979, %v4475
          %v4540 = vsub.f32 %v3981, %v4476
          %v4541 = vsub.f32 %v4052, %v4477
          %v4542 = vsub.f32 %v4054, %v4478
          %v4543 = vsub.f32 %v4125, %v4479
          %v4544 = vsub.f32 %v4127, %v4480
          %v4545 = vsub.f32 %v4198, %v4481
          %v4546 = vsub.f32 %v4200, %v4482
          %v4547 = vsub.f32 %v3985, %v4483
          %v4548 = vsub.f32 %v3987, %v4484
          %v4549 = vsub.f32 %v4058, %v4485
          %v4550 = vsub.f32 %v4060, %v4486
          %v4551 = vsub.f32 %v4131, %v4487
          %v4552 = vsub.f32 %v4133, %v4488
          %v4553 = vsub.f32 %v4204, %v4489
          %v4554 = vsub.f32 %v4206, %v4490
          %v4555 = vsub.f32 %v3989, %v4491
          %v4556 = vsub.f32 %v3991, %v4492
          %v4557 = vsub.f32 %v4062, %v4493
          %v4558 = vsub.f32 %v4064, %v4494
          %v4559 = vsub.f32 %v4135, %v4495
          %v4560 = vsub.f32 %v4137, %v4496
          %v4561 = vsub.f32 %v4208, %v4497
          %v4562 = vsub.f32 %v4210, %v4498
          %v4563 = vsub.f32 %v3995, %v4499
          %v4564 = vsub.f32 %v3997, %v4500
          %v4565 = vsub.f32 %v4068, %v4501
          %v4566 = vsub.f32 %v4070, %v4502
          %v4567 = vsub.f32 %v4141, %v4503
          %v4568 = vsub.f32 %v4143, %v4504
          %v4569 = vsub.f32 %v4214, %v4505
          %v4570 = vsub.f32 %v4216, %v4506
          %v4571 = vsub.f32 %v3999, %v4507
          %v4572 = vsub.f32 %v4001, %v4508
          %v4573 = vsub.f32 %v4072, %v4509
          %v4574 = vsub.f32 %v4074, %v4510
          %v4575 = vsub.f32 %v4145, %v4511
          %v4576 = vsub.f32 %v4147, %v4512
          %v4577 = vsub.f32 %v4218, %v4513
          %v4578 = vsub.f32 %v4220, %v4514
          %v4579 = vmul.f32 %v4515, %v4515
          %v4580 = vmul.f32 %v4516, %v4516
          %v4581 = vmul.f32 %v4517, %v4517
          %v4582 = vmul.f32 %v4518, %v4518
          %v4583 = vmul.f32 %v4519, %v4519
          %v4584 = vmul.f32 %v4520, %v4520
          %v4585 = vmul.f32 %v4521, %v4521
          %v4586 = vmul.f32 %v4522, %v4522
          %v4587 = vmul.f32 %v4523, %v4523
          %v4588 = vmul.f32 %v4524, %v4524
          %v4589 = vmul.f32 %v4525, %v4525
          %v4590 = vmul.f32 %v4526, %v4526
          %v4591 = vmul.f32 %v4527, %v4527
          %v4592 = vmul.f32 %v4528, %v4528
          %v4593 = vmul.f32 %v4529, %v4529
          %v4594 = vmul.f32 %v4530, %v4530
          %v4595 = vmul.f32 %v4531, %v4531
          %v4596 = vmul.f32 %v4532, %v4532
          %v4597 = vmul.f32 %v4533, %v4533
          %v4598 = vmul.f32 %v4534, %v4534
          %v4599 = vmul.f32 %v4535, %v4535
          %v4600 = vmul.f32 %v4536, %v4536
          %v4601 = vmul.f32 %v4537, %v4537
          %v4602 = vmul.f32 %v4538, %v4538
          %v4603 = vmul.f32 %v4539, %v4539
          %v4604 = vmul.f32 %v4540, %v4540
          %v4605 = vmul.f32 %v4541, %v4541
          %v4606 = vmul.f32 %v4542, %v4542
          %v4607 = vmul.f32 %v4543, %v4543
          %v4608 = vmul.f32 %v4544, %v4544
          %v4609 = vmul.f32 %v4545, %v4545
          %v4610 = vmul.f32 %v4546, %v4546
          %v4611 = vmul.f32 %v4547, %v4547
          %v4612 = vmul.f32 %v4548, %v4548
          %v4613 = vmul.f32 %v4549, %v4549
          %v4614 = vmul.f32 %v4550, %v4550
          %v4615 = vmul.f32 %v4551, %v4551
          %v4616 = vmul.f32 %v4552, %v4552
          %v4617 = vmul.f32 %v4553, %v4553
          %v4618 = vmul.f32 %v4554, %v4554
          %v4619 = vmul.f32 %v4555, %v4555
          %v4620 = vmul.f32 %v4556, %v4556
          %v4621 = vmul.f32 %v4557, %v4557
          %v4622 = vmul.f32 %v4558, %v4558
          %v4623 = vmul.f32 %v4559, %v4559
          %v4624 = vmul.f32 %v4560, %v4560
          %v4625 = vmul.f32 %v4561, %v4561
          %v4626 = vmul.f32 %v4562, %v4562
          %v4627 = vmul.f32 %v4563, %v4563
          %v4628 = vmul.f32 %v4564, %v4564
          %v4629 = vmul.f32 %v4565, %v4565
          %v4630 = vmul.f32 %v4566, %v4566
          %v4631 = vmul.f32 %v4567, %v4567
          %v4632 = vmul.f32 %v4568, %v4568
          %v4633 = vmul.f32 %v4569, %v4569
          %v4634 = vmul.f32 %v4570, %v4570
          %v4635 = vmul.f32 %v4571, %v4571
          %v4636 = vmul.f32 %v4572, %v4572
          %v4637 = vmul.f32 %v4573, %v4573
          %v4638 = vmul.f32 %v4574, %v4574
          %v4639 = vmul.f32 %v4575, %v4575
          %v4640 = vmul.f32 %v4576, %v4576
          %v4641 = vmul.f32 %v4577, %v4577
          %v4642 = vmul.f32 %v4578, %v4578
          %v4643 = vld [vmem:[#allocation5] sm:$0xff]
          %v4644 = vld [vmem:[#allocation5 + $0x8] sm:$0xff]
          %v4645 = vld [vmem:[#allocation5 + $0x10] sm:$0xff]
          %v4646 = vld [vmem:[#allocation5 + $0x18] sm:$0xff]
          %v4647 = vld [vmem:[#allocation5 + $0x20] sm:$0xff]
          %v4648 = vld [vmem:[#allocation5 + $0x28] sm:$0xff]
          %v4649 = vld [vmem:[#allocation5 + $0x30] sm:$0xff]
          %v4650 = vld [vmem:[#allocation5 + $0x38] sm:$0xff]
          %v4651 = vadd.f32 %v4643, %v4579
          %v4652 = vadd.f32 %v4644, %v4587
          %v4653 = vadd.f32 %v4645, %v4595
          %v4654 = vadd.f32 %v4646, %v4603
          %v4655 = vadd.f32 %v4647, %v4611
          %v4656 = vadd.f32 %v4648, %v4619
          %v4657 = vadd.f32 %v4649, %v4627
          %v4658 = vadd.f32 %v4650, %v4635
          %v4659 = vadd.f32 %v4651, %v4580
          %v4660 = vadd.f32 %v4652, %v4588
          %v4661 = vadd.f32 %v4653, %v4596
          %v4662 = vadd.f32 %v4654, %v4604
          %v4663 = vadd.f32 %v4655, %v4612
          %v4664 = vadd.f32 %v4656, %v4620
          %v4665 = vadd.f32 %v4657, %v4628
          %v4666 = vadd.f32 %v4658, %v4636
          %v4667 = vadd.f32 %v4659, %v4581
          %v4668 = vadd.f32 %v4660, %v4589
          %v4669 = vadd.f32 %v4661, %v4597
          %v4670 = vadd.f32 %v4662, %v4605
          %v4671 = vadd.f32 %v4663, %v4613
          %v4672 = vadd.f32 %v4664, %v4621
          %v4673 = vadd.f32 %v4665, %v4629
          %v4674 = vadd.f32 %v4666, %v4637
          %v4675 = vadd.f32 %v4667, %v4582
          %v4676 = vadd.f32 %v4668, %v4590
          %v4677 = vadd.f32 %v4669, %v4598
          %v4678 = vadd.f32 %v4670, %v4606
          %v4679 = vadd.f32 %v4671, %v4614
          %v4680 = vadd.f32 %v4672, %v4622
          %v4681 = vadd.f32 %v4673, %v4630
          %v4682 = vadd.f32 %v4674, %v4638
          %v4683 = vadd.f32 %v4675, %v4583
          %v4684 = vadd.f32 %v4676, %v4591
          %v4685 = vadd.f32 %v4677, %v4599
          %v4686 = vadd.f32 %v4678, %v4607
          %v4687 = vadd.f32 %v4679, %v4615
          %v4688 = vadd.f32 %v4680, %v4623
          %v4689 = vadd.f32 %v4681, %v4631
          %v4690 = vadd.f32 %v4682, %v4639
          %v4691 = vadd.f32 %v4683, %v4584
          %v4692 = vadd.f32 %v4684, %v4592
          %v4693 = vadd.f32 %v4685, %v4600
          %v4694 = vadd.f32 %v4686, %v4608
          %v4695 = vadd.f32 %v4687, %v4616
          %v4696 = vadd.f32 %v4688, %v4624
          %v4697 = vadd.f32 %v4689, %v4632
          %v4698 = vadd.f32 %v4690, %v4640
          %v4699 = vadd.f32 %v4691, %v4585
          %v4700 = vadd.f32 %v4692, %v4593
          %v4701 = vadd.f32 %v4693, %v4601
          %v4702 = vadd.f32 %v4694, %v4609
          %v4703 = vadd.f32 %v4695, %v4617
          %v4704 = vadd.f32 %v4696, %v4625
          %v4705 = vadd.f32 %v4697, %v4633
          %v4706 = vadd.f32 %v4698, %v4641
          %v4707 = vadd.f32 %v4699, %v4586
          %v4708 = vadd.f32 %v4700, %v4594
          %v4709 = vadd.f32 %v4701, %v4602
          %v4710 = vadd.f32 %v4702, %v4610
          %v4711 = vadd.f32 %v4703, %v4618
          %v4712 = vadd.f32 %v4704, %v4626
          %v4713 = vadd.f32 %v4705, %v4634
          %v4714 = vadd.f32 %v4706, %v4642
          %4715 = vst [vmem:[#allocation5] sm:$0xff] %v4707
          %4716 = vst [vmem:[#allocation5 + $0x8] sm:$0xff] %v4708
          %4717 = vst [vmem:[#allocation5 + $0x10] sm:$0xff] %v4709
          %4718 = vst [vmem:[#allocation5 + $0x18] sm:$0xff] %v4710
          %4719 = vst [vmem:[#allocation5 + $0x20] sm:$0xff] %v4711
          %4720 = vst [vmem:[#allocation5 + $0x28] sm:$0xff] %v4712
          %4721 = vst [vmem:[#allocation5 + $0x30] sm:$0xff] %v4713
          %4722 = vst [vmem:[#allocation5 + $0x38] sm:$0xff] %v4714
          %p4723 = scmp.eq.s32.totalorder %s32, 1
          // Predicated region
          $region119: #{dae_forward.1} parent=113 // pred_check
            %p4724 = pneg %p4723
          $region120: #{dae_forward.1} parent=113 // pred_check_branch
            %4726 = sbr.rel (%p4724) target = $region122
          $region121: #{dae_forward.1} parent=113 // pred_region
            %v4727 = vld [vmem:[#allocation5] sm:$0xff]
            %v4728 = vld [vmem:[#allocation5 + $0x8] sm:$0xff]
            %v4729 = vld [vmem:[#allocation5 + $0x10] sm:$0xff]
            %v4730 = vld [vmem:[#allocation5 + $0x18] sm:$0xff]
            %v4731 = vld [vmem:[#allocation5 + $0x20] sm:$0xff]
            %v4732 = vld [vmem:[#allocation5 + $0x28] sm:$0xff]
            %v4733 = vld [vmem:[#allocation5 + $0x30] sm:$0xff]
            %v4734 = vld [vmem:[#allocation5 + $0x38] sm:$0xff]
            %4735 = vst [vmem:[%s801] sm:$0xff] %v4727
            %4736 = vst [vmem:[%s801 + $0x8] sm:$0xff] %v4728
            %4737 = vst [vmem:[%s801 + $0x10] sm:$0xff] %v4729
            %4738 = vst [vmem:[%s801 + $0x18] sm:$0xff] %v4730
            %4739 = vst [vmem:[%s801 + $0x20] sm:$0xff] %v4731
            %4740 = vst [vmem:[%s801 + $0x28] sm:$0xff] %v4732
            %4741 = vst [vmem:[%s801 + $0x30] sm:$0xff] %v4733
            %4742 = vst [vmem:[%s801 + $0x38] sm:$0xff] %v4734
          $region122: #{dae_forward.1} parent=113 // pred_fallthru
            _
        $region114: #{dae_forward.1} parent=93 // pred_fallthru
          _
        %s4743 = sand.u32 %s283, 1
        %s4744 = scalar_lea.sflag [#allocation9], %s4743
        %s4745 = sand.u32 %s283, 1
        %s4746 = smul.addr %s4745, 256
        %s4747 = scalar_lea.vmem [#allocation8], %s4746
        %p4748 = scmp.lt.s32.totalorder %s30, 1
        %s4749 = scalar_select %p4748, %s30, 1
        %s4750 = smul.addr %s4749, 8
        %s4751 = smul.addr %s4750, 8
        %s4752 = scalar_lea.vmem %s10, %s4751
        // Predicated region
        $region123: #{dae_forward.1} parent=93 // pred_check
          %p4753 = pneg %p293
        $region124: #{dae_forward.1} parent=93 // pred_check_branch
          %4755 = sbr.rel (%p4753) target = $region126
        $region125: #{dae_forward.1} parent=93 // pred_region
          %s4756 = smul.u32 %s32, %s31
          %s4757 = smul.u32 8, %s30
          %s4758 = smul.u32 8, %s4756
          %s4760 = ssub.s32 4096, 4096
          %4761 = vsyncadd %s4744, %s4760
          %s4762 = smul.addr %s4757, 16
          %s4763 = sadd.s32 %s4758, %s4762
          %s4764 = smul.addr %s4763, 64
          %s4765 = scalar_lea.hbm %s9, %s4764
          %s4766 = sshll.u32 %s4747, 4
          %s4767 = int_to_ptr.vmem [resolvable:$true] %s4766
          %4772 = dma.vmem_to_hbm [thread:$0]  %s4767, 4096, %s4765, %s4744, 512, 1024, 32
        $region126: #{dae_forward.1} parent=93 // pred_fallthru
          _
        // Predicated region
        $region127: #{dae_forward.1} parent=93 // pred_check
          %p4773 = pneg %p319
        $region128: #{dae_forward.1} parent=93 // pred_check_branch
          %4775 = sbr.rel (%p4773) target = $region130
        $region129: #{dae_forward.1} parent=93 // pred_region
          _
        $region130: #{dae_forward.1} parent=93 // pred_fallthru
          _
      $region94: #{dae_forward.1} parent=5 // pred_fallthru
        _
      %p4776 = scmp.le.s32.totalorder 2, %s20
      // Predicated region
      $region131: #{dae_forward.1} parent=5 // pred_check
        %p4777 = pneg %p4776
      $region132: #{dae_forward.1} parent=5 // pred_check_branch
        %4779 = sbr.rel (%p4777) target = $region134
      $region133: #{dae_forward.1} parent=5 // pred_region
        %s4780 = ssub.s32 %s20, 2
        // Predicated region
        $region135: #{dae_forward.1} parent=133 // pred_check
          %p4781 = pneg %p299
        $region136: #{dae_forward.1} parent=133 // pred_check_branch
          %4783 = sbr.rel (%p4781) target = $region138
        $region137: #{dae_forward.1} parent=133 // pred_region
          %s4784 = sand.u32 %s284, 1
          %s4785 = scalar_lea.sflag [#allocation9], %s4784
          %s4786 = sand.u32 %s284, 1
          %s4787 = smul.addr %s4786, 256
          %s4788 = scalar_lea.vmem [#allocation8], %s4787
          %4789 = dma.done %s4785, 4096
        $region138: #{dae_forward.1} parent=133 // pred_fallthru
          _
        // Predicated region
        $region139: #{dae_forward.1} parent=133 // pred_check
          %p4790 = pneg %p325
        $region140: #{dae_forward.1} parent=133 // pred_check_branch
          %4792 = sbr.rel (%p4790) target = $region142
        $region141: #{dae_forward.1} parent=133 // pred_region
          %p4793 = scmp.lt.s32.totalorder %s33, 1
          %s4794 = scalar_select %p4793, %s33, 1
          %s4795 = smul.addr %s4794, 8
          %s4796 = smul.addr %s4795, 8
          %s4797 = scalar_lea.vmem %s10, %s4796
        $region142: #{dae_forward.1} parent=133 // pred_fallthru
          _
      $region134: #{dae_forward.1} parent=5 // pred_fallthru
        _
    $region6: #{dae_forward.1} parent=1 // loop_footer
      %s24 = sadd.s32 1, %s20
    $region7: #{dae_forward.1} parent=1 // loop_footer_branch
      %19 = sbr.rel target = $region3
    $region8: #{dae_forward.1} parent=1 // loop_exit
      _
    %4798 = vsyncpa [#allocation9], 1
    %s4799 = scalar_lea.sflag [#allocation9], 1
    %4800 = vsyncpa %s4799, 1

</llo_original>
